<compile_context>
chip_gen: v6e
topology: v6e:2x2x1
jax: 0.10.0
libtpu: 0.0.40
codegen_flags: <defaults>
</compile_context>

<pallas_src>
import jax
import jax.numpy as jnp
from jax.experimental import pallas as pl
from jax.experimental.pallas import tpu as pltpu

NODE_TYPES = ("bus", "generator", "load", "shunt")

GCN_RELS = (
    ("bus", "ac_line", "bus"),
    ("bus", "transformer", "bus"),
)
SAGE_RELS = (
    ("generator", "generator_link", "bus"),
    ("bus", "generator_link", "generator"),
    ("load", "load_link", "bus"),
    ("bus", "load_link", "load"),
    ("shunt", "shunt_link", "bus"),
    ("bus", "shunt_link", "shunt"),
)

# Fixed relation ordering shared by the packed adjacency, the stacked weights and
# the kernel's slicing logic.
REL_ORDER = (
    ("bus", "ac_line", "bus"),
    ("bus", "transformer", "bus"),
    ("generator", "generator_link", "bus"),
    ("load", "load_link", "bus"),
    ("shunt", "shunt_link", "bus"),
    ("bus", "generator_link", "generator"),
    ("bus", "load_link", "load"),
    ("bus", "shunt_link", "shunt"),
)

HP = 128          # padded lane width for features / hidden channels
OUT_PAD = 8       # padded lane width of the 4-channel final output
ROW_ALIGN = 16    # bf16 sublane tile height
NUM_LAYERS = 2


# ----------------------------------------------------------------------------
# Layout helpers (host-side, run once)
# ----------------------------------------------------------------------------

def slab_layout(num_nodes):
    """Row offsets / padded row counts packing all node types into one slab."""
    offs, pads = {}, {}
    off = 0
    for nt in NODE_TYPES:
        n = int(num_nodes[nt])
        npad = max(ROW_ALIGN, ((n + ROW_ALIGN - 1) // ROW_ALIGN) * ROW_ALIGN)
        offs[nt] = off
        pads[nt] = npad
        off += npad
    return offs, pads, off


def init_params(key, hidden, in_dims):
    def w_init(k, shape):
        return (0.1 * jax.random.normal(k, shape)).astype(jnp.float32)

    def b_init(k, shape):
        return (0.01 * jax.random.normal(k, shape)).astype(jnp.float32)

    params = {"layers": []}
    layer_dims = [dict(in_dims), {nt: hidden for nt in NODE_TYPES}]
    for dims in layer_dims:
        layer = {}
        for rel in GCN_RELS:
            src, _, _ = rel
            key, k1, k2 = jax.random.split(key, 3)
            layer[rel] = {"type": "gcn",
                          "w": w_init(k1, (dims[src], hidden)),
                          "b": b_init(k2, (hidden,))}
        for rel in SAGE_RELS:
            src, _, dst = rel
            key, k1, k2, k3 = jax.random.split(key, 4)
            layer[rel] = {"type": "sage",
                          "wl": w_init(k1, (dims[src], hidden)),
                          "bl": b_init(k3, (hidden,)),
                          "wr": w_init(k2, (dims[dst], hidden))}
        params["layers"].append(layer)
    key, k1 = jax.random.split(key)
    params["lin"] = {"w": w_init(k1, (hidden, 4)),
                     "b": jnp.zeros((4,), jnp.float32)}
    return params


def build_dense_adjs(edge_index_dict, num_nodes):
    """Dense per-relation operators matching PyG GCNConv / SAGEConv defaults."""
    adjs = {}
    gcn_set = set(GCN_RELS)
    for rel, ei in edge_index_dict.items():
        src_t, _, dst_t = rel
        ns, nd = num_nodes[src_t], num_nodes[dst_t]
        src, dst = ei[0], ei[1]
        a = jnp.zeros((nd, ns), jnp.float32).at[dst, src].add(1.0)
        if rel in gcn_set:
            # GCN: add self loops, symmetric normalization D^-1/2 (A+I) D^-1/2
            a = a + jnp.eye(nd, dtype=jnp.float32)
            deg = a.sum(axis=1)
            dinv = jnp.where(deg > 0, 1.0 / jnp.sqrt(deg), 0.0)
            adjs[rel] = dinv[:, None] * a * dinv[None, :]
        else:
            # SAGE: mean aggregation over in-neighbors (0 if no neighbors)
            deg = a.sum(axis=1, keepdims=True)
            adjs[rel] = a / jnp.maximum(deg, 1.0)
    return adjs


def build_packed_adjacency(adjs, num_nodes, offs, pads, r_tot):
    """Embed each relation's [n_dst, n_src] operator into a zero-padded
    [pads[dst], r_tot] block addressing the packed node slab, stacked over
    REL_ORDER -> one bf16 matrix so all message aggregation is a single matmul."""
    blocks = []
    for rel in REL_ORDER:
        src_t, _, dst_t = rel
        a = adjs[rel]
        blk = jnp.zeros((pads[dst_t], r_tot), jnp.float32)
        blk = blk.at[:num_nodes[dst_t],
                     offs[src_t]:offs[src_t] + num_nodes[src_t]].set(a)
        blocks.append(blk)
    return jnp.concatenate(blocks, axis=0).astype(jnp.bfloat16)


def pack_params(params, hp=HP, out_pad=OUT_PAD):
    """Pad + vstack weights so each (layer, dst-type) update is a stack of 128x128
    bf16 tiles (one per incoming relation, plus one pre-summed SAGE root tile);
    biases of all relations into a dst type are pre-summed (f32)."""
    def pad_mat(w, rows, cols, dtype):
        z = jnp.zeros((rows, cols), jnp.float32)
        z = z.at[:w.shape[0], :w.shape[1]].set(w)
        return z.astype(dtype)

    layer_ws, biases = [], []
    for layer in params["layers"]:
        for dst in NODE_TYPES:
            segs = []
            b = jnp.zeros((hp,), jnp.float32)
            root_sum = None
            for rel in REL_ORDER:
                if rel[2] != dst:
                    continue
                p = layer[rel]
                if p["type"] == "gcn":
                    segs.append(pad_mat(p["w"], hp, hp, jnp.float32))
                    b = b.at[:p["b"].shape[0]].add(p["b"])
                else:
                    segs.append(pad_mat(p["wl"], hp, hp, jnp.float32))
                    b = b.at[:p["bl"].shape[0]].add(p["bl"])
                    root_sum = p["wr"] if root_sum is None else root_sum + p["wr"]
            if root_sum is None:        # dst reached only by GCN relations
                root_sum = jnp.zeros((1, 1), jnp.float32)
            segs.append(pad_mat(root_sum, hp, hp, jnp.float32))   # root segment
            layer_ws.append(jnp.concatenate(segs, axis=0).astype(jnp.bfloat16))
            biases.append(b)
    bias_all = jnp.stack(biases, axis=0)                 # [NUM_LAYERS*4, hp] f32
    lin = params["lin"]
    w_lin = pad_mat(lin["w"], hp, out_pad, jnp.bfloat16)
    b_lin = pad_mat(lin["b"].reshape(1, -1), 1, out_pad, jnp.float32)
    return tuple(layer_ws), bias_all, w_lin, b_lin


def pack_features(x_dict, num_nodes, offs, r_tot, hp=HP):
    x = jnp.zeros((r_tot, hp), jnp.float32)
    for nt in NODE_TYPES:
        f = x_dict[nt]
        x = x.at[offs[nt]:offs[nt] + num_nodes[nt], :f.shape[1]].set(f)
    return x.astype(jnp.bfloat16)


# ----------------------------------------------------------------------------
# The fused Pallas kernel (entire forward pass in one pallas_call)
# ----------------------------------------------------------------------------

def make_fused_forward(num_nodes, hp=HP):
    offs, pads, r_tot = slab_layout(num_nodes)

    # row offset of every relation block inside the packed adjacency / agg result
    agg_off = {}
    row = 0
    for rel in REL_ORDER:
        agg_off[rel] = row
        row += pads[rel[2]]
    a_rows = row

    dst_rels = {dst: tuple(rel for rel in REL_ORDER if rel[2] == dst)
                for dst in NODE_TYPES}

    def kernel(x_ref, a_ref,
               wb1, wg1, wl1, ws1, wb2, wg2, wl2, ws2,
               bias_ref, wlin_ref, blin_ref, o_ref, h_ref):
        a = a_ref[...]                                    # bf16 [a_rows, r_tot]
        w_by_layer = (
            {"bus": wb1, "generator": wg1, "load": wl1, "shunt": ws1},
            {"bus": wb2, "generator": wg2, "load": wl2, "shunt": ws2},
        )

        def dst_update(agg16, x16, li, di, dst):
            """ReLU( sum_r agg_r @ W_r  +  x_dst @ W_root  +  bias )  (f32)."""
            w_ref = w_by_layer[li][dst]
            n_d, off_d = pads[dst], offs[dst]
            rels = dst_rels[dst]
            # accumulated per-segment matmuls (no lane-axis concat, same FLOPs)
            rel0 = rels[0]
            h = jnp.dot(agg16[agg_off[rel0]:agg_off[rel0] + n_d, :],
                        w_ref[0:hp, :],
                        preferred_element_type=jnp.float32)
            for s in range(1, len(rels)):
                rel = rels[s]
                h = h + jnp.dot(agg16[agg_off[rel]:agg_off[rel] + n_d, :],
                                w_ref[s * hp:(s + 1) * hp, :],
                                preferred_element_type=jnp.float32)
            ns = len(rels)
            # SAGE root term (root weights of all SAGE rels into dst pre-summed)
            h = h + jnp.dot(x16[off_d:off_d + n_d, :],
                            w_ref[ns * hp:(ns + 1) * hp, :],
                            preferred_element_type=jnp.float32)
            h = h + bias_ref[4 * li + di:4 * li + di + 1, :]
            return jnp.maximum(h, 0.0)

        # ---- layer 1: input slab -> hidden slab in the VMEM scratch ----------
        x0 = x_ref[...]                                   # bf16 [r_tot, hp]
        agg16 = jnp.dot(a, x0, preferred_element_type=jnp.float32
                        ).astype(jnp.bfloat16)            # [a_rows, hp]
        for di, dst in enumerate(NODE_TYPES):
            h_ref[offs[dst]:offs[dst] + pads[dst], :] = (
                dst_update(agg16, x0, 0, di, dst).astype(jnp.bfloat16))

        # ---- layer 2 fused with the shared final Linear ----------------------
        x1 = h_ref[...]                                   # bf16 [r_tot, hp]
        agg16 = jnp.dot(a, x1, preferred_element_type=jnp.float32
                        ).astype(jnp.bfloat16)
        w_lin = wlin_ref[...]                             # bf16 [hp, OUT_PAD]
        b_lin = blin_ref[...]                             # f32  [1, OUT_PAD]
        for di, dst in enumerate(NODE_TYPES):
            h = dst_update(agg16, x1, 1, di, dst).astype(jnp.bfloat16)
            o_ref[offs[dst]:offs[dst] + pads[dst], :] = (
                jnp.dot(h, w_lin, preferred_element_type=jnp.float32) + b_lin)

    vmem = pl.BlockSpec(memory_space=pltpu.MemorySpace.VMEM)

    @jax.jit
    def forward(x_slab, a_all, layer_ws, bias_all, w_lin, b_lin):
        return pl.pallas_call(
            kernel,
            out_shape=jax.ShapeDtypeStruct((r_tot, OUT_PAD), jnp.float32),
            in_specs=[vmem] * 13,
            out_specs=vmem,
            scratch_shapes=[pltpu.VMEM((r_tot, hp), jnp.bfloat16)],
            compiler_params=pltpu.CompilerParams(
                vmem_limit_bytes=32 * 1024 * 1024),
        )(x_slab, a_all, *layer_ws, bias_all, w_lin, b_lin)

    return forward, offs, pads, r_tot, a_rows


# ----------------------------------------------------------------------------
# Pure-JAX f32 reference (same dense math, unpacked) — used for verification
# ----------------------------------------------------------------------------

def reference_forward(params, x_dict, adjs):
    for layer in params["layers"]:
        contrib = {nt: [] for nt in NODE_TYPES}
        for rel, p in layer.items():
            src_t, _, dst_t = rel
            if p["type"] == "gcn":
                out = adjs[rel] @ x_dict[src_t] @ p["w"] + p["b"]
            else:
                out = (adjs[rel] @ x_dict[src_t] @ p["wl"] + p["bl"]
                       + x_dict[dst_t] @ p["wr"])
            contrib[dst_t].append(out)
        x_dict = {nt: jax.nn.relu(sum(lst)) for nt, lst in contrib.items()}
    lin = params["lin"]
    return {nt: x @ lin["w"] + lin["b"] for nt, x in x_dict.items()}


# ----------------------------------------------------------------------------
# Example run
# ----------------------------------------------------------------------------

if __name__ == "__main__":
    hidden_channels = 32
    num_nodes = {"bus": 12, "generator": 6, "load": 8, "shunt": 4}
    in_dims = {"bus": 4, "generator": 3, "load": 2, "shunt": 2}

    key = jax.random.PRNGKey(0)
    ks = jax.random.split(key, 12)

    x_dict = {
        "bus": jax.random.normal(ks[0], (num_nodes["bus"], in_dims["bus"]),
                                 jnp.float32),
        "generator": jax.random.normal(ks[1], (num_nodes["generator"],
                                               in_dims["generator"]), jnp.float32),
        "load": jax.random.normal(ks[2], (num_nodes["load"], in_dims["load"]),
                                  jnp.float32),
        "shunt": jax.random.normal(ks[3], (num_nodes["shunt"], in_dims["shunt"]),
                                   jnp.float32),
    }

    nb = num_nodes["bus"]
    ac_src = jax.random.randint(ks[4], (16,), 0, nb)
    ac_dst = (ac_src + jax.random.randint(ks[5], (16,), 1, nb)) % nb
    tr_src = jax.random.randint(ks[6], (4,), 0, nb)
    tr_dst = (tr_src + jax.random.randint(ks[7], (4,), 1, nb)) % nb
    gen_bus = jax.random.randint(ks[8], (num_nodes["generator"],), 0, nb)
    load_bus = jax.random.randint(ks[9], (num_nodes["load"],), 0, nb)
    shunt_bus = jax.random.randint(ks[10], (num_nodes["shunt"],), 0, nb)

    gen_ids = jnp.arange(num_nodes["generator"])
    load_ids = jnp.arange(num_nodes["load"])
    shunt_ids = jnp.arange(num_nodes["shunt"])

    edge_index_dict = {
        ("bus", "ac_line", "bus"): jnp.stack([ac_src, ac_dst]),
        ("bus", "transformer", "bus"): jnp.stack([tr_src, tr_dst]),
        ("generator", "generator_link", "bus"): jnp.stack([gen_ids, gen_bus]),
        ("bus", "generator_link", "generator"): jnp.stack([gen_bus, gen_ids]),
        ("load", "load_link", "bus"): jnp.stack([load_ids, load_bus]),
        ("bus", "load_link", "load"): jnp.stack([load_bus, load_ids]),
        ("shunt", "shunt_link", "bus"): jnp.stack([shunt_ids, shunt_bus]),
        ("bus", "shunt_link", "shunt"): jnp.stack([shunt_bus, shunt_ids]),
    }

    params = init_params(jax.random.PRNGKey(42), hidden_channels, in_dims)
    adjs = build_dense_adjs(edge_index_dict, num_nodes)

    forward, offs, pads, r_tot, a_rows = make_fused_forward(num_nodes)

    # one-time packing (parameter / topology prep, outside the hot path)
    layer_ws, bias_all, w_lin, b_lin = pack_params(params)
    a_all = build_packed_adjacency(adjs, num_nodes, offs, pads, r_tot)
    x_slab = pack_features(x_dict, num_nodes, offs, r_tot)
    assert a_all.shape == (a_rows, r_tot)

    out_slab = forward(x_slab, a_all, layer_ws, bias_all, w_lin, b_lin)
    out_slab = jax.block_until_ready(out_slab)

    out_dict = {nt: out_slab[offs[nt]:offs[nt] + num_nodes[nt], :4]
                for nt in NODE_TYPES}

    # sanity: shapes/dtypes + match against the pure-JAX f32 dense reference
    # (kernel computes in bf16 with f32 accumulation -> relaxed tolerance)
    ref = reference_forward(params, x_dict, adjs)
    for nt in NODE_TYPES:
        assert out_dict[nt].shape == (num_nodes[nt], 4)
        assert out_dict[nt].dtype == jnp.float32
        assert jnp.allclose(out_dict[nt], ref[nt], atol=3e-2, rtol=3e-2), nt

    print("KERNEL_OK")
</pallas_src>

<mosaic_0001>
module attributes {stable_mosaic.version = 11 : i64} {
  func.func @kernel(%arg0: memref<64x128xbf16, #tpu.memory_space<vmem>>, %arg1: memref<128x64xbf16, #tpu.memory_space<vmem>>, %arg2: memref<768x128xbf16, #tpu.memory_space<vmem>>, %arg3: memref<256x128xbf16, #tpu.memory_space<vmem>>, %arg4: memref<256x128xbf16, #tpu.memory_space<vmem>>, %arg5: memref<256x128xbf16, #tpu.memory_space<vmem>>, %arg6: memref<768x128xbf16, #tpu.memory_space<vmem>>, %arg7: memref<256x128xbf16, #tpu.memory_space<vmem>>, %arg8: memref<256x128xbf16, #tpu.memory_space<vmem>>, %arg9: memref<256x128xbf16, #tpu.memory_space<vmem>>, %arg10: memref<8x128xf32, #tpu.memory_space<vmem>>, %arg11: memref<128x8xbf16, #tpu.memory_space<vmem>>, %arg12: memref<1x8xf32, #tpu.memory_space<vmem>>, %arg13: memref<64x8xf32, #tpu.memory_space<vmem>>, %arg14: memref<64x128xbf16, #tpu.memory_space<vmem>>) attributes {dimension_semantics = [], scalar_prefetch = 0 : i64, scratch_operands = 1 : i64, tpu.core_type = #tpu.core_type<tc>} {
    %c0 = arith.constant 0 : index
    %c0_0 = arith.constant 0 : index
    %0 = vector.load %arg1[%c0, %c0_0] : memref<128x64xbf16, #tpu.memory_space<vmem>>, vector<128x64xbf16>
    %c0_1 = arith.constant 0 : index
    %c0_2 = arith.constant 0 : index
    %1 = vector.load %arg0[%c0_1, %c0_2] : memref<64x128xbf16, #tpu.memory_space<vmem>>, vector<64x128xbf16>
    %cst = arith.constant dense<0.000000e+00> : vector<128x128xf32>
    %2 = tpu.matmul %0, %1, %cst {dimension_numbers = #tpu.dot_dimension_numbers<[1], [0], [0], [1], [0, 0, 1, 1], [], []>} : vector<128x64xbf16>, vector<64x128xbf16>, vector<128x128xf32> -> vector<128x128xf32>
    %3 = arith.truncf %2 : vector<128x128xf32> to vector<128x128xbf16>
    %4 = vector.extract_strided_slice %3 {offsets = [0, 0], sizes = [16, 128], strides = [1, 1]} : vector<128x128xbf16> to vector<16x128xbf16>
    %c0_3 = arith.constant 0 : index
    %c0_4 = arith.constant 0 : index
    %5 = vector.load %arg2[%c0_3, %c0_4] : memref<768x128xbf16, #tpu.memory_space<vmem>>, vector<128x128xbf16>
    %cst_5 = arith.constant dense<0.000000e+00> : vector<16x128xf32>
    %6 = tpu.matmul %4, %5, %cst_5 {dimension_numbers = #tpu.dot_dimension_numbers<[1], [0], [0], [1], [0, 0, 1, 1], [], []>} : vector<16x128xbf16>, vector<128x128xbf16>, vector<16x128xf32> -> vector<16x128xf32>
    %7 = vector.extract_strided_slice %3 {offsets = [16, 0], sizes = [16, 128], strides = [1, 1]} : vector<128x128xbf16> to vector<16x128xbf16>
    %c128 = arith.constant 128 : index
    %c0_6 = arith.constant 0 : index
    %8 = vector.load %arg2[%c128, %c0_6] : memref<768x128xbf16, #tpu.memory_space<vmem>>, vector<128x128xbf16>
    %cst_7 = arith.constant dense<0.000000e+00> : vector<16x128xf32>
    %9 = tpu.matmul %7, %8, %cst_7 {dimension_numbers = #tpu.dot_dimension_numbers<[1], [0], [0], [1], [0, 0, 1, 1], [], []>} : vector<16x128xbf16>, vector<128x128xbf16>, vector<16x128xf32> -> vector<16x128xf32>
    %10 = arith.addf %6, %9 : vector<16x128xf32>
    %11 = vector.extract_strided_slice %3 {offsets = [32, 0], sizes = [16, 128], strides = [1, 1]} : vector<128x128xbf16> to vector<16x128xbf16>
    %c256 = arith.constant 256 : index
    %c0_8 = arith.constant 0 : index
    %12 = vector.load %arg2[%c256, %c0_8] : memref<768x128xbf16, #tpu.memory_space<vmem>>, vector<128x128xbf16>
    %cst_9 = arith.constant dense<0.000000e+00> : vector<16x128xf32>
    %13 = tpu.matmul %11, %12, %cst_9 {dimension_numbers = #tpu.dot_dimension_numbers<[1], [0], [0], [1], [0, 0, 1, 1], [], []>} : vector<16x128xbf16>, vector<128x128xbf16>, vector<16x128xf32> -> vector<16x128xf32>
    %14 = arith.addf %10, %13 : vector<16x128xf32>
    %15 = vector.extract_strided_slice %3 {offsets = [48, 0], sizes = [16, 128], strides = [1, 1]} : vector<128x128xbf16> to vector<16x128xbf16>
    %c384 = arith.constant 384 : index
    %c0_10 = arith.constant 0 : index
    %16 = vector.load %arg2[%c384, %c0_10] : memref<768x128xbf16, #tpu.memory_space<vmem>>, vector<128x128xbf16>
    %cst_11 = arith.constant dense<0.000000e+00> : vector<16x128xf32>
    %17 = tpu.matmul %15, %16, %cst_11 {dimension_numbers = #tpu.dot_dimension_numbers<[1], [0], [0], [1], [0, 0, 1, 1], [], []>} : vector<16x128xbf16>, vector<128x128xbf16>, vector<16x128xf32> -> vector<16x128xf32>
    %18 = arith.addf %14, %17 : vector<16x128xf32>
    %19 = vector.extract_strided_slice %3 {offsets = [64, 0], sizes = [16, 128], strides = [1, 1]} : vector<128x128xbf16> to vector<16x128xbf16>
    %c512 = arith.constant 512 : index
    %c0_12 = arith.constant 0 : index
    %20 = vector.load %arg2[%c512, %c0_12] : memref<768x128xbf16, #tpu.memory_space<vmem>>, vector<128x128xbf16>
    %cst_13 = arith.constant dense<0.000000e+00> : vector<16x128xf32>
    %21 = tpu.matmul %19, %20, %cst_13 {dimension_numbers = #tpu.dot_dimension_numbers<[1], [0], [0], [1], [0, 0, 1, 1], [], []>} : vector<16x128xbf16>, vector<128x128xbf16>, vector<16x128xf32> -> vector<16x128xf32>
    %22 = arith.addf %18, %21 : vector<16x128xf32>
    %23 = vector.extract_strided_slice %1 {offsets = [0, 0], sizes = [16, 128], strides = [1, 1]} : vector<64x128xbf16> to vector<16x128xbf16>
    %c640 = arith.constant 640 : index
    %c0_14 = arith.constant 0 : index
    %24 = vector.load %arg2[%c640, %c0_14] : memref<768x128xbf16, #tpu.memory_space<vmem>>, vector<128x128xbf16>
    %cst_15 = arith.constant dense<0.000000e+00> : vector<16x128xf32>
    %25 = tpu.matmul %23, %24, %cst_15 {dimension_numbers = #tpu.dot_dimension_numbers<[1], [0], [0], [1], [0, 0, 1, 1], [], []>} : vector<16x128xbf16>, vector<128x128xbf16>, vector<16x128xf32> -> vector<16x128xf32>
    %26 = arith.addf %22, %25 : vector<16x128xf32>
    %c0_16 = arith.constant 0 : index
    %c0_17 = arith.constant 0 : index
    %27 = vector.load %arg10[%c0_16, %c0_17] : memref<8x128xf32, #tpu.memory_space<vmem>>, vector<1x128xf32>
    %28 = vector.broadcast %27 : vector<1x128xf32> to vector<16x128xf32>
    %29 = arith.addf %26, %28 : vector<16x128xf32>
    %cst_18 = arith.constant 0.000000e+00 : f32
    %30 = vector.broadcast %cst_18 : f32 to vector<16x128xf32>
    %31 = arith.maximumf %29, %30 : vector<16x128xf32>
    %32 = arith.truncf %31 : vector<16x128xf32> to vector<16x128xbf16>
    %c0_19 = arith.constant 0 : index
    %c0_20 = arith.constant 0 : index
    %33 = vector.load %arg14[%c0_19, %c0_20] : memref<64x128xbf16, #tpu.memory_space<vmem>>, vector<16x128xbf16>
    tpu.vector_store %arg14[%c0_19, %c0_20], %32 {strides = array<i32>} : memref<64x128xbf16, #tpu.memory_space<vmem>>, vector<16x128xbf16>,
    %34 = vector.extract_strided_slice %3 {offsets = [80, 0], sizes = [16, 128], strides = [1, 1]} : vector<128x128xbf16> to vector<16x128xbf16>
    %c0_21 = arith.constant 0 : index
    %c0_22 = arith.constant 0 : index
    %35 = vector.load %arg3[%c0_21, %c0_22] : memref<256x128xbf16, #tpu.memory_space<vmem>>, vector<128x128xbf16>
    %cst_23 = arith.constant dense<0.000000e+00> : vector<16x128xf32>
    %36 = tpu.matmul %34, %35, %cst_23 {dimension_numbers = #tpu.dot_dimension_numbers<[1], [0], [0], [1], [0, 0, 1, 1], [], []>} : vector<16x128xbf16>, vector<128x128xbf16>, vector<16x128xf32> -> vector<16x128xf32>
    %37 = vector.extract_strided_slice %1 {offsets = [16, 0], sizes = [16, 128], strides = [1, 1]} : vector<64x128xbf16> to vector<16x128xbf16>
    %c128_24 = arith.constant 128 : index
    %c0_25 = arith.constant 0 : index
    %38 = vector.load %arg3[%c128_24, %c0_25] : memref<256x128xbf16, #tpu.memory_space<vmem>>, vector<128x128xbf16>
    %cst_26 = arith.constant dense<0.000000e+00> : vector<16x128xf32>
    %39 = tpu.matmul %37, %38, %cst_26 {dimension_numbers = #tpu.dot_dimension_numbers<[1], [0], [0], [1], [0, 0, 1, 1], [], []>} : vector<16x128xbf16>, vector<128x128xbf16>, vector<16x128xf32> -> vector<16x128xf32>
    %40 = arith.addf %36, %39 : vector<16x128xf32>
    %c1 = arith.constant 1 : index
    %c0_27 = arith.constant 0 : index
    %41 = vector.load %arg10[%c1, %c0_27] : memref<8x128xf32, #tpu.memory_space<vmem>>, vector<1x128xf32>
    %42 = vector.broadcast %41 : vector<1x128xf32> to vector<16x128xf32>
    %43 = arith.addf %40, %42 : vector<16x128xf32>
    %cst_28 = arith.constant 0.000000e+00 : f32
    %44 = vector.broadcast %cst_28 : f32 to vector<16x128xf32>
    %45 = arith.maximumf %43, %44 : vector<16x128xf32>
    %46 = arith.truncf %45 : vector<16x128xf32> to vector<16x128xbf16>
    %c16 = arith.constant 16 : index
    %c0_29 = arith.constant 0 : index
    %47 = vector.load %arg14[%c16, %c0_29] : memref<64x128xbf16, #tpu.memory_space<vmem>>, vector<16x128xbf16>
    tpu.vector_store %arg14[%c16, %c0_29], %46 {strides = array<i32>} : memref<64x128xbf16, #tpu.memory_space<vmem>>, vector<16x128xbf16>,
    %48 = vector.extract_strided_slice %3 {offsets = [96, 0], sizes = [16, 128], strides = [1, 1]} : vector<128x128xbf16> to vector<16x128xbf16>
    %c0_30 = arith.constant 0 : index
    %c0_31 = arith.constant 0 : index
    %49 = vector.load %arg4[%c0_30, %c0_31] : memref<256x128xbf16, #tpu.memory_space<vmem>>, vector<128x128xbf16>
    %cst_32 = arith.constant dense<0.000000e+00> : vector<16x128xf32>
    %50 = tpu.matmul %48, %49, %cst_32 {dimension_numbers = #tpu.dot_dimension_numbers<[1], [0], [0], [1], [0, 0, 1, 1], [], []>} : vector<16x128xbf16>, vector<128x128xbf16>, vector<16x128xf32> -> vector<16x128xf32>
    %51 = vector.extract_strided_slice %1 {offsets = [32, 0], sizes = [16, 128], strides = [1, 1]} : vector<64x128xbf16> to vector<16x128xbf16>
    %c128_33 = arith.constant 128 : index
    %c0_34 = arith.constant 0 : index
    %52 = vector.load %arg4[%c128_33, %c0_34] : memref<256x128xbf16, #tpu.memory_space<vmem>>, vector<128x128xbf16>
    %cst_35 = arith.constant dense<0.000000e+00> : vector<16x128xf32>
    %53 = tpu.matmul %51, %52, %cst_35 {dimension_numbers = #tpu.dot_dimension_numbers<[1], [0], [0], [1], [0, 0, 1, 1], [], []>} : vector<16x128xbf16>, vector<128x128xbf16>, vector<16x128xf32> -> vector<16x128xf32>
    %54 = arith.addf %50, %53 : vector<16x128xf32>
    %c2 = arith.constant 2 : index
    %c0_36 = arith.constant 0 : index
    %55 = vector.load %arg10[%c2, %c0_36] : memref<8x128xf32, #tpu.memory_space<vmem>>, vector<1x128xf32>
    %56 = vector.broadcast %55 : vector<1x128xf32> to vector<16x128xf32>
    %57 = arith.addf %54, %56 : vector<16x128xf32>
    %cst_37 = arith.constant 0.000000e+00 : f32
    %58 = vector.broadcast %cst_37 : f32 to vector<16x128xf32>
    %59 = arith.maximumf %57, %58 : vector<16x128xf32>
    %60 = arith.truncf %59 : vector<16x128xf32> to vector<16x128xbf16>
    %c32 = arith.constant 32 : index
    %c0_38 = arith.constant 0 : index
    %61 = vector.load %arg14[%c32, %c0_38] : memref<64x128xbf16, #tpu.memory_space<vmem>>, vector<16x128xbf16>
    tpu.vector_store %arg14[%c32, %c0_38], %60 {strides = array<i32>} : memref<64x128xbf16, #tpu.memory_space<vmem>>, vector<16x128xbf16>,
    %62 = vector.extract_strided_slice %3 {offsets = [112, 0], sizes = [16, 128], strides = [1, 1]} : vector<128x128xbf16> to vector<16x128xbf16>
    %c0_39 = arith.constant 0 : index
    %c0_40 = arith.constant 0 : index
    %63 = vector.load %arg5[%c0_39, %c0_40] : memref<256x128xbf16, #tpu.memory_space<vmem>>, vector<128x128xbf16>
    %cst_41 = arith.constant dense<0.000000e+00> : vector<16x128xf32>
    %64 = tpu.matmul %62, %63, %cst_41 {dimension_numbers = #tpu.dot_dimension_numbers<[1], [0], [0], [1], [0, 0, 1, 1], [], []>} : vector<16x128xbf16>, vector<128x128xbf16>, vector<16x128xf32> -> vector<16x128xf32>
    %65 = vector.extract_strided_slice %1 {offsets = [48, 0], sizes = [16, 128], strides = [1, 1]} : vector<64x128xbf16> to vector<16x128xbf16>
    %c128_42 = arith.constant 128 : index
    %c0_43 = arith.constant 0 : index
    %66 = vector.load %arg5[%c128_42, %c0_43] : memref<256x128xbf16, #tpu.memory_space<vmem>>, vector<128x128xbf16>
    %cst_44 = arith.constant dense<0.000000e+00> : vector<16x128xf32>
    %67 = tpu.matmul %65, %66, %cst_44 {dimension_numbers = #tpu.dot_dimension_numbers<[1], [0], [0], [1], [0, 0, 1, 1], [], []>} : vector<16x128xbf16>, vector<128x128xbf16>, vector<16x128xf32> -> vector<16x128xf32>
    %68 = arith.addf %64, %67 : vector<16x128xf32>
    %c3 = arith.constant 3 : index
    %c0_45 = arith.constant 0 : index
    %69 = vector.load %arg10[%c3, %c0_45] : memref<8x128xf32, #tpu.memory_space<vmem>>, vector<1x128xf32>
    %70 = vector.broadcast %69 : vector<1x128xf32> to vector<16x128xf32>
    %71 = arith.addf %68, %70 : vector<16x128xf32>
    %cst_46 = arith.constant 0.000000e+00 : f32
    %72 = vector.broadcast %cst_46 : f32 to vector<16x128xf32>
    %73 = arith.maximumf %71, %72 : vector<16x128xf32>
    %74 = arith.truncf %73 : vector<16x128xf32> to vector<16x128xbf16>
    %c48 = arith.constant 48 : index
    %c0_47 = arith.constant 0 : index
    %75 = vector.load %arg14[%c48, %c0_47] : memref<64x128xbf16, #tpu.memory_space<vmem>>, vector<16x128xbf16>
    tpu.vector_store %arg14[%c48, %c0_47], %74 {strides = array<i32>} : memref<64x128xbf16, #tpu.memory_space<vmem>>, vector<16x128xbf16>,
    %c0_48 = arith.constant 0 : index
    %c0_49 = arith.constant 0 : index
    %76 = vector.load %arg14[%c0_48, %c0_49] : memref<64x128xbf16, #tpu.memory_space<vmem>>, vector<64x128xbf16>
    %cst_50 = arith.constant dense<0.000000e+00> : vector<128x128xf32>
    %77 = tpu.matmul %0, %76, %cst_50 {dimension_numbers = #tpu.dot_dimension_numbers<[1], [0], [0], [1], [0, 0, 1, 1], [], []>} : vector<128x64xbf16>, vector<64x128xbf16>, vector<128x128xf32> -> vector<128x128xf32>
    %78 = arith.truncf %77 : vector<128x128xf32> to vector<128x128xbf16>
    %c0_51 = arith.constant 0 : index
    %c0_52 = arith.constant 0 : index
    %79 = vector.load %arg11[%c0_51, %c0_52] : memref<128x8xbf16, #tpu.memory_space<vmem>>, vector<128x8xbf16>
    %c0_53 = arith.constant 0 : index
    %c0_54 = arith.constant 0 : index
    %80 = vector.load %arg12[%c0_53, %c0_54] : memref<1x8xf32, #tpu.memory_space<vmem>>, vector<1x8xf32>
    %81 = vector.extract_strided_slice %78 {offsets = [0, 0], sizes = [16, 128], strides = [1, 1]} : vector<128x128xbf16> to vector<16x128xbf16>
    %c0_55 = arith.constant 0 : index
    %c0_56 = arith.constant 0 : index
    %82 = vector.load %arg6[%c0_55, %c0_56] : memref<768x128xbf16, #tpu.memory_space<vmem>>, vector<128x128xbf16>
    %cst_57 = arith.constant dense<0.000000e+00> : vector<16x128xf32>
    %83 = tpu.matmul %81, %82, %cst_57 {dimension_numbers = #tpu.dot_dimension_numbers<[1], [0], [0], [1], [0, 0, 1, 1], [], []>} : vector<16x128xbf16>, vector<128x128xbf16>, vector<16x128xf32> -> vector<16x128xf32>
    %84 = vector.extract_strided_slice %78 {offsets = [16, 0], sizes = [16, 128], strides = [1, 1]} : vector<128x128xbf16> to vector<16x128xbf16>
    %c128_58 = arith.constant 128 : index
    %c0_59 = arith.constant 0 : index
    %85 = vector.load %arg6[%c128_58, %c0_59] : memref<768x128xbf16, #tpu.memory_space<vmem>>, vector<128x128xbf16>
    %cst_60 = arith.constant dense<0.000000e+00> : vector<16x128xf32>
    %86 = tpu.matmul %84, %85, %cst_60 {dimension_numbers = #tpu.dot_dimension_numbers<[1], [0], [0], [1], [0, 0, 1, 1], [], []>} : vector<16x128xbf16>, vector<128x128xbf16>, vector<16x128xf32> -> vector<16x128xf32>
    %87 = arith.addf %83, %86 : vector<16x128xf32>
    %88 = vector.extract_strided_slice %78 {offsets = [32, 0], sizes = [16, 128], strides = [1, 1]} : vector<128x128xbf16> to vector<16x128xbf16>
    %c256_61 = arith.constant 256 : index
    %c0_62 = arith.constant 0 : index
    %89 = vector.load %arg6[%c256_61, %c0_62] : memref<768x128xbf16, #tpu.memory_space<vmem>>, vector<128x128xbf16>
    %cst_63 = arith.constant dense<0.000000e+00> : vector<16x128xf32>
    %90 = tpu.matmul %88, %89, %cst_63 {dimension_numbers = #tpu.dot_dimension_numbers<[1], [0], [0], [1], [0, 0, 1, 1], [], []>} : vector<16x128xbf16>, vector<128x128xbf16>, vector<16x128xf32> -> vector<16x128xf32>
    %91 = arith.addf %87, %90 : vector<16x128xf32>
    %92 = vector.extract_strided_slice %78 {offsets = [48, 0], sizes = [16, 128], strides = [1, 1]} : vector<128x128xbf16> to vector<16x128xbf16>
    %c384_64 = arith.constant 384 : index
    %c0_65 = arith.constant 0 : index
    %93 = vector.load %arg6[%c384_64, %c0_65] : memref<768x128xbf16, #tpu.memory_space<vmem>>, vector<128x128xbf16>
    %cst_66 = arith.constant dense<0.000000e+00> : vector<16x128xf32>
    %94 = tpu.matmul %92, %93, %cst_66 {dimension_numbers = #tpu.dot_dimension_numbers<[1], [0], [0], [1], [0, 0, 1, 1], [], []>} : vector<16x128xbf16>, vector<128x128xbf16>, vector<16x128xf32> -> vector<16x128xf32>
    %95 = arith.addf %91, %94 : vector<16x128xf32>
    %96 = vector.extract_strided_slice %78 {offsets = [64, 0], sizes = [16, 128], strides = [1, 1]} : vector<128x128xbf16> to vector<16x128xbf16>
    %c512_67 = arith.constant 512 : index
    %c0_68 = arith.constant 0 : index
    %97 = vector.load %arg6[%c512_67, %c0_68] : memref<768x128xbf16, #tpu.memory_space<vmem>>, vector<128x128xbf16>
    %cst_69 = arith.constant dense<0.000000e+00> : vector<16x128xf32>
    %98 = tpu.matmul %96, %97, %cst_69 {dimension_numbers = #tpu.dot_dimension_numbers<[1], [0], [0], [1], [0, 0, 1, 1], [], []>} : vector<16x128xbf16>, vector<128x128xbf16>, vector<16x128xf32> -> vector<16x128xf32>
    %99 = arith.addf %95, %98 : vector<16x128xf32>
    %100 = vector.extract_strided_slice %76 {offsets = [0, 0], sizes = [16, 128], strides = [1, 1]} : vector<64x128xbf16> to vector<16x128xbf16>
    %c640_70 = arith.constant 640 : index
    %c0_71 = arith.constant 0 : index
    %101 = vector.load %arg6[%c640_70, %c0_71] : memref<768x128xbf16, #tpu.memory_space<vmem>>, vector<128x128xbf16>
    %cst_72 = arith.constant dense<0.000000e+00> : vector<16x128xf32>
    %102 = tpu.matmul %100, %101, %cst_72 {dimension_numbers = #tpu.dot_dimension_numbers<[1], [0], [0], [1], [0, 0, 1, 1], [], []>} : vector<16x128xbf16>, vector<128x128xbf16>, vector<16x128xf32> -> vector<16x128xf32>
    %103 = arith.addf %99, %102 : vector<16x128xf32>
    %c4 = arith.constant 4 : index
    %c0_73 = arith.constant 0 : index
    %104 = vector.load %arg10[%c4, %c0_73] : memref<8x128xf32, #tpu.memory_space<vmem>>, vector<1x128xf32>
    %105 = vector.broadcast %104 : vector<1x128xf32> to vector<16x128xf32>
    %106 = arith.addf %103, %105 : vector<16x128xf32>
    %cst_74 = arith.constant 0.000000e+00 : f32
    %107 = vector.broadcast %cst_74 : f32 to vector<16x128xf32>
    %108 = arith.maximumf %106, %107 : vector<16x128xf32>
    %109 = arith.truncf %108 : vector<16x128xf32> to vector<16x128xbf16>
    %cst_75 = arith.constant dense<0.000000e+00> : vector<16x8xf32>
    %110 = tpu.matmul %109, %79, %cst_75 {dimension_numbers = #tpu.dot_dimension_numbers<[1], [0], [0], [1], [0, 0, 1, 1], [], []>} : vector<16x128xbf16>, vector<128x8xbf16>, vector<16x8xf32> -> vector<16x8xf32>
    %111 = vector.broadcast %80 : vector<1x8xf32> to vector<16x8xf32>
    %112 = arith.addf %110, %111 : vector<16x8xf32>
    %c0_76 = arith.constant 0 : index
    %c0_77 = arith.constant 0 : index
    %113 = vector.load %arg13[%c0_76, %c0_77] : memref<64x8xf32, #tpu.memory_space<vmem>>, vector<16x8xf32>
    tpu.vector_store %arg13[%c0_76, %c0_77], %112 {strides = array<i32>} : memref<64x8xf32, #tpu.memory_space<vmem>>, vector<16x8xf32>,
    %114 = vector.extract_strided_slice %78 {offsets = [80, 0], sizes = [16, 128], strides = [1, 1]} : vector<128x128xbf16> to vector<16x128xbf16>
    %c0_78 = arith.constant 0 : index
    %c0_79 = arith.constant 0 : index
    %115 = vector.load %arg7[%c0_78, %c0_79] : memref<256x128xbf16, #tpu.memory_space<vmem>>, vector<128x128xbf16>
    %cst_80 = arith.constant dense<0.000000e+00> : vector<16x128xf32>
    %116 = tpu.matmul %114, %115, %cst_80 {dimension_numbers = #tpu.dot_dimension_numbers<[1], [0], [0], [1], [0, 0, 1, 1], [], []>} : vector<16x128xbf16>, vector<128x128xbf16>, vector<16x128xf32> -> vector<16x128xf32>
    %117 = vector.extract_strided_slice %76 {offsets = [16, 0], sizes = [16, 128], strides = [1, 1]} : vector<64x128xbf16> to vector<16x128xbf16>
    %c128_81 = arith.constant 128 : index
    %c0_82 = arith.constant 0 : index
    %118 = vector.load %arg7[%c128_81, %c0_82] : memref<256x128xbf16, #tpu.memory_space<vmem>>, vector<128x128xbf16>
    %cst_83 = arith.constant dense<0.000000e+00> : vector<16x128xf32>
    %119 = tpu.matmul %117, %118, %cst_83 {dimension_numbers = #tpu.dot_dimension_numbers<[1], [0], [0], [1], [0, 0, 1, 1], [], []>} : vector<16x128xbf16>, vector<128x128xbf16>, vector<16x128xf32> -> vector<16x128xf32>
    %120 = arith.addf %116, %119 : vector<16x128xf32>
    %c5 = arith.constant 5 : index
    %c0_84 = arith.constant 0 : index
    %121 = vector.load %arg10[%c5, %c0_84] : memref<8x128xf32, #tpu.memory_space<vmem>>, vector<1x128xf32>
    %122 = vector.broadcast %121 : vector<1x128xf32> to vector<16x128xf32>
    %123 = arith.addf %120, %122 : vector<16x128xf32>
    %cst_85 = arith.constant 0.000000e+00 : f32
    %124 = vector.broadcast %cst_85 : f32 to vector<16x128xf32>
    %125 = arith.maximumf %123, %124 : vector<16x128xf32>
    %126 = arith.truncf %125 : vector<16x128xf32> to vector<16x128xbf16>
    %cst_86 = arith.constant dense<0.000000e+00> : vector<16x8xf32>
    %127 = tpu.matmul %126, %79, %cst_86 {dimension_numbers = #tpu.dot_dimension_numbers<[1], [0], [0], [1], [0, 0, 1, 1], [], []>} : vector<16x128xbf16>, vector<128x8xbf16>, vector<16x8xf32> -> vector<16x8xf32>
    %128 = vector.broadcast %80 : vector<1x8xf32> to vector<16x8xf32>
    %129 = arith.addf %127, %128 : vector<16x8xf32>
    %c16_87 = arith.constant 16 : index
    %c0_88 = arith.constant 0 : index
    %130 = vector.load %arg13[%c16_87, %c0_88] : memref<64x8xf32, #tpu.memory_space<vmem>>, vector<16x8xf32>
    tpu.vector_store %arg13[%c16_87, %c0_88], %129 {strides = array<i32>} : memref<64x8xf32, #tpu.memory_space<vmem>>, vector<16x8xf32>,
    %131 = vector.extract_strided_slice %78 {offsets = [96, 0], sizes = [16, 128], strides = [1, 1]} : vector<128x128xbf16> to vector<16x128xbf16>
    %c0_89 = arith.constant 0 : index
    %c0_90 = arith.constant 0 : index
    %132 = vector.load %arg8[%c0_89, %c0_90] : memref<256x128xbf16, #tpu.memory_space<vmem>>, vector<128x128xbf16>
    %cst_91 = arith.constant dense<0.000000e+00> : vector<16x128xf32>
    %133 = tpu.matmul %131, %132, %cst_91 {dimension_numbers = #tpu.dot_dimension_numbers<[1], [0], [0], [1], [0, 0, 1, 1], [], []>} : vector<16x128xbf16>, vector<128x128xbf16>, vector<16x128xf32> -> vector<16x128xf32>
    %134 = vector.extract_strided_slice %76 {offsets = [32, 0], sizes = [16, 128], strides = [1, 1]} : vector<64x128xbf16> to vector<16x128xbf16>
    %c128_92 = arith.constant 128 : index
    %c0_93 = arith.constant 0 : index
    %135 = vector.load %arg8[%c128_92, %c0_93] : memref<256x128xbf16, #tpu.memory_space<vmem>>, vector<128x128xbf16>
    %cst_94 = arith.constant dense<0.000000e+00> : vector<16x128xf32>
    %136 = tpu.matmul %134, %135, %cst_94 {dimension_numbers = #tpu.dot_dimension_numbers<[1], [0], [0], [1], [0, 0, 1, 1], [], []>} : vector<16x128xbf16>, vector<128x128xbf16>, vector<16x128xf32> -> vector<16x128xf32>
    %137 = arith.addf %133, %136 : vector<16x128xf32>
    %c6 = arith.constant 6 : index
    %c0_95 = arith.constant 0 : index
    %138 = vector.load %arg10[%c6, %c0_95] : memref<8x128xf32, #tpu.memory_space<vmem>>, vector<1x128xf32>
    %139 = vector.broadcast %138 : vector<1x128xf32> to vector<16x128xf32>
    %140 = arith.addf %137, %139 : vector<16x128xf32>
    %cst_96 = arith.constant 0.000000e+00 : f32
    %141 = vector.broadcast %cst_96 : f32 to vector<16x128xf32>
    %142 = arith.maximumf %140, %141 : vector<16x128xf32>
    %143 = arith.truncf %142 : vector<16x128xf32> to vector<16x128xbf16>
    %cst_97 = arith.constant dense<0.000000e+00> : vector<16x8xf32>
    %144 = tpu.matmul %143, %79, %cst_97 {dimension_numbers = #tpu.dot_dimension_numbers<[1], [0], [0], [1], [0, 0, 1, 1], [], []>} : vector<16x128xbf16>, vector<128x8xbf16>, vector<16x8xf32> -> vector<16x8xf32>
    %145 = vector.broadcast %80 : vector<1x8xf32> to vector<16x8xf32>
    %146 = arith.addf %144, %145 : vector<16x8xf32>
    %c32_98 = arith.constant 32 : index
    %c0_99 = arith.constant 0 : index
    %147 = vector.load %arg13[%c32_98, %c0_99] : memref<64x8xf32, #tpu.memory_space<vmem>>, vector<16x8xf32>
    tpu.vector_store %arg13[%c32_98, %c0_99], %146 {strides = array<i32>} : memref<64x8xf32, #tpu.memory_space<vmem>>, vector<16x8xf32>,
    %148 = vector.extract_strided_slice %78 {offsets = [112, 0], sizes = [16, 128], strides = [1, 1]} : vector<128x128xbf16> to vector<16x128xbf16>
    %c0_100 = arith.constant 0 : index
    %c0_101 = arith.constant 0 : index
    %149 = vector.load %arg9[%c0_100, %c0_101] : memref<256x128xbf16, #tpu.memory_space<vmem>>, vector<128x128xbf16>
    %cst_102 = arith.constant dense<0.000000e+00> : vector<16x128xf32>
    %150 = tpu.matmul %148, %149, %cst_102 {dimension_numbers = #tpu.dot_dimension_numbers<[1], [0], [0], [1], [0, 0, 1, 1], [], []>} : vector<16x128xbf16>, vector<128x128xbf16>, vector<16x128xf32> -> vector<16x128xf32>
    %151 = vector.extract_strided_slice %76 {offsets = [48, 0], sizes = [16, 128], strides = [1, 1]} : vector<64x128xbf16> to vector<16x128xbf16>
    %c128_103 = arith.constant 128 : index
    %c0_104 = arith.constant 0 : index
    %152 = vector.load %arg9[%c128_103, %c0_104] : memref<256x128xbf16, #tpu.memory_space<vmem>>, vector<128x128xbf16>
    %cst_105 = arith.constant dense<0.000000e+00> : vector<16x128xf32>
    %153 = tpu.matmul %151, %152, %cst_105 {dimension_numbers = #tpu.dot_dimension_numbers<[1], [0], [0], [1], [0, 0, 1, 1], [], []>} : vector<16x128xbf16>, vector<128x128xbf16>, vector<16x128xf32> -> vector<16x128xf32>
    %154 = arith.addf %150, %153 : vector<16x128xf32>
    %c7 = arith.constant 7 : index
    %c0_106 = arith.constant 0 : index
    %155 = vector.load %arg10[%c7, %c0_106] : memref<8x128xf32, #tpu.memory_space<vmem>>, vector<1x128xf32>
    %156 = vector.broadcast %155 : vector<1x128xf32> to vector<16x128xf32>
    %157 = arith.addf %154, %156 : vector<16x128xf32>
    %cst_107 = arith.constant 0.000000e+00 : f32
    %158 = vector.broadcast %cst_107 : f32 to vector<16x128xf32>
    %159 = arith.maximumf %157, %158 : vector<16x128xf32>
    %160 = arith.truncf %159 : vector<16x128xf32> to vector<16x128xbf16>
    %cst_108 = arith.constant dense<0.000000e+00> : vector<16x8xf32>
    %161 = tpu.matmul %160, %79, %cst_108 {dimension_numbers = #tpu.dot_dimension_numbers<[1], [0], [0], [1], [0, 0, 1, 1], [], []>} : vector<16x128xbf16>, vector<128x8xbf16>, vector<16x8xf32> -> vector<16x8xf32>
    %162 = vector.broadcast %80 : vector<1x8xf32> to vector<16x8xf32>
    %163 = arith.addf %161, %162 : vector<16x8xf32>
    %c48_109 = arith.constant 48 : index
    %c0_110 = arith.constant 0 : index
    %164 = vector.load %arg13[%c48_109, %c0_110] : memref<64x8xf32, #tpu.memory_space<vmem>>, vector<16x8xf32>
    tpu.vector_store %arg13[%c48_109, %c0_110], %163 {strides = array<i32>} : memref<64x8xf32, #tpu.memory_space<vmem>>, vector<16x8xf32>,
    return
  }
}

</mosaic_0001>

<llo_original>
// kernel: forward.1
$region0: #{forward.1}
  #allocation0 [shape = 'u32[]', space=smem, size = 0x4, offset = 0x4, fixed_abs, tag = 'smem constant byte address 0x4 - core index']
  #allocation1 [shape = 'u32[144,128]{1,0:T(1,128)}', space=vmem, size = 0x12000, scoped, tag = 'internal scratch']
  #allocation2 [shape = 'bf16[64,128]{1,0:T(8,128)(2,1)}', space=vmem, size = 0x4000, scoped, tag = 'scratch operand']
  %s0 = inlined_call_operand.vmem [shape: bf16[64,128], index: 0, kind: input, shape index: {}]
  %s1 = inlined_call_operand.vmem [shape: bf16[128,64], index: 1, kind: input, shape index: {}]
  %s2 = inlined_call_operand.hbm [shape: bf16[768,128], index: 2, kind: input, shape index: {}]
  %s3 = inlined_call_operand.vmem [shape: bf16[256,128], index: 3, kind: input, shape index: {}]
  %s4 = inlined_call_operand.hbm [shape: bf16[256,128], index: 4, kind: input, shape index: {}]
  %s5 = inlined_call_operand.hbm [shape: bf16[256,128], index: 5, kind: input, shape index: {}]
  %s6 = inlined_call_operand.hbm [shape: bf16[768,128], index: 6, kind: input, shape index: {}]
  %s7 = inlined_call_operand.hbm [shape: bf16[256,128], index: 7, kind: input, shape index: {}]
  %s8 = inlined_call_operand.hbm [shape: bf16[256,128], index: 8, kind: input, shape index: {}]
  %s9 = inlined_call_operand.hbm [shape: bf16[256,128], index: 9, kind: input, shape index: {}]
  %s10 = inlined_call_operand.vmem [shape: f32[8,128], index: 10, kind: input, shape index: {}]
  %s11 = inlined_call_operand.vmem [shape: bf16[128,8], index: 11, kind: input, shape index: {}]
  %s12 = inlined_call_operand.vmem [shape: f32[1,8], index: 12, kind: input, shape index: {}]
  %s13 = inlined_call_operand.vmem [shape: f32[64,8], index: 13, kind: output, shape index: {}]
  %s14 = sld [smem:[#allocation0]]
  $region90: #{forward.1} parent=0
    _
  %s16 = ssub.s32 1, %s14
  %s17 = scalar_select 0, %s16, %s14
  $region1: #{forward.1} parent=0
    #allocation3 [shape = 'u8[196608]{0}', space=vmem, size = 0x30000, scoped, tag = 'input window, operand 2, single buffered']
    #allocation4 [shape = 's32[1]{0}', space=sflag, size = 0x4, scoped, tag = 'scoped memory for forward.1']
    #allocation5 [shape = 'u8[65536]{0}', space=vmem, size = 0x10000, scoped, tag = 'input window, operand 4, single buffered']
    #allocation6 [shape = 's32[1]{0}', space=sflag, size = 0x4, scoped, tag = 'scoped memory for forward.1']
    #allocation7 [shape = 'u8[65536]{0}', space=vmem, size = 0x10000, scoped, tag = 'input window, operand 5, single buffered']
    #allocation8 [shape = 'u8[196608]{0}', space=vmem, size = 0x30000, scoped, tag = 'input window, operand 6, single buffered']
    #allocation9 [shape = 's32[1]{0}', space=sflag, size = 0x4, scoped, tag = 'scoped memory for forward.1']
    #allocation10 [shape = 'u8[65536]{0}', space=vmem, size = 0x10000, scoped, tag = 'input window, operand 7, single buffered']
    #allocation11 [shape = 'u8[65536]{0}', space=vmem, size = 0x10000, scoped, tag = 'input window, operand 8, single buffered']
    #allocation12 [shape = 's32[1]{0}', space=sflag, size = 0x4, scoped, tag = 'scoped memory for forward.1']
    #allocation13 [shape = 'u8[65536]{0}', space=vmem, size = 0x10000, scoped, tag = 'input window, operand 9, single buffered']
    %18 = vsyncpa [#allocation4], 0
    %19 = vsyncpa [#allocation6], 0
    %20 = vsyncpa [#allocation9], 0
    %21 = vsyncpa [#allocation12], 0
    // Predicated region
    $region2: #{forward.1} parent=1 // pred_check
      _
    $region3: #{forward.1} parent=1 // pred_check_branch
      %23 = sbr.rel (0) target = $region5
    $region4: #{forward.1} parent=1 // pred_region
      _
    $region5: #{forward.1} parent=1 // pred_fallthru
      _
    // Predicated region
    $region6: #{forward.1} parent=1 // pred_check
      _
    $region7: #{forward.1} parent=1 // pred_check_branch
      %25 = sbr.rel (0) target = $region9
    $region8: #{forward.1} parent=1 // pred_region
      _
    $region9: #{forward.1} parent=1 // pred_fallthru
      _
    // Predicated region
    $region10: #{forward.1} parent=1 // pred_check
      _
    $region11: #{forward.1} parent=1 // pred_check_branch
      %27 = sbr.rel (0) target = $region13
    $region12: #{forward.1} parent=1 // pred_region
      %s29 = ssub.s32 6144, 6144
      %30 = vsyncadd [#allocation4], %s29
      %s31 = sshll.u32 [#allocation3], 4
      %s32 = int_to_ptr.vmem [resolvable:$true] %s31
      %37 = dma.hbm_to_vmem [thread:$0]  %s2, 6144, %s32, [#allocation4], 64, 64, 4
    $region13: #{forward.1} parent=1 // pred_fallthru
      _
    // Predicated region
    $region14: #{forward.1} parent=1 // pred_check
      _
    $region15: #{forward.1} parent=1 // pred_check_branch
      %39 = sbr.rel (0) target = $region17
    $region16: #{forward.1} parent=1 // pred_region
      _
    $region17: #{forward.1} parent=1 // pred_fallthru
      _
    // Predicated region
    $region18: #{forward.1} parent=1 // pred_check
      _
    $region19: #{forward.1} parent=1 // pred_check_branch
      %41 = sbr.rel (0) target = $region21
    $region20: #{forward.1} parent=1 // pred_region
      %s43 = ssub.s32 2048, 2048
      %44 = vsyncadd [#allocation6], %s43
      %s45 = sshll.u32 [#allocation5], 4
      %s46 = int_to_ptr.vmem [resolvable:$true] %s45
      %51 = dma.hbm_to_vmem [thread:$0]  %s4, 2048, %s46, [#allocation6], 64, 64, 4
    $region21: #{forward.1} parent=1 // pred_fallthru
      _
    // Predicated region
    $region22: #{forward.1} parent=1 // pred_check
      _
    $region23: #{forward.1} parent=1 // pred_check_branch
      %53 = sbr.rel (0) target = $region25
    $region24: #{forward.1} parent=1 // pred_region
      %s55 = ssub.s32 2048, 2048
      %56 = vsyncadd [#allocation6], %s55
      %s57 = sshll.u32 [#allocation7], 4
      %s58 = int_to_ptr.vmem [resolvable:$true] %s57
      %63 = dma.hbm_to_vmem [thread:$0]  %s5, 2048, %s58, [#allocation6], 64, 64, 4
    $region25: #{forward.1} parent=1 // pred_fallthru
      _
    // Predicated region
    $region26: #{forward.1} parent=1 // pred_check
      _
    $region27: #{forward.1} parent=1 // pred_check_branch
      %65 = sbr.rel (0) target = $region29
    $region28: #{forward.1} parent=1 // pred_region
      %s67 = ssub.s32 6144, 6144
      %68 = vsyncadd [#allocation9], %s67
      %s69 = sshll.u32 [#allocation8], 4
      %s70 = int_to_ptr.vmem [resolvable:$true] %s69
      %75 = dma.hbm_to_vmem [thread:$0]  %s6, 6144, %s70, [#allocation9], 64, 64, 4
    $region29: #{forward.1} parent=1 // pred_fallthru
      _
    // Predicated region
    $region30: #{forward.1} parent=1 // pred_check
      _
    $region31: #{forward.1} parent=1 // pred_check_branch
      %77 = sbr.rel (0) target = $region33
    $region32: #{forward.1} parent=1 // pred_region
      %s79 = ssub.s32 2048, 2048
      %80 = vsyncadd [#allocation9], %s79
      %s81 = sshll.u32 [#allocation10], 4
      %s82 = int_to_ptr.vmem [resolvable:$true] %s81
      %87 = dma.hbm_to_vmem [thread:$0]  %s7, 2048, %s82, [#allocation9], 64, 64, 4
    $region33: #{forward.1} parent=1 // pred_fallthru
      _
    // Predicated region
    $region34: #{forward.1} parent=1 // pred_check
      _
    $region35: #{forward.1} parent=1 // pred_check_branch
      %89 = sbr.rel (0) target = $region37
    $region36: #{forward.1} parent=1 // pred_region
      %s91 = ssub.s32 2048, 2048
      %92 = vsyncadd [#allocation12], %s91
      %s93 = sshll.u32 [#allocation11], 4
      %s94 = int_to_ptr.vmem [resolvable:$true] %s93
      %99 = dma.hbm_to_vmem [thread:$0]  %s8, 2048, %s94, [#allocation12], 64, 64, 4
    $region37: #{forward.1} parent=1 // pred_fallthru
      _
    // Predicated region
    $region38: #{forward.1} parent=1 // pred_check
      _
    $region39: #{forward.1} parent=1 // pred_check_branch
      %101 = sbr.rel (0) target = $region41
    $region40: #{forward.1} parent=1 // pred_region
      %s103 = ssub.s32 2048, 2048
      %104 = vsyncadd [#allocation12], %s103
      %s105 = sshll.u32 [#allocation13], 4
      %s106 = int_to_ptr.vmem [resolvable:$true] %s105
      %111 = dma.hbm_to_vmem [thread:$0]  %s9, 2048, %s106, [#allocation12], 64, 64, 4
    $region41: #{forward.1} parent=1 // pred_fallthru
      _
    // Predicated region
    $region42: #{forward.1} parent=1 // pred_check
      _
    $region43: #{forward.1} parent=1 // pred_check_branch
      %113 = sbr.rel (0) target = $region45
    $region44: #{forward.1} parent=1 // pred_region
      _
    $region45: #{forward.1} parent=1 // pred_fallthru
      _
    // Predicated region
    $region46: #{forward.1} parent=1 // pred_check
      _
    $region47: #{forward.1} parent=1 // pred_check_branch
      %115 = sbr.rel (0) target = $region49
    $region48: #{forward.1} parent=1 // pred_region
      _
    $region49: #{forward.1} parent=1 // pred_fallthru
      _
    // Predicated region
    $region50: #{forward.1} parent=1 // pred_check
      _
    $region51: #{forward.1} parent=1 // pred_check_branch
      %117 = sbr.rel (0) target = $region53
    $region52: #{forward.1} parent=1 // pred_region
      _
    $region53: #{forward.1} parent=1 // pred_fallthru
      _
    // Predicated region
    $region54: #{forward.1} parent=1 // pred_check
      _
    $region55: #{forward.1} parent=1 // pred_check_branch
      %119 = sbr.rel (0) target = $region57
    $region56: #{forward.1} parent=1 // pred_region
      %120 = dma.done [#allocation4], 6144
    $region57: #{forward.1} parent=1 // pred_fallthru
      _
    // Predicated region
    $region58: #{forward.1} parent=1 // pred_check
      _
    $region59: #{forward.1} parent=1 // pred_check_branch
      %122 = sbr.rel (0) target = $region61
    $region60: #{forward.1} parent=1 // pred_region
      %123 = dma.done [#allocation6], 2048
    $region61: #{forward.1} parent=1 // pred_fallthru
      _
    // Predicated region
    $region62: #{forward.1} parent=1 // pred_check
      _
    $region63: #{forward.1} parent=1 // pred_check_branch
      %125 = sbr.rel (0) target = $region65
    $region64: #{forward.1} parent=1 // pred_region
      %126 = dma.done [#allocation6], 2048
    $region65: #{forward.1} parent=1 // pred_fallthru
      _
    // Predicated region
    $region66: #{forward.1} parent=1 // pred_check
      _
    $region67: #{forward.1} parent=1 // pred_check_branch
      %128 = sbr.rel (0) target = $region69
    $region68: #{forward.1} parent=1 // pred_region
      %129 = dma.done [#allocation9], 6144
    $region69: #{forward.1} parent=1 // pred_fallthru
      _
    // Predicated region
    $region70: #{forward.1} parent=1 // pred_check
      _
    $region71: #{forward.1} parent=1 // pred_check_branch
      %131 = sbr.rel (0) target = $region73
    $region72: #{forward.1} parent=1 // pred_region
      %132 = dma.done [#allocation9], 2048
    $region73: #{forward.1} parent=1 // pred_fallthru
      _
    // Predicated region
    $region74: #{forward.1} parent=1 // pred_check
      _
    $region75: #{forward.1} parent=1 // pred_check_branch
      %134 = sbr.rel (0) target = $region77
    $region76: #{forward.1} parent=1 // pred_region
      %135 = dma.done [#allocation12], 2048
    $region77: #{forward.1} parent=1 // pred_fallthru
      _
    // Predicated region
    $region78: #{forward.1} parent=1 // pred_check
      _
    $region79: #{forward.1} parent=1 // pred_check_branch
      %137 = sbr.rel (0) target = $region81
    $region80: #{forward.1} parent=1 // pred_region
      %138 = dma.done [#allocation12], 2048
    $region81: #{forward.1} parent=1 // pred_fallthru
      _
    %v140 = vld [vmem:[%s1] sm:$0xf]
    %v141 = vld [vmem:[%s1 + $0x4] sm:$0xf]
    %v142 = vld [vmem:[%s1 + $0x8] sm:$0xf]
    %v143 = vld [vmem:[%s1 + $0xc] sm:$0xf]
    %v144 = vld [vmem:[%s1 + $0x10] sm:$0xf]
    %v145 = vld [vmem:[%s1 + $0x14] sm:$0xf]
    %v146 = vld [vmem:[%s1 + $0x18] sm:$0xf]
    %v147 = vld [vmem:[%s1 + $0x1c] sm:$0xf]
    %v148 = vld [vmem:[%s1 + $0x20] sm:$0xf]
    %v149 = vld [vmem:[%s1 + $0x24] sm:$0xf]
    %v150 = vld [vmem:[%s1 + $0x28] sm:$0xf]
    %v151 = vld [vmem:[%s1 + $0x2c] sm:$0xf]
    %v152 = vld [vmem:[%s1 + $0x30] sm:$0xf]
    %v153 = vld [vmem:[%s1 + $0x34] sm:$0xf]
    %v154 = vld [vmem:[%s1 + $0x38] sm:$0xf]
    %v155 = vld [vmem:[%s1 + $0x3c] sm:$0xf]
    %v156 = vld [vmem:[%s0] sm:$0xf]
    %v157 = vld [vmem:[%s0 + $0x4] sm:$0xf]
    %v158 = vld [vmem:[%s0 + $0x8] sm:$0xf]
    %v159 = vld [vmem:[%s0 + $0xc] sm:$0xf]
    %v160 = vld [vmem:[%s0 + $0x10] sm:$0xf]
    %v161 = vld [vmem:[%s0 + $0x14] sm:$0xf]
    %v162 = vld [vmem:[%s0 + $0x18] sm:$0xf]
    %v163 = vld [vmem:[%s0 + $0x1c] sm:$0xf]
    %v180 = vunpack.c.l.b16 %v140
    %v181 = vunpack.c.l.b16 %v141
    %v182 = vunpack.c.l.b16 %v142
    %v183 = vunpack.c.l.b16 %v143
    %v184 = vunpack.c.l.b16 %v144
    %v185 = vunpack.c.l.b16 %v145
    %v186 = vunpack.c.l.b16 %v146
    %v187 = vunpack.c.l.b16 %v147
    %v188 = vunpack.c.l.b16 %v148
    %v189 = vunpack.c.l.b16 %v149
    %v190 = vunpack.c.l.b16 %v150
    %v191 = vunpack.c.l.b16 %v151
    %v192 = vunpack.c.l.b16 %v152
    %v193 = vunpack.c.l.b16 %v153
    %v194 = vunpack.c.l.b16 %v154
    %v195 = vunpack.c.l.b16 %v155
    %v196 = vpack.c.b16 %v181, %v180
    %v197 = vpack.c.b16 %v183, %v182
    %v198 = vpack.c.b16 %v185, %v184
    %v199 = vpack.c.b16 %v187, %v186
    %v200 = vpack.c.b16 %v189, %v188
    %v201 = vpack.c.b16 %v191, %v190
    %v202 = vpack.c.b16 %v193, %v192
    %v203 = vpack.c.b16 %v195, %v194
    %v212 = vunpack.c.l.b16 %v156
    %v213 = vunpack.c.l.b16 %v157
    %v214 = vunpack.c.l.b16 %v158
    %v215 = vunpack.c.l.b16 %v159
    %v216 = vunpack.c.l.b16 %v160
    %v217 = vunpack.c.l.b16 %v161
    %v218 = vunpack.c.l.b16 %v162
    %v219 = vunpack.c.l.b16 %v163
    %v220 = vpack.c.b16 %v213, %v212
    %v221 = vpack.c.b16 %v215, %v214
    %v222 = vpack.c.b16 %v217, %v216
    %v223 = vpack.c.b16 %v219, %v218
    %vm228 = vcmask 523264
    %v230 = vsel %vm228, %v196, 0
    %v233 = vsel %vm228, %v197, 0
    %v236 = vsel %vm228, %v198, 0
    %v239 = vsel %vm228, %v199, 0
    %v242 = vsel %vm228, %v200, 0
    %v245 = vsel %vm228, %v201, 0
    %v248 = vsel %vm228, %v202, 0
    %v251 = vsel %vm228, %v203, 0
    %253 = vmatprep.subr.bf16.mxu0 0
    %254 = vmatpush1.bf16.msra.mxu0 0
    %255 = vmatprep.subr.bf16.mxu0 0
    %256 = vmatpush1.bf16.msra.mxu0 0
    %257 = vmatprep.subr.bf16.mxu0 0
    %258 = vmatpush1.bf16.msra.mxu0 0
    %259 = vmatprep.subr.bf16.mxu0 0
    %260 = vmatpush1.bf16.msra.mxu0 0
    %261 = vmatprep.subr.bf16.mxu0 0
    %262 = vmatpush1.bf16.msra.mxu0 %v223
    %263 = vmatprep.subr.bf16.mxu0 0
    %264 = vmatpush1.bf16.msra.mxu0 %v222
    %265 = vmatprep.subr.bf16.mxu0 0
    %266 = vmatpush1.bf16.msra.mxu0 %v221
    %267 = vmatprep.subr.bf16.mxu0 0
    %268 = vmatpush1.bf16.msra.mxu0 %v220
    %269 = vmatprep.subr.bf16.mxu0 0
    %270 = vmatpush2.bf16.msra.mxu0 0
    %271 = vmatprep.subr.bf16.mxu0 0
    %272 = vmatpush2.bf16.msra.mxu0 0
    %273 = vmatprep.subr.bf16.mxu0 0
    %274 = vmatpush2.bf16.msra.mxu0 0
    %275 = vmatprep.subr.bf16.mxu0 0
    %276 = vmatpush2.bf16.msra.mxu0 0
    %277 = vmatprep.subr.bf16.mxu0 0
    %278 = vmatpush2.bf16.msra.mxu0 0
    %279 = vmatprep.subr.bf16.mxu0 0
    %280 = vmatpush2.bf16.msra.mxu0 0
    %281 = vmatprep.subr.bf16.mxu0 0
    %282 = vmatpush2.bf16.msra.mxu0 0
    %283 = vmatprep.subr.bf16.mxu0 0
    %284 = vmatpush2.bf16.msra.mxu0 0
    %285 = vmatprep.mubr.bf16.mxu0 0
    %286 = vmatmul.mubr.bf16.gmra.mxu0 %v230
    %v287 = vpop.f32.mrf.mxu0
    %v288 = vadd.f32 0.0, %v287
    %v289 = vpop.f32.mrf.mxu0
    %v290 = vpop.f32.mrf.mxu0
    %v291 = vadd.f32 0.0, %v290
    %v292 = vpop.f32.mrf.mxu0
    %293 = vmatprep.mubr.bf16.mxu0 0
    %294 = vmatmul.mubr.bf16.gmra.mxu0 %v233
    %v295 = vpop.f32.mrf.mxu0
    %v296 = vadd.f32 0.0, %v295
    %v297 = vpop.f32.mrf.mxu0
    %v298 = vpop.f32.mrf.mxu0
    %v299 = vadd.f32 0.0, %v298
    %v300 = vpop.f32.mrf.mxu0
    %301 = vmatprep.mubr.bf16.mxu0 0
    %302 = vmatmul.mubr.bf16.gmra.mxu0 %v236
    %v303 = vpop.f32.mrf.mxu0
    %v304 = vadd.f32 0.0, %v303
    %v305 = vpop.f32.mrf.mxu0
    %v306 = vpop.f32.mrf.mxu0
    %v307 = vadd.f32 0.0, %v306
    %v308 = vpop.f32.mrf.mxu0
    %309 = vmatprep.mubr.bf16.mxu0 0
    %310 = vmatmul.mubr.bf16.gmra.mxu0 %v239
    %v311 = vpop.f32.mrf.mxu0
    %v312 = vadd.f32 0.0, %v311
    %v313 = vpop.f32.mrf.mxu0
    %v314 = vpop.f32.mrf.mxu0
    %v315 = vadd.f32 0.0, %v314
    %v316 = vpop.f32.mrf.mxu0
    %317 = vmatprep.mubr.bf16.mxu0 0
    %318 = vmatmul.mubr.bf16.gmra.mxu0 %v242
    %v319 = vpop.f32.mrf.mxu0
    %v320 = vadd.f32 0.0, %v319
    %v321 = vpop.f32.mrf.mxu0
    %v322 = vpop.f32.mrf.mxu0
    %v323 = vadd.f32 0.0, %v322
    %v324 = vpop.f32.mrf.mxu0
    %325 = vmatprep.mubr.bf16.mxu0 0
    %326 = vmatmul.mubr.bf16.gmra.mxu0 %v245
    %v327 = vpop.f32.mrf.mxu0
    %v328 = vadd.f32 0.0, %v327
    %v329 = vpop.f32.mrf.mxu0
    %v330 = vpop.f32.mrf.mxu0
    %v331 = vadd.f32 0.0, %v330
    %v332 = vpop.f32.mrf.mxu0
    %333 = vmatprep.mubr.bf16.mxu0 0
    %334 = vmatmul.mubr.bf16.gmra.mxu0 %v248
    %v335 = vpop.f32.mrf.mxu0
    %v336 = vadd.f32 0.0, %v335
    %v337 = vpop.f32.mrf.mxu0
    %v338 = vpop.f32.mrf.mxu0
    %v339 = vadd.f32 0.0, %v338
    %v340 = vpop.f32.mrf.mxu0
    %341 = vmatprep.mubr.bf16.mxu0 0
    %342 = vmatmul.mubr.bf16.gmra.mxu0 %v251
    %v343 = vpop.f32.mrf.mxu0
    %v344 = vadd.f32 0.0, %v343
    %v345 = vpop.f32.mrf.mxu0
    %v346 = vpop.f32.mrf.mxu0
    %v347 = vadd.f32 0.0, %v346
    %v348 = vpop.f32.mrf.mxu0
    %349 = vdwg.mxu0
    %v350 = vpack.c.bf16 %v291, %v288
    %v351 = vpack.c.bf16 %v299, %v296
    %v352 = vpack.c.bf16 %v307, %v304
    %v353 = vpack.c.bf16 %v315, %v312
    %v354 = vpack.c.bf16 %v323, %v320
    %v355 = vpack.c.bf16 %v331, %v328
    %v356 = vpack.c.bf16 %v339, %v336
    %v357 = vpack.c.bf16 %v347, %v344
    %v358 = vld [vmem:[#allocation3] sm:$0xf]
    %v359 = vld [vmem:[#allocation3 + $0x4] sm:$0xf]
    %v360 = vld [vmem:[#allocation3 + $0x8] sm:$0xf]
    %v361 = vld [vmem:[#allocation3 + $0xc] sm:$0xf]
    %v362 = vld [vmem:[#allocation3 + $0x10] sm:$0xf]
    %v363 = vld [vmem:[#allocation3 + $0x14] sm:$0xf]
    %v364 = vld [vmem:[#allocation3 + $0x18] sm:$0xf]
    %v365 = vld [vmem:[#allocation3 + $0x1c] sm:$0xf]
    %v366 = vld [vmem:[#allocation3 + $0x20] sm:$0xf]
    %v367 = vld [vmem:[#allocation3 + $0x24] sm:$0xf]
    %v368 = vld [vmem:[#allocation3 + $0x28] sm:$0xf]
    %v369 = vld [vmem:[#allocation3 + $0x2c] sm:$0xf]
    %v370 = vld [vmem:[#allocation3 + $0x30] sm:$0xf]
    %v371 = vld [vmem:[#allocation3 + $0x34] sm:$0xf]
    %v372 = vld [vmem:[#allocation3 + $0x38] sm:$0xf]
    %v373 = vld [vmem:[#allocation3 + $0x3c] sm:$0xf]
    %v374 = vld [vmem:[#allocation3 + $0x40] sm:$0xf]
    %v375 = vld [vmem:[#allocation3 + $0x44] sm:$0xf]
    %v376 = vld [vmem:[#allocation3 + $0x48] sm:$0xf]
    %v377 = vld [vmem:[#allocation3 + $0x4c] sm:$0xf]
    %v378 = vld [vmem:[#allocation3 + $0x50] sm:$0xf]
    %v379 = vld [vmem:[#allocation3 + $0x54] sm:$0xf]
    %v380 = vld [vmem:[#allocation3 + $0x58] sm:$0xf]
    %v381 = vld [vmem:[#allocation3 + $0x5c] sm:$0xf]
    %v382 = vld [vmem:[#allocation3 + $0x60] sm:$0xf]
    %v383 = vld [vmem:[#allocation3 + $0x64] sm:$0xf]
    %v384 = vld [vmem:[#allocation3 + $0x68] sm:$0xf]
    %v385 = vld [vmem:[#allocation3 + $0x6c] sm:$0xf]
    %v386 = vld [vmem:[#allocation3 + $0x70] sm:$0xf]
    %v387 = vld [vmem:[#allocation3 + $0x74] sm:$0xf]
    %v388 = vld [vmem:[#allocation3 + $0x78] sm:$0xf]
    %v389 = vld [vmem:[#allocation3 + $0x7c] sm:$0xf]
    %v406 = vunpack.c.l.b16 %v374
    %v407 = vunpack.c.l.b16 %v375
    %v408 = vunpack.c.l.b16 %v376
    %v409 = vunpack.c.l.b16 %v377
    %v410 = vunpack.c.l.b16 %v378
    %v411 = vunpack.c.l.b16 %v379
    %v412 = vunpack.c.l.b16 %v380
    %v413 = vunpack.c.l.b16 %v381
    %v414 = vunpack.c.l.b16 %v382
    %v415 = vunpack.c.l.b16 %v383
    %v416 = vunpack.c.l.b16 %v384
    %v417 = vunpack.c.l.b16 %v385
    %v418 = vunpack.c.l.b16 %v386
    %v419 = vunpack.c.l.b16 %v387
    %v420 = vunpack.c.l.b16 %v388
    %v421 = vunpack.c.l.b16 %v389
    %v422 = vpack.c.b16 %v407, %v406
    %v423 = vpack.c.b16 %v409, %v408
    %v424 = vpack.c.b16 %v411, %v410
    %v425 = vpack.c.b16 %v413, %v412
    %v426 = vpack.c.b16 %v415, %v414
    %v427 = vpack.c.b16 %v417, %v416
    %v428 = vpack.c.b16 %v419, %v418
    %v429 = vpack.c.b16 %v421, %v420
    %438 = vmatprep.subr.bf16.mxu0 0
    %439 = vmatpush1.bf16.msra.mxu0 %v429
    %440 = vmatprep.subr.bf16.mxu0 0
    %441 = vmatpush1.bf16.msra.mxu0 %v428
    %442 = vmatprep.subr.bf16.mxu0 0
    %443 = vmatpush1.bf16.msra.mxu0 %v427
    %444 = vmatprep.subr.bf16.mxu0 0
    %445 = vmatpush1.bf16.msra.mxu0 %v426
    %446 = vmatprep.subr.bf16.mxu0 0
    %447 = vmatpush1.bf16.msra.mxu0 %v425
    %448 = vmatprep.subr.bf16.mxu0 0
    %449 = vmatpush1.bf16.msra.mxu0 %v424
    %450 = vmatprep.subr.bf16.mxu0 0
    %451 = vmatpush1.bf16.msra.mxu0 %v423
    %452 = vmatprep.subr.bf16.mxu0 0
    %453 = vmatpush1.bf16.msra.mxu0 %v422
    %454 = vmatprep.subr.bf16.mxu0 0
    %455 = vmatpush2.bf16.msra.mxu0 0
    %456 = vmatprep.subr.bf16.mxu0 0
    %457 = vmatpush2.bf16.msra.mxu0 0
    %458 = vmatprep.subr.bf16.mxu0 0
    %459 = vmatpush2.bf16.msra.mxu0 0
    %460 = vmatprep.subr.bf16.mxu0 0
    %461 = vmatpush2.bf16.msra.mxu0 0
    %462 = vmatprep.subr.bf16.mxu0 0
    %463 = vmatpush2.bf16.msra.mxu0 0
    %464 = vmatprep.subr.bf16.mxu0 0
    %465 = vmatpush2.bf16.msra.mxu0 0
    %466 = vmatprep.subr.bf16.mxu0 0
    %467 = vmatpush2.bf16.msra.mxu0 0
    %468 = vmatprep.subr.bf16.mxu0 0
    %469 = vmatpush2.bf16.msra.mxu0 0
    %470 = vmatprep.mubr.bf16.mxu0 0
    %471 = vmatmul.mubr.bf16.gmra.mxu0 %v351
    %v472 = vpop.f32.mrf.mxu0
    %v473 = vadd.f32 0.0, %v472
    %v474 = vpop.f32.mrf.mxu0
    %v475 = vpop.f32.mrf.mxu0
    %v476 = vadd.f32 0.0, %v475
    %v477 = vpop.f32.mrf.mxu0
    %478 = vdwg.mxu0
    %v495 = vunpack.c.l.b16 %v358
    %v496 = vunpack.c.l.b16 %v359
    %v497 = vunpack.c.l.b16 %v360
    %v498 = vunpack.c.l.b16 %v361
    %v499 = vunpack.c.l.b16 %v362
    %v500 = vunpack.c.l.b16 %v363
    %v501 = vunpack.c.l.b16 %v364
    %v502 = vunpack.c.l.b16 %v365
    %v503 = vunpack.c.l.b16 %v366
    %v504 = vunpack.c.l.b16 %v367
    %v505 = vunpack.c.l.b16 %v368
    %v506 = vunpack.c.l.b16 %v369
    %v507 = vunpack.c.l.b16 %v370
    %v508 = vunpack.c.l.b16 %v371
    %v509 = vunpack.c.l.b16 %v372
    %v510 = vunpack.c.l.b16 %v373
    %v511 = vpack.c.b16 %v496, %v495
    %v512 = vpack.c.b16 %v498, %v497
    %v513 = vpack.c.b16 %v500, %v499
    %v514 = vpack.c.b16 %v502, %v501
    %v515 = vpack.c.b16 %v504, %v503
    %v516 = vpack.c.b16 %v506, %v505
    %v517 = vpack.c.b16 %v508, %v507
    %v518 = vpack.c.b16 %v510, %v509
    %527 = vmatprep.subr.bf16.mxu0 0
    %528 = vmatpush1.bf16.msra.mxu0 %v518
    %529 = vmatprep.subr.bf16.mxu0 0
    %530 = vmatpush1.bf16.msra.mxu0 %v517
    %531 = vmatprep.subr.bf16.mxu0 0
    %532 = vmatpush1.bf16.msra.mxu0 %v516
    %533 = vmatprep.subr.bf16.mxu0 0
    %534 = vmatpush1.bf16.msra.mxu0 %v515
    %535 = vmatprep.subr.bf16.mxu0 0
    %536 = vmatpush1.bf16.msra.mxu0 %v514
    %537 = vmatprep.subr.bf16.mxu0 0
    %538 = vmatpush1.bf16.msra.mxu0 %v513
    %539 = vmatprep.subr.bf16.mxu0 0
    %540 = vmatpush1.bf16.msra.mxu0 %v512
    %541 = vmatprep.subr.bf16.mxu0 0
    %542 = vmatpush1.bf16.msra.mxu0 %v511
    %543 = vmatprep.subr.bf16.mxu0 0
    %544 = vmatpush2.bf16.msra.mxu0 0
    %545 = vmatprep.subr.bf16.mxu0 0
    %546 = vmatpush2.bf16.msra.mxu0 0
    %547 = vmatprep.subr.bf16.mxu0 0
    %548 = vmatpush2.bf16.msra.mxu0 0
    %549 = vmatprep.subr.bf16.mxu0 0
    %550 = vmatpush2.bf16.msra.mxu0 0
    %551 = vmatprep.subr.bf16.mxu0 0
    %552 = vmatpush2.bf16.msra.mxu0 0
    %553 = vmatprep.subr.bf16.mxu0 0
    %554 = vmatpush2.bf16.msra.mxu0 0
    %555 = vmatprep.subr.bf16.mxu0 0
    %556 = vmatpush2.bf16.msra.mxu0 0
    %557 = vmatprep.subr.bf16.mxu0 0
    %558 = vmatpush2.bf16.msra.mxu0 0
    %559 = vmatprep.mubr.bf16.mxu0 0
    %560 = vmatmul.mubr.bf16.gmra.mxu0 %v350
    %v561 = vpop.f32.mrf.mxu0
    %v562 = vadd.f32 %v473, %v561
    %v563 = vpop.f32.mrf.mxu0
    %v564 = vpop.f32.mrf.mxu0
    %v565 = vadd.f32 %v476, %v564
    %v566 = vpop.f32.mrf.mxu0
    %567 = vdwg.mxu0
    %v568 = vld [vmem:[#allocation3 + $0x80] sm:$0xf]
    %v569 = vld [vmem:[#allocation3 + $0x84] sm:$0xf]
    %v570 = vld [vmem:[#allocation3 + $0x88] sm:$0xf]
    %v571 = vld [vmem:[#allocation3 + $0x8c] sm:$0xf]
    %v572 = vld [vmem:[#allocation3 + $0x90] sm:$0xf]
    %v573 = vld [vmem:[#allocation3 + $0x94] sm:$0xf]
    %v574 = vld [vmem:[#allocation3 + $0x98] sm:$0xf]
    %v575 = vld [vmem:[#allocation3 + $0x9c] sm:$0xf]
    %v576 = vld [vmem:[#allocation3 + $0xa0] sm:$0xf]
    %v577 = vld [vmem:[#allocation3 + $0xa4] sm:$0xf]
    %v578 = vld [vmem:[#allocation3 + $0xa8] sm:$0xf]
    %v579 = vld [vmem:[#allocation3 + $0xac] sm:$0xf]
    %v580 = vld [vmem:[#allocation3 + $0xb0] sm:$0xf]
    %v581 = vld [vmem:[#allocation3 + $0xb4] sm:$0xf]
    %v582 = vld [vmem:[#allocation3 + $0xb8] sm:$0xf]
    %v583 = vld [vmem:[#allocation3 + $0xbc] sm:$0xf]
    %v600 = vunpack.c.l.b16 %v568
    %v601 = vunpack.c.l.b16 %v569
    %v602 = vunpack.c.l.b16 %v570
    %v603 = vunpack.c.l.b16 %v571
    %v604 = vunpack.c.l.b16 %v572
    %v605 = vunpack.c.l.b16 %v573
    %v606 = vunpack.c.l.b16 %v574
    %v607 = vunpack.c.l.b16 %v575
    %v608 = vunpack.c.l.b16 %v576
    %v609 = vunpack.c.l.b16 %v577
    %v610 = vunpack.c.l.b16 %v578
    %v611 = vunpack.c.l.b16 %v579
    %v612 = vunpack.c.l.b16 %v580
    %v613 = vunpack.c.l.b16 %v581
    %v614 = vunpack.c.l.b16 %v582
    %v615 = vunpack.c.l.b16 %v583
    %v616 = vpack.c.b16 %v601, %v600
    %v617 = vpack.c.b16 %v603, %v602
    %v618 = vpack.c.b16 %v605, %v604
    %v619 = vpack.c.b16 %v607, %v606
    %v620 = vpack.c.b16 %v609, %v608
    %v621 = vpack.c.b16 %v611, %v610
    %v622 = vpack.c.b16 %v613, %v612
    %v623 = vpack.c.b16 %v615, %v614
    %632 = vmatprep.subr.bf16.mxu0 0
    %633 = vmatpush1.bf16.msra.mxu0 %v623
    %634 = vmatprep.subr.bf16.mxu0 0
    %635 = vmatpush1.bf16.msra.mxu0 %v622
    %636 = vmatprep.subr.bf16.mxu0 0
    %637 = vmatpush1.bf16.msra.mxu0 %v621
    %638 = vmatprep.subr.bf16.mxu0 0
    %639 = vmatpush1.bf16.msra.mxu0 %v620
    %640 = vmatprep.subr.bf16.mxu0 0
    %641 = vmatpush1.bf16.msra.mxu0 %v619
    %642 = vmatprep.subr.bf16.mxu0 0
    %643 = vmatpush1.bf16.msra.mxu0 %v618
    %644 = vmatprep.subr.bf16.mxu0 0
    %645 = vmatpush1.bf16.msra.mxu0 %v617
    %646 = vmatprep.subr.bf16.mxu0 0
    %647 = vmatpush1.bf16.msra.mxu0 %v616
    %648 = vmatprep.subr.bf16.mxu0 0
    %649 = vmatpush2.bf16.msra.mxu0 0
    %650 = vmatprep.subr.bf16.mxu0 0
    %651 = vmatpush2.bf16.msra.mxu0 0
    %652 = vmatprep.subr.bf16.mxu0 0
    %653 = vmatpush2.bf16.msra.mxu0 0
    %654 = vmatprep.subr.bf16.mxu0 0
    %655 = vmatpush2.bf16.msra.mxu0 0
    %656 = vmatprep.subr.bf16.mxu0 0
    %657 = vmatpush2.bf16.msra.mxu0 0
    %658 = vmatprep.subr.bf16.mxu0 0
    %659 = vmatpush2.bf16.msra.mxu0 0
    %660 = vmatprep.subr.bf16.mxu0 0
    %661 = vmatpush2.bf16.msra.mxu0 0
    %662 = vmatprep.subr.bf16.mxu0 0
    %663 = vmatpush2.bf16.msra.mxu0 0
    %664 = vmatprep.mubr.bf16.mxu0 0
    %665 = vmatmul.mubr.bf16.gmra.mxu0 %v352
    %v666 = vpop.f32.mrf.mxu0
    %v667 = vadd.f32 0.0, %v666
    %v668 = vpop.f32.mrf.mxu0
    %v669 = vpop.f32.mrf.mxu0
    %v670 = vadd.f32 0.0, %v669
    %v671 = vpop.f32.mrf.mxu0
    %672 = vdwg.mxu0
    %v673 = vadd.f32 %v562, %v667
    %v674 = vadd.f32 %v565, %v670
    %v675 = vld [vmem:[#allocation3 + $0xc0] sm:$0xf]
    %v676 = vld [vmem:[#allocation3 + $0xc4] sm:$0xf]
    %v677 = vld [vmem:[#allocation3 + $0xc8] sm:$0xf]
    %v678 = vld [vmem:[#allocation3 + $0xcc] sm:$0xf]
    %v679 = vld [vmem:[#allocation3 + $0xd0] sm:$0xf]
    %v680 = vld [vmem:[#allocation3 + $0xd4] sm:$0xf]
    %v681 = vld [vmem:[#allocation3 + $0xd8] sm:$0xf]
    %v682 = vld [vmem:[#allocation3 + $0xdc] sm:$0xf]
    %v683 = vld [vmem:[#allocation3 + $0xe0] sm:$0xf]
    %v684 = vld [vmem:[#allocation3 + $0xe4] sm:$0xf]
    %v685 = vld [vmem:[#allocation3 + $0xe8] sm:$0xf]
    %v686 = vld [vmem:[#allocation3 + $0xec] sm:$0xf]
    %v687 = vld [vmem:[#allocation3 + $0xf0] sm:$0xf]
    %v688 = vld [vmem:[#allocation3 + $0xf4] sm:$0xf]
    %v689 = vld [vmem:[#allocation3 + $0xf8] sm:$0xf]
    %v690 = vld [vmem:[#allocation3 + $0xfc] sm:$0xf]
    %v707 = vunpack.c.l.b16 %v675
    %v708 = vunpack.c.l.b16 %v676
    %v709 = vunpack.c.l.b16 %v677
    %v710 = vunpack.c.l.b16 %v678
    %v711 = vunpack.c.l.b16 %v679
    %v712 = vunpack.c.l.b16 %v680
    %v713 = vunpack.c.l.b16 %v681
    %v714 = vunpack.c.l.b16 %v682
    %v715 = vunpack.c.l.b16 %v683
    %v716 = vunpack.c.l.b16 %v684
    %v717 = vunpack.c.l.b16 %v685
    %v718 = vunpack.c.l.b16 %v686
    %v719 = vunpack.c.l.b16 %v687
    %v720 = vunpack.c.l.b16 %v688
    %v721 = vunpack.c.l.b16 %v689
    %v722 = vunpack.c.l.b16 %v690
    %v723 = vpack.c.b16 %v708, %v707
    %v724 = vpack.c.b16 %v710, %v709
    %v725 = vpack.c.b16 %v712, %v711
    %v726 = vpack.c.b16 %v714, %v713
    %v727 = vpack.c.b16 %v716, %v715
    %v728 = vpack.c.b16 %v718, %v717
    %v729 = vpack.c.b16 %v720, %v719
    %v730 = vpack.c.b16 %v722, %v721
    %739 = vmatprep.subr.bf16.mxu0 0
    %740 = vmatpush1.bf16.msra.mxu0 %v730
    %741 = vmatprep.subr.bf16.mxu0 0
    %742 = vmatpush1.bf16.msra.mxu0 %v729
    %743 = vmatprep.subr.bf16.mxu0 0
    %744 = vmatpush1.bf16.msra.mxu0 %v728
    %745 = vmatprep.subr.bf16.mxu0 0
    %746 = vmatpush1.bf16.msra.mxu0 %v727
    %747 = vmatprep.subr.bf16.mxu0 0
    %748 = vmatpush1.bf16.msra.mxu0 %v726
    %749 = vmatprep.subr.bf16.mxu0 0
    %750 = vmatpush1.bf16.msra.mxu0 %v725
    %751 = vmatprep.subr.bf16.mxu0 0
    %752 = vmatpush1.bf16.msra.mxu0 %v724
    %753 = vmatprep.subr.bf16.mxu0 0
    %754 = vmatpush1.bf16.msra.mxu0 %v723
    %755 = vmatprep.subr.bf16.mxu0 0
    %756 = vmatpush2.bf16.msra.mxu0 0
    %757 = vmatprep.subr.bf16.mxu0 0
    %758 = vmatpush2.bf16.msra.mxu0 0
    %759 = vmatprep.subr.bf16.mxu0 0
    %760 = vmatpush2.bf16.msra.mxu0 0
    %761 = vmatprep.subr.bf16.mxu0 0
    %762 = vmatpush2.bf16.msra.mxu0 0
    %763 = vmatprep.subr.bf16.mxu0 0
    %764 = vmatpush2.bf16.msra.mxu0 0
    %765 = vmatprep.subr.bf16.mxu0 0
    %766 = vmatpush2.bf16.msra.mxu0 0
    %767 = vmatprep.subr.bf16.mxu0 0
    %768 = vmatpush2.bf16.msra.mxu0 0
    %769 = vmatprep.subr.bf16.mxu0 0
    %770 = vmatpush2.bf16.msra.mxu0 0
    %771 = vmatprep.mubr.bf16.mxu0 0
    %772 = vmatmul.mubr.bf16.gmra.mxu0 %v353
    %v773 = vpop.f32.mrf.mxu0
    %v774 = vadd.f32 0.0, %v773
    %v775 = vpop.f32.mrf.mxu0
    %v776 = vpop.f32.mrf.mxu0
    %v777 = vadd.f32 0.0, %v776
    %v778 = vpop.f32.mrf.mxu0
    %779 = vdwg.mxu0
    %v780 = vadd.f32 %v673, %v774
    %v781 = vadd.f32 %v674, %v777
    %v782 = vld [vmem:[#allocation3 + $0x100] sm:$0xf]
    %v783 = vld [vmem:[#allocation3 + $0x104] sm:$0xf]
    %v784 = vld [vmem:[#allocation3 + $0x108] sm:$0xf]
    %v785 = vld [vmem:[#allocation3 + $0x10c] sm:$0xf]
    %v786 = vld [vmem:[#allocation3 + $0x110] sm:$0xf]
    %v787 = vld [vmem:[#allocation3 + $0x114] sm:$0xf]
    %v788 = vld [vmem:[#allocation3 + $0x118] sm:$0xf]
    %v789 = vld [vmem:[#allocation3 + $0x11c] sm:$0xf]
    %v790 = vld [vmem:[#allocation3 + $0x120] sm:$0xf]
    %v791 = vld [vmem:[#allocation3 + $0x124] sm:$0xf]
    %v792 = vld [vmem:[#allocation3 + $0x128] sm:$0xf]
    %v793 = vld [vmem:[#allocation3 + $0x12c] sm:$0xf]
    %v794 = vld [vmem:[#allocation3 + $0x130] sm:$0xf]
    %v795 = vld [vmem:[#allocation3 + $0x134] sm:$0xf]
    %v796 = vld [vmem:[#allocation3 + $0x138] sm:$0xf]
    %v797 = vld [vmem:[#allocation3 + $0x13c] sm:$0xf]
    %v814 = vunpack.c.l.b16 %v782
    %v815 = vunpack.c.l.b16 %v783
    %v816 = vunpack.c.l.b16 %v784
    %v817 = vunpack.c.l.b16 %v785
    %v818 = vunpack.c.l.b16 %v786
    %v819 = vunpack.c.l.b16 %v787
    %v820 = vunpack.c.l.b16 %v788
    %v821 = vunpack.c.l.b16 %v789
    %v822 = vunpack.c.l.b16 %v790
    %v823 = vunpack.c.l.b16 %v791
    %v824 = vunpack.c.l.b16 %v792
    %v825 = vunpack.c.l.b16 %v793
    %v826 = vunpack.c.l.b16 %v794
    %v827 = vunpack.c.l.b16 %v795
    %v828 = vunpack.c.l.b16 %v796
    %v829 = vunpack.c.l.b16 %v797
    %v830 = vpack.c.b16 %v815, %v814
    %v831 = vpack.c.b16 %v817, %v816
    %v832 = vpack.c.b16 %v819, %v818
    %v833 = vpack.c.b16 %v821, %v820
    %v834 = vpack.c.b16 %v823, %v822
    %v835 = vpack.c.b16 %v825, %v824
    %v836 = vpack.c.b16 %v827, %v826
    %v837 = vpack.c.b16 %v829, %v828
    %846 = vmatprep.subr.bf16.mxu0 0
    %847 = vmatpush1.bf16.msra.mxu0 %v837
    %848 = vmatprep.subr.bf16.mxu0 0
    %849 = vmatpush1.bf16.msra.mxu0 %v836
    %850 = vmatprep.subr.bf16.mxu0 0
    %851 = vmatpush1.bf16.msra.mxu0 %v835
    %852 = vmatprep.subr.bf16.mxu0 0
    %853 = vmatpush1.bf16.msra.mxu0 %v834
    %854 = vmatprep.subr.bf16.mxu0 0
    %855 = vmatpush1.bf16.msra.mxu0 %v833
    %856 = vmatprep.subr.bf16.mxu0 0
    %857 = vmatpush1.bf16.msra.mxu0 %v832
    %858 = vmatprep.subr.bf16.mxu0 0
    %859 = vmatpush1.bf16.msra.mxu0 %v831
    %860 = vmatprep.subr.bf16.mxu0 0
    %861 = vmatpush1.bf16.msra.mxu0 %v830
    %862 = vmatprep.subr.bf16.mxu0 0
    %863 = vmatpush2.bf16.msra.mxu0 0
    %864 = vmatprep.subr.bf16.mxu0 0
    %865 = vmatpush2.bf16.msra.mxu0 0
    %866 = vmatprep.subr.bf16.mxu0 0
    %867 = vmatpush2.bf16.msra.mxu0 0
    %868 = vmatprep.subr.bf16.mxu0 0
    %869 = vmatpush2.bf16.msra.mxu0 0
    %870 = vmatprep.subr.bf16.mxu0 0
    %871 = vmatpush2.bf16.msra.mxu0 0
    %872 = vmatprep.subr.bf16.mxu0 0
    %873 = vmatpush2.bf16.msra.mxu0 0
    %874 = vmatprep.subr.bf16.mxu0 0
    %875 = vmatpush2.bf16.msra.mxu0 0
    %876 = vmatprep.subr.bf16.mxu0 0
    %877 = vmatpush2.bf16.msra.mxu0 0
    %878 = vmatprep.mubr.bf16.mxu0 0
    %879 = vmatmul.mubr.bf16.gmra.mxu0 %v354
    %v880 = vpop.f32.mrf.mxu0
    %v881 = vadd.f32 0.0, %v880
    %v882 = vpop.f32.mrf.mxu0
    %v883 = vpop.f32.mrf.mxu0
    %v884 = vadd.f32 0.0, %v883
    %v885 = vpop.f32.mrf.mxu0
    %886 = vdwg.mxu0
    %v887 = vadd.f32 %v780, %v881
    %v888 = vadd.f32 %v781, %v884
    %v889 = vld [vmem:[#allocation3 + $0x140] sm:$0xf]
    %v890 = vld [vmem:[#allocation3 + $0x144] sm:$0xf]
    %v891 = vld [vmem:[#allocation3 + $0x148] sm:$0xf]
    %v892 = vld [vmem:[#allocation3 + $0x14c] sm:$0xf]
    %v893 = vld [vmem:[#allocation3 + $0x150] sm:$0xf]
    %v894 = vld [vmem:[#allocation3 + $0x154] sm:$0xf]
    %v895 = vld [vmem:[#allocation3 + $0x158] sm:$0xf]
    %v896 = vld [vmem:[#allocation3 + $0x15c] sm:$0xf]
    %v897 = vld [vmem:[#allocation3 + $0x160] sm:$0xf]
    %v898 = vld [vmem:[#allocation3 + $0x164] sm:$0xf]
    %v899 = vld [vmem:[#allocation3 + $0x168] sm:$0xf]
    %v900 = vld [vmem:[#allocation3 + $0x16c] sm:$0xf]
    %v901 = vld [vmem:[#allocation3 + $0x170] sm:$0xf]
    %v902 = vld [vmem:[#allocation3 + $0x174] sm:$0xf]
    %v903 = vld [vmem:[#allocation3 + $0x178] sm:$0xf]
    %v904 = vld [vmem:[#allocation3 + $0x17c] sm:$0xf]
    %v921 = vunpack.c.l.b16 %v889
    %v922 = vunpack.c.l.b16 %v890
    %v923 = vunpack.c.l.b16 %v891
    %v924 = vunpack.c.l.b16 %v892
    %v925 = vunpack.c.l.b16 %v893
    %v926 = vunpack.c.l.b16 %v894
    %v927 = vunpack.c.l.b16 %v895
    %v928 = vunpack.c.l.b16 %v896
    %v929 = vunpack.c.l.b16 %v897
    %v930 = vunpack.c.l.b16 %v898
    %v931 = vunpack.c.l.b16 %v899
    %v932 = vunpack.c.l.b16 %v900
    %v933 = vunpack.c.l.b16 %v901
    %v934 = vunpack.c.l.b16 %v902
    %v935 = vunpack.c.l.b16 %v903
    %v936 = vunpack.c.l.b16 %v904
    %v937 = vpack.c.b16 %v922, %v921
    %v938 = vpack.c.b16 %v924, %v923
    %v939 = vpack.c.b16 %v926, %v925
    %v940 = vpack.c.b16 %v928, %v927
    %v941 = vpack.c.b16 %v930, %v929
    %v942 = vpack.c.b16 %v932, %v931
    %v943 = vpack.c.b16 %v934, %v933
    %v944 = vpack.c.b16 %v936, %v935
    %953 = vmatprep.subr.bf16.mxu0 0
    %954 = vmatpush1.bf16.msra.mxu0 %v944
    %955 = vmatprep.subr.bf16.mxu0 0
    %956 = vmatpush1.bf16.msra.mxu0 %v943
    %957 = vmatprep.subr.bf16.mxu0 0
    %958 = vmatpush1.bf16.msra.mxu0 %v942
    %959 = vmatprep.subr.bf16.mxu0 0
    %960 = vmatpush1.bf16.msra.mxu0 %v941
    %961 = vmatprep.subr.bf16.mxu0 0
    %962 = vmatpush1.bf16.msra.mxu0 %v940
    %963 = vmatprep.subr.bf16.mxu0 0
    %964 = vmatpush1.bf16.msra.mxu0 %v939
    %965 = vmatprep.subr.bf16.mxu0 0
    %966 = vmatpush1.bf16.msra.mxu0 %v938
    %967 = vmatprep.subr.bf16.mxu0 0
    %968 = vmatpush1.bf16.msra.mxu0 %v937
    %969 = vmatprep.subr.bf16.mxu0 0
    %970 = vmatpush2.bf16.msra.mxu0 0
    %971 = vmatprep.subr.bf16.mxu0 0
    %972 = vmatpush2.bf16.msra.mxu0 0
    %973 = vmatprep.subr.bf16.mxu0 0
    %974 = vmatpush2.bf16.msra.mxu0 0
    %975 = vmatprep.subr.bf16.mxu0 0
    %976 = vmatpush2.bf16.msra.mxu0 0
    %977 = vmatprep.subr.bf16.mxu0 0
    %978 = vmatpush2.bf16.msra.mxu0 0
    %979 = vmatprep.subr.bf16.mxu0 0
    %980 = vmatpush2.bf16.msra.mxu0 0
    %981 = vmatprep.subr.bf16.mxu0 0
    %982 = vmatpush2.bf16.msra.mxu0 0
    %983 = vmatprep.subr.bf16.mxu0 0
    %984 = vmatpush2.bf16.msra.mxu0 0
    %985 = vmatprep.mubr.bf16.mxu0 0
    %986 = vmatmul.mubr.bf16.gmra.mxu0 %v220
    %v987 = vpop.f32.mrf.mxu0
    %v988 = vadd.f32 0.0, %v987
    %v989 = vpop.f32.mrf.mxu0
    %v990 = vpop.f32.mrf.mxu0
    %v991 = vadd.f32 0.0, %v990
    %v992 = vpop.f32.mrf.mxu0
    %993 = vdwg.mxu0
    %v994 = vadd.f32 %v887, %v988
    %v995 = vadd.f32 %v888, %v991
    %v996 = vld [vmem:[%s10] sm:$0x1]
    %v997 = vlaneseq
    %v998 = vshrl.u32 %v997, 7
    %v999 = vsub.s32 0, %v998
    %v1000 = vrot.slane %v996, %v999
    %v1001 = vadd.f32 %v994, %v1000
    %v1002 = vadd.f32 %v995, %v1000
    %v1003 = vmax.f32 %v1001, 0.0
    %v1004 = vmax.f32 %v1002, 0.0
    %v1005 = vpack.c.bf16 %v1004, %v1003
    %v1007 = vunpack.c.l.b16 %v1005
    %v1008 = vunpack.c.h.b16 %v1005
    %v1009 = vpack.c.b16 %v1007, %v1007
    %v1010 = vpack.c.b16 %v1008, %v1008
    %1013 = vst [vmem:[#allocation2] sm:$0xf] %v1009
    %1014 = vst [vmem:[#allocation2 + $0x4] sm:$0xf] %v1010
    %v1015 = vld [vmem:[%s3] sm:$0xf]
    %v1016 = vld [vmem:[%s3 + $0x4] sm:$0xf]
    %v1017 = vld [vmem:[%s3 + $0x8] sm:$0xf]
    %v1018 = vld [vmem:[%s3 + $0xc] sm:$0xf]
    %v1019 = vld [vmem:[%s3 + $0x10] sm:$0xf]
    %v1020 = vld [vmem:[%s3 + $0x14] sm:$0xf]
    %v1021 = vld [vmem:[%s3 + $0x18] sm:$0xf]
    %v1022 = vld [vmem:[%s3 + $0x1c] sm:$0xf]
    %v1023 = vld [vmem:[%s3 + $0x20] sm:$0xf]
    %v1024 = vld [vmem:[%s3 + $0x24] sm:$0xf]
    %v1025 = vld [vmem:[%s3 + $0x28] sm:$0xf]
    %v1026 = vld [vmem:[%s3 + $0x2c] sm:$0xf]
    %v1027 = vld [vmem:[%s3 + $0x30] sm:$0xf]
    %v1028 = vld [vmem:[%s3 + $0x34] sm:$0xf]
    %v1029 = vld [vmem:[%s3 + $0x38] sm:$0xf]
    %v1030 = vld [vmem:[%s3 + $0x3c] sm:$0xf]
    %v1031 = vld [vmem:[%s3 + $0x40] sm:$0xf]
    %v1032 = vld [vmem:[%s3 + $0x44] sm:$0xf]
    %v1033 = vld [vmem:[%s3 + $0x48] sm:$0xf]
    %v1034 = vld [vmem:[%s3 + $0x4c] sm:$0xf]
    %v1035 = vld [vmem:[%s3 + $0x50] sm:$0xf]
    %v1036 = vld [vmem:[%s3 + $0x54] sm:$0xf]
    %v1037 = vld [vmem:[%s3 + $0x58] sm:$0xf]
    %v1038 = vld [vmem:[%s3 + $0x5c] sm:$0xf]
    %v1039 = vld [vmem:[%s3 + $0x60] sm:$0xf]
    %v1040 = vld [vmem:[%s3 + $0x64] sm:$0xf]
    %v1041 = vld [vmem:[%s3 + $0x68] sm:$0xf]
    %v1042 = vld [vmem:[%s3 + $0x6c] sm:$0xf]
    %v1043 = vld [vmem:[%s3 + $0x70] sm:$0xf]
    %v1044 = vld [vmem:[%s3 + $0x74] sm:$0xf]
    %v1045 = vld [vmem:[%s3 + $0x78] sm:$0xf]
    %v1046 = vld [vmem:[%s3 + $0x7c] sm:$0xf]
    %v1063 = vunpack.c.l.b16 %v1031
    %v1064 = vunpack.c.l.b16 %v1032
    %v1065 = vunpack.c.l.b16 %v1033
    %v1066 = vunpack.c.l.b16 %v1034
    %v1067 = vunpack.c.l.b16 %v1035
    %v1068 = vunpack.c.l.b16 %v1036
    %v1069 = vunpack.c.l.b16 %v1037
    %v1070 = vunpack.c.l.b16 %v1038
    %v1071 = vunpack.c.l.b16 %v1039
    %v1072 = vunpack.c.l.b16 %v1040
    %v1073 = vunpack.c.l.b16 %v1041
    %v1074 = vunpack.c.l.b16 %v1042
    %v1075 = vunpack.c.l.b16 %v1043
    %v1076 = vunpack.c.l.b16 %v1044
    %v1077 = vunpack.c.l.b16 %v1045
    %v1078 = vunpack.c.l.b16 %v1046
    %v1079 = vpack.c.b16 %v1064, %v1063
    %v1080 = vpack.c.b16 %v1066, %v1065
    %v1081 = vpack.c.b16 %v1068, %v1067
    %v1082 = vpack.c.b16 %v1070, %v1069
    %v1083 = vpack.c.b16 %v1072, %v1071
    %v1084 = vpack.c.b16 %v1074, %v1073
    %v1085 = vpack.c.b16 %v1076, %v1075
    %v1086 = vpack.c.b16 %v1078, %v1077
    %1095 = vmatprep.subr.bf16.mxu0 0
    %1096 = vmatpush1.bf16.msra.mxu0 %v1086
    %1097 = vmatprep.subr.bf16.mxu0 0
    %1098 = vmatpush1.bf16.msra.mxu0 %v1085
    %1099 = vmatprep.subr.bf16.mxu0 0
    %1100 = vmatpush1.bf16.msra.mxu0 %v1084
    %1101 = vmatprep.subr.bf16.mxu0 0
    %1102 = vmatpush1.bf16.msra.mxu0 %v1083
    %1103 = vmatprep.subr.bf16.mxu0 0
    %1104 = vmatpush1.bf16.msra.mxu0 %v1082
    %1105 = vmatprep.subr.bf16.mxu0 0
    %1106 = vmatpush1.bf16.msra.mxu0 %v1081
    %1107 = vmatprep.subr.bf16.mxu0 0
    %1108 = vmatpush1.bf16.msra.mxu0 %v1080
    %1109 = vmatprep.subr.bf16.mxu0 0
    %1110 = vmatpush1.bf16.msra.mxu0 %v1079
    %1111 = vmatprep.subr.bf16.mxu0 0
    %1112 = vmatpush2.bf16.msra.mxu0 0
    %1113 = vmatprep.subr.bf16.mxu0 0
    %1114 = vmatpush2.bf16.msra.mxu0 0
    %1115 = vmatprep.subr.bf16.mxu0 0
    %1116 = vmatpush2.bf16.msra.mxu0 0
    %1117 = vmatprep.subr.bf16.mxu0 0
    %1118 = vmatpush2.bf16.msra.mxu0 0
    %1119 = vmatprep.subr.bf16.mxu0 0
    %1120 = vmatpush2.bf16.msra.mxu0 0
    %1121 = vmatprep.subr.bf16.mxu0 0
    %1122 = vmatpush2.bf16.msra.mxu0 0
    %1123 = vmatprep.subr.bf16.mxu0 0
    %1124 = vmatpush2.bf16.msra.mxu0 0
    %1125 = vmatprep.subr.bf16.mxu0 0
    %1126 = vmatpush2.bf16.msra.mxu0 0
    %1127 = vmatprep.mubr.bf16.mxu0 0
    %1128 = vmatmul.mubr.bf16.gmra.mxu0 %v221
    %v1129 = vpop.f32.mrf.mxu0
    %v1130 = vadd.f32 0.0, %v1129
    %v1131 = vpop.f32.mrf.mxu0
    %v1132 = vpop.f32.mrf.mxu0
    %v1133 = vadd.f32 0.0, %v1132
    %v1134 = vpop.f32.mrf.mxu0
    %1135 = vdwg.mxu0
    %v1152 = vunpack.c.l.b16 %v1015
    %v1153 = vunpack.c.l.b16 %v1016
    %v1154 = vunpack.c.l.b16 %v1017
    %v1155 = vunpack.c.l.b16 %v1018
    %v1156 = vunpack.c.l.b16 %v1019
    %v1157 = vunpack.c.l.b16 %v1020
    %v1158 = vunpack.c.l.b16 %v1021
    %v1159 = vunpack.c.l.b16 %v1022
    %v1160 = vunpack.c.l.b16 %v1023
    %v1161 = vunpack.c.l.b16 %v1024
    %v1162 = vunpack.c.l.b16 %v1025
    %v1163 = vunpack.c.l.b16 %v1026
    %v1164 = vunpack.c.l.b16 %v1027
    %v1165 = vunpack.c.l.b16 %v1028
    %v1166 = vunpack.c.l.b16 %v1029
    %v1167 = vunpack.c.l.b16 %v1030
    %v1168 = vpack.c.b16 %v1153, %v1152
    %v1169 = vpack.c.b16 %v1155, %v1154
    %v1170 = vpack.c.b16 %v1157, %v1156
    %v1171 = vpack.c.b16 %v1159, %v1158
    %v1172 = vpack.c.b16 %v1161, %v1160
    %v1173 = vpack.c.b16 %v1163, %v1162
    %v1174 = vpack.c.b16 %v1165, %v1164
    %v1175 = vpack.c.b16 %v1167, %v1166
    %1184 = vmatprep.subr.bf16.mxu0 0
    %1185 = vmatpush1.bf16.msra.mxu0 %v1175
    %1186 = vmatprep.subr.bf16.mxu0 0
    %1187 = vmatpush1.bf16.msra.mxu0 %v1174
    %1188 = vmatprep.subr.bf16.mxu0 0
    %1189 = vmatpush1.bf16.msra.mxu0 %v1173
    %1190 = vmatprep.subr.bf16.mxu0 0
    %1191 = vmatpush1.bf16.msra.mxu0 %v1172
    %1192 = vmatprep.subr.bf16.mxu0 0
    %1193 = vmatpush1.bf16.msra.mxu0 %v1171
    %1194 = vmatprep.subr.bf16.mxu0 0
    %1195 = vmatpush1.bf16.msra.mxu0 %v1170
    %1196 = vmatprep.subr.bf16.mxu0 0
    %1197 = vmatpush1.bf16.msra.mxu0 %v1169
    %1198 = vmatprep.subr.bf16.mxu0 0
    %1199 = vmatpush1.bf16.msra.mxu0 %v1168
    %1200 = vmatprep.subr.bf16.mxu0 0
    %1201 = vmatpush2.bf16.msra.mxu0 0
    %1202 = vmatprep.subr.bf16.mxu0 0
    %1203 = vmatpush2.bf16.msra.mxu0 0
    %1204 = vmatprep.subr.bf16.mxu0 0
    %1205 = vmatpush2.bf16.msra.mxu0 0
    %1206 = vmatprep.subr.bf16.mxu0 0
    %1207 = vmatpush2.bf16.msra.mxu0 0
    %1208 = vmatprep.subr.bf16.mxu0 0
    %1209 = vmatpush2.bf16.msra.mxu0 0
    %1210 = vmatprep.subr.bf16.mxu0 0
    %1211 = vmatpush2.bf16.msra.mxu0 0
    %1212 = vmatprep.subr.bf16.mxu0 0
    %1213 = vmatpush2.bf16.msra.mxu0 0
    %1214 = vmatprep.subr.bf16.mxu0 0
    %1215 = vmatpush2.bf16.msra.mxu0 0
    %1216 = vmatprep.mubr.bf16.mxu0 0
    %1217 = vmatmul.mubr.bf16.gmra.mxu0 %v355
    %v1218 = vpop.f32.mrf.mxu0
    %v1219 = vadd.f32 %v1130, %v1218
    %v1220 = vpop.f32.mrf.mxu0
    %v1221 = vpop.f32.mrf.mxu0
    %v1222 = vadd.f32 %v1133, %v1221
    %v1223 = vpop.f32.mrf.mxu0
    %1224 = vdwg.mxu0
    %v1225 = vld [vmem:[%s10 + $0x1] sm:$0x1]
    %v1226 = vlaneseq
    %v1227 = vshrl.u32 %v1226, 7
    %v1228 = vsub.s32 0, %v1227
    %v1229 = vrot.slane %v1225, %v1228
    %v1230 = vadd.f32 %v1219, %v1229
    %v1231 = vadd.f32 %v1222, %v1229
    %v1232 = vmax.f32 %v1230, 0.0
    %v1233 = vmax.f32 %v1231, 0.0
    %v1234 = vpack.c.bf16 %v1233, %v1232
    %v1236 = vunpack.c.l.b16 %v1234
    %v1237 = vunpack.c.h.b16 %v1234
    %v1238 = vpack.c.b16 %v1236, %v1236
    %v1239 = vpack.c.b16 %v1237, %v1237
    %1242 = vst [vmem:[#allocation2 + $0x8] sm:$0xf] %v1238
    %1243 = vst [vmem:[#allocation2 + $0xc] sm:$0xf] %v1239
    %v1244 = vld [vmem:[#allocation5] sm:$0xf]
    %v1245 = vld [vmem:[#allocation5 + $0x4] sm:$0xf]
    %v1246 = vld [vmem:[#allocation5 + $0x8] sm:$0xf]
    %v1247 = vld [vmem:[#allocation5 + $0xc] sm:$0xf]
    %v1248 = vld [vmem:[#allocation5 + $0x10] sm:$0xf]
    %v1249 = vld [vmem:[#allocation5 + $0x14] sm:$0xf]
    %v1250 = vld [vmem:[#allocation5 + $0x18] sm:$0xf]
    %v1251 = vld [vmem:[#allocation5 + $0x1c] sm:$0xf]
    %v1252 = vld [vmem:[#allocation5 + $0x20] sm:$0xf]
    %v1253 = vld [vmem:[#allocation5 + $0x24] sm:$0xf]
    %v1254 = vld [vmem:[#allocation5 + $0x28] sm:$0xf]
    %v1255 = vld [vmem:[#allocation5 + $0x2c] sm:$0xf]
    %v1256 = vld [vmem:[#allocation5 + $0x30] sm:$0xf]
    %v1257 = vld [vmem:[#allocation5 + $0x34] sm:$0xf]
    %v1258 = vld [vmem:[#allocation5 + $0x38] sm:$0xf]
    %v1259 = vld [vmem:[#allocation5 + $0x3c] sm:$0xf]
    %v1260 = vld [vmem:[#allocation5 + $0x40] sm:$0xf]
    %v1261 = vld [vmem:[#allocation5 + $0x44] sm:$0xf]
    %v1262 = vld [vmem:[#allocation5 + $0x48] sm:$0xf]
    %v1263 = vld [vmem:[#allocation5 + $0x4c] sm:$0xf]
    %v1264 = vld [vmem:[#allocation5 + $0x50] sm:$0xf]
    %v1265 = vld [vmem:[#allocation5 + $0x54] sm:$0xf]
    %v1266 = vld [vmem:[#allocation5 + $0x58] sm:$0xf]
    %v1267 = vld [vmem:[#allocation5 + $0x5c] sm:$0xf]
    %v1268 = vld [vmem:[#allocation5 + $0x60] sm:$0xf]
    %v1269 = vld [vmem:[#allocation5 + $0x64] sm:$0xf]
    %v1270 = vld [vmem:[#allocation5 + $0x68] sm:$0xf]
    %v1271 = vld [vmem:[#allocation5 + $0x6c] sm:$0xf]
    %v1272 = vld [vmem:[#allocation5 + $0x70] sm:$0xf]
    %v1273 = vld [vmem:[#allocation5 + $0x74] sm:$0xf]
    %v1274 = vld [vmem:[#allocation5 + $0x78] sm:$0xf]
    %v1275 = vld [vmem:[#allocation5 + $0x7c] sm:$0xf]
    %v1292 = vunpack.c.l.b16 %v1260
    %v1293 = vunpack.c.l.b16 %v1261
    %v1294 = vunpack.c.l.b16 %v1262
    %v1295 = vunpack.c.l.b16 %v1263
    %v1296 = vunpack.c.l.b16 %v1264
    %v1297 = vunpack.c.l.b16 %v1265
    %v1298 = vunpack.c.l.b16 %v1266
    %v1299 = vunpack.c.l.b16 %v1267
    %v1300 = vunpack.c.l.b16 %v1268
    %v1301 = vunpack.c.l.b16 %v1269
    %v1302 = vunpack.c.l.b16 %v1270
    %v1303 = vunpack.c.l.b16 %v1271
    %v1304 = vunpack.c.l.b16 %v1272
    %v1305 = vunpack.c.l.b16 %v1273
    %v1306 = vunpack.c.l.b16 %v1274
    %v1307 = vunpack.c.l.b16 %v1275
    %v1308 = vpack.c.b16 %v1293, %v1292
    %v1309 = vpack.c.b16 %v1295, %v1294
    %v1310 = vpack.c.b16 %v1297, %v1296
    %v1311 = vpack.c.b16 %v1299, %v1298
    %v1312 = vpack.c.b16 %v1301, %v1300
    %v1313 = vpack.c.b16 %v1303, %v1302
    %v1314 = vpack.c.b16 %v1305, %v1304
    %v1315 = vpack.c.b16 %v1307, %v1306
    %1324 = vmatprep.subr.bf16.mxu0 0
    %1325 = vmatpush1.bf16.msra.mxu0 %v1315
    %1326 = vmatprep.subr.bf16.mxu0 0
    %1327 = vmatpush1.bf16.msra.mxu0 %v1314
    %1328 = vmatprep.subr.bf16.mxu0 0
    %1329 = vmatpush1.bf16.msra.mxu0 %v1313
    %1330 = vmatprep.subr.bf16.mxu0 0
    %1331 = vmatpush1.bf16.msra.mxu0 %v1312
    %1332 = vmatprep.subr.bf16.mxu0 0
    %1333 = vmatpush1.bf16.msra.mxu0 %v1311
    %1334 = vmatprep.subr.bf16.mxu0 0
    %1335 = vmatpush1.bf16.msra.mxu0 %v1310
    %1336 = vmatprep.subr.bf16.mxu0 0
    %1337 = vmatpush1.bf16.msra.mxu0 %v1309
    %1338 = vmatprep.subr.bf16.mxu0 0
    %1339 = vmatpush1.bf16.msra.mxu0 %v1308
    %1340 = vmatprep.subr.bf16.mxu0 0
    %1341 = vmatpush2.bf16.msra.mxu0 0
    %1342 = vmatprep.subr.bf16.mxu0 0
    %1343 = vmatpush2.bf16.msra.mxu0 0
    %1344 = vmatprep.subr.bf16.mxu0 0
    %1345 = vmatpush2.bf16.msra.mxu0 0
    %1346 = vmatprep.subr.bf16.mxu0 0
    %1347 = vmatpush2.bf16.msra.mxu0 0
    %1348 = vmatprep.subr.bf16.mxu0 0
    %1349 = vmatpush2.bf16.msra.mxu0 0
    %1350 = vmatprep.subr.bf16.mxu0 0
    %1351 = vmatpush2.bf16.msra.mxu0 0
    %1352 = vmatprep.subr.bf16.mxu0 0
    %1353 = vmatpush2.bf16.msra.mxu0 0
    %1354 = vmatprep.subr.bf16.mxu0 0
    %1355 = vmatpush2.bf16.msra.mxu0 0
    %1356 = vmatprep.mubr.bf16.mxu0 0
    %1357 = vmatmul.mubr.bf16.gmra.mxu0 %v222
    %v1358 = vpop.f32.mrf.mxu0
    %v1359 = vadd.f32 0.0, %v1358
    %v1360 = vpop.f32.mrf.mxu0
    %v1361 = vpop.f32.mrf.mxu0
    %v1362 = vadd.f32 0.0, %v1361
    %v1363 = vpop.f32.mrf.mxu0
    %1364 = vdwg.mxu0
    %v1381 = vunpack.c.l.b16 %v1244
    %v1382 = vunpack.c.l.b16 %v1245
    %v1383 = vunpack.c.l.b16 %v1246
    %v1384 = vunpack.c.l.b16 %v1247
    %v1385 = vunpack.c.l.b16 %v1248
    %v1386 = vunpack.c.l.b16 %v1249
    %v1387 = vunpack.c.l.b16 %v1250
    %v1388 = vunpack.c.l.b16 %v1251
    %v1389 = vunpack.c.l.b16 %v1252
    %v1390 = vunpack.c.l.b16 %v1253
    %v1391 = vunpack.c.l.b16 %v1254
    %v1392 = vunpack.c.l.b16 %v1255
    %v1393 = vunpack.c.l.b16 %v1256
    %v1394 = vunpack.c.l.b16 %v1257
    %v1395 = vunpack.c.l.b16 %v1258
    %v1396 = vunpack.c.l.b16 %v1259
    %v1397 = vpack.c.b16 %v1382, %v1381
    %v1398 = vpack.c.b16 %v1384, %v1383
    %v1399 = vpack.c.b16 %v1386, %v1385
    %v1400 = vpack.c.b16 %v1388, %v1387
    %v1401 = vpack.c.b16 %v1390, %v1389
    %v1402 = vpack.c.b16 %v1392, %v1391
    %v1403 = vpack.c.b16 %v1394, %v1393
    %v1404 = vpack.c.b16 %v1396, %v1395
    %1413 = vmatprep.subr.bf16.mxu0 0
    %1414 = vmatpush1.bf16.msra.mxu0 %v1404
    %1415 = vmatprep.subr.bf16.mxu0 0
    %1416 = vmatpush1.bf16.msra.mxu0 %v1403
    %1417 = vmatprep.subr.bf16.mxu0 0
    %1418 = vmatpush1.bf16.msra.mxu0 %v1402
    %1419 = vmatprep.subr.bf16.mxu0 0
    %1420 = vmatpush1.bf16.msra.mxu0 %v1401
    %1421 = vmatprep.subr.bf16.mxu0 0
    %1422 = vmatpush1.bf16.msra.mxu0 %v1400
    %1423 = vmatprep.subr.bf16.mxu0 0
    %1424 = vmatpush1.bf16.msra.mxu0 %v1399
    %1425 = vmatprep.subr.bf16.mxu0 0
    %1426 = vmatpush1.bf16.msra.mxu0 %v1398
    %1427 = vmatprep.subr.bf16.mxu0 0
    %1428 = vmatpush1.bf16.msra.mxu0 %v1397
    %1429 = vmatprep.subr.bf16.mxu0 0
    %1430 = vmatpush2.bf16.msra.mxu0 0
    %1431 = vmatprep.subr.bf16.mxu0 0
    %1432 = vmatpush2.bf16.msra.mxu0 0
    %1433 = vmatprep.subr.bf16.mxu0 0
    %1434 = vmatpush2.bf16.msra.mxu0 0
    %1435 = vmatprep.subr.bf16.mxu0 0
    %1436 = vmatpush2.bf16.msra.mxu0 0
    %1437 = vmatprep.subr.bf16.mxu0 0
    %1438 = vmatpush2.bf16.msra.mxu0 0
    %1439 = vmatprep.subr.bf16.mxu0 0
    %1440 = vmatpush2.bf16.msra.mxu0 0
    %1441 = vmatprep.subr.bf16.mxu0 0
    %1442 = vmatpush2.bf16.msra.mxu0 0
    %1443 = vmatprep.subr.bf16.mxu0 0
    %1444 = vmatpush2.bf16.msra.mxu0 0
    %1445 = vmatprep.mubr.bf16.mxu0 0
    %1446 = vmatmul.mubr.bf16.gmra.mxu0 %v356
    %v1447 = vpop.f32.mrf.mxu0
    %v1448 = vadd.f32 %v1359, %v1447
    %v1449 = vpop.f32.mrf.mxu0
    %v1450 = vpop.f32.mrf.mxu0
    %v1451 = vadd.f32 %v1362, %v1450
    %v1452 = vpop.f32.mrf.mxu0
    %1453 = vdwg.mxu0
    %v1454 = vld [vmem:[%s10 + $0x2] sm:$0x1]
    %v1455 = vlaneseq
    %v1456 = vshrl.u32 %v1455, 7
    %v1457 = vsub.s32 0, %v1456
    %v1458 = vrot.slane %v1454, %v1457
    %v1459 = vadd.f32 %v1448, %v1458
    %v1460 = vadd.f32 %v1451, %v1458
    %v1461 = vmax.f32 %v1459, 0.0
    %v1462 = vmax.f32 %v1460, 0.0
    %v1463 = vpack.c.bf16 %v1462, %v1461
    %v1465 = vunpack.c.l.b16 %v1463
    %v1466 = vunpack.c.h.b16 %v1463
    %v1467 = vpack.c.b16 %v1465, %v1465
    %v1468 = vpack.c.b16 %v1466, %v1466
    %1471 = vst [vmem:[#allocation2 + $0x10] sm:$0xf] %v1467
    %1472 = vst [vmem:[#allocation2 + $0x14] sm:$0xf] %v1468
    %v1473 = vld [vmem:[#allocation7] sm:$0xf]
    %v1474 = vld [vmem:[#allocation7 + $0x4] sm:$0xf]
    %v1475 = vld [vmem:[#allocation7 + $0x8] sm:$0xf]
    %v1476 = vld [vmem:[#allocation7 + $0xc] sm:$0xf]
    %v1477 = vld [vmem:[#allocation7 + $0x10] sm:$0xf]
    %v1478 = vld [vmem:[#allocation7 + $0x14] sm:$0xf]
    %v1479 = vld [vmem:[#allocation7 + $0x18] sm:$0xf]
    %v1480 = vld [vmem:[#allocation7 + $0x1c] sm:$0xf]
    %v1481 = vld [vmem:[#allocation7 + $0x20] sm:$0xf]
    %v1482 = vld [vmem:[#allocation7 + $0x24] sm:$0xf]
    %v1483 = vld [vmem:[#allocation7 + $0x28] sm:$0xf]
    %v1484 = vld [vmem:[#allocation7 + $0x2c] sm:$0xf]
    %v1485 = vld [vmem:[#allocation7 + $0x30] sm:$0xf]
    %v1486 = vld [vmem:[#allocation7 + $0x34] sm:$0xf]
    %v1487 = vld [vmem:[#allocation7 + $0x38] sm:$0xf]
    %v1488 = vld [vmem:[#allocation7 + $0x3c] sm:$0xf]
    %v1489 = vld [vmem:[#allocation7 + $0x40] sm:$0xf]
    %v1490 = vld [vmem:[#allocation7 + $0x44] sm:$0xf]
    %v1491 = vld [vmem:[#allocation7 + $0x48] sm:$0xf]
    %v1492 = vld [vmem:[#allocation7 + $0x4c] sm:$0xf]
    %v1493 = vld [vmem:[#allocation7 + $0x50] sm:$0xf]
    %v1494 = vld [vmem:[#allocation7 + $0x54] sm:$0xf]
    %v1495 = vld [vmem:[#allocation7 + $0x58] sm:$0xf]
    %v1496 = vld [vmem:[#allocation7 + $0x5c] sm:$0xf]
    %v1497 = vld [vmem:[#allocation7 + $0x60] sm:$0xf]
    %v1498 = vld [vmem:[#allocation7 + $0x64] sm:$0xf]
    %v1499 = vld [vmem:[#allocation7 + $0x68] sm:$0xf]
    %v1500 = vld [vmem:[#allocation7 + $0x6c] sm:$0xf]
    %v1501 = vld [vmem:[#allocation7 + $0x70] sm:$0xf]
    %v1502 = vld [vmem:[#allocation7 + $0x74] sm:$0xf]
    %v1503 = vld [vmem:[#allocation7 + $0x78] sm:$0xf]
    %v1504 = vld [vmem:[#allocation7 + $0x7c] sm:$0xf]
    %v1521 = vunpack.c.l.b16 %v1489
    %v1522 = vunpack.c.l.b16 %v1490
    %v1523 = vunpack.c.l.b16 %v1491
    %v1524 = vunpack.c.l.b16 %v1492
    %v1525 = vunpack.c.l.b16 %v1493
    %v1526 = vunpack.c.l.b16 %v1494
    %v1527 = vunpack.c.l.b16 %v1495
    %v1528 = vunpack.c.l.b16 %v1496
    %v1529 = vunpack.c.l.b16 %v1497
    %v1530 = vunpack.c.l.b16 %v1498
    %v1531 = vunpack.c.l.b16 %v1499
    %v1532 = vunpack.c.l.b16 %v1500
    %v1533 = vunpack.c.l.b16 %v1501
    %v1534 = vunpack.c.l.b16 %v1502
    %v1535 = vunpack.c.l.b16 %v1503
    %v1536 = vunpack.c.l.b16 %v1504
    %v1537 = vpack.c.b16 %v1522, %v1521
    %v1538 = vpack.c.b16 %v1524, %v1523
    %v1539 = vpack.c.b16 %v1526, %v1525
    %v1540 = vpack.c.b16 %v1528, %v1527
    %v1541 = vpack.c.b16 %v1530, %v1529
    %v1542 = vpack.c.b16 %v1532, %v1531
    %v1543 = vpack.c.b16 %v1534, %v1533
    %v1544 = vpack.c.b16 %v1536, %v1535
    %1553 = vmatprep.subr.bf16.mxu0 0
    %1554 = vmatpush1.bf16.msra.mxu0 %v1544
    %1555 = vmatprep.subr.bf16.mxu0 0
    %1556 = vmatpush1.bf16.msra.mxu0 %v1543
    %1557 = vmatprep.subr.bf16.mxu0 0
    %1558 = vmatpush1.bf16.msra.mxu0 %v1542
    %1559 = vmatprep.subr.bf16.mxu0 0
    %1560 = vmatpush1.bf16.msra.mxu0 %v1541
    %1561 = vmatprep.subr.bf16.mxu0 0
    %1562 = vmatpush1.bf16.msra.mxu0 %v1540
    %1563 = vmatprep.subr.bf16.mxu0 0
    %1564 = vmatpush1.bf16.msra.mxu0 %v1539
    %1565 = vmatprep.subr.bf16.mxu0 0
    %1566 = vmatpush1.bf16.msra.mxu0 %v1538
    %1567 = vmatprep.subr.bf16.mxu0 0
    %1568 = vmatpush1.bf16.msra.mxu0 %v1537
    %1569 = vmatprep.subr.bf16.mxu0 0
    %1570 = vmatpush2.bf16.msra.mxu0 0
    %1571 = vmatprep.subr.bf16.mxu0 0
    %1572 = vmatpush2.bf16.msra.mxu0 0
    %1573 = vmatprep.subr.bf16.mxu0 0
    %1574 = vmatpush2.bf16.msra.mxu0 0
    %1575 = vmatprep.subr.bf16.mxu0 0
    %1576 = vmatpush2.bf16.msra.mxu0 0
    %1577 = vmatprep.subr.bf16.mxu0 0
    %1578 = vmatpush2.bf16.msra.mxu0 0
    %1579 = vmatprep.subr.bf16.mxu0 0
    %1580 = vmatpush2.bf16.msra.mxu0 0
    %1581 = vmatprep.subr.bf16.mxu0 0
    %1582 = vmatpush2.bf16.msra.mxu0 0
    %1583 = vmatprep.subr.bf16.mxu0 0
    %1584 = vmatpush2.bf16.msra.mxu0 0
    %1585 = vmatprep.mubr.bf16.mxu0 0
    %1586 = vmatmul.mubr.bf16.gmra.mxu0 %v223
    %v1587 = vpop.f32.mrf.mxu0
    %v1588 = vadd.f32 0.0, %v1587
    %v1589 = vpop.f32.mrf.mxu0
    %v1590 = vpop.f32.mrf.mxu0
    %v1591 = vadd.f32 0.0, %v1590
    %v1592 = vpop.f32.mrf.mxu0
    %1593 = vdwg.mxu0
    %v1610 = vunpack.c.l.b16 %v1473
    %v1611 = vunpack.c.l.b16 %v1474
    %v1612 = vunpack.c.l.b16 %v1475
    %v1613 = vunpack.c.l.b16 %v1476
    %v1614 = vunpack.c.l.b16 %v1477
    %v1615 = vunpack.c.l.b16 %v1478
    %v1616 = vunpack.c.l.b16 %v1479
    %v1617 = vunpack.c.l.b16 %v1480
    %v1618 = vunpack.c.l.b16 %v1481
    %v1619 = vunpack.c.l.b16 %v1482
    %v1620 = vunpack.c.l.b16 %v1483
    %v1621 = vunpack.c.l.b16 %v1484
    %v1622 = vunpack.c.l.b16 %v1485
    %v1623 = vunpack.c.l.b16 %v1486
    %v1624 = vunpack.c.l.b16 %v1487
    %v1625 = vunpack.c.l.b16 %v1488
    %v1626 = vpack.c.b16 %v1611, %v1610
    %v1627 = vpack.c.b16 %v1613, %v1612
    %v1628 = vpack.c.b16 %v1615, %v1614
    %v1629 = vpack.c.b16 %v1617, %v1616
    %v1630 = vpack.c.b16 %v1619, %v1618
    %v1631 = vpack.c.b16 %v1621, %v1620
    %v1632 = vpack.c.b16 %v1623, %v1622
    %v1633 = vpack.c.b16 %v1625, %v1624
    %1642 = vmatprep.subr.bf16.mxu0 0
    %1643 = vmatpush1.bf16.msra.mxu0 %v1633
    %1644 = vmatprep.subr.bf16.mxu0 0
    %1645 = vmatpush1.bf16.msra.mxu0 %v1632
    %1646 = vmatprep.subr.bf16.mxu0 0
    %1647 = vmatpush1.bf16.msra.mxu0 %v1631
    %1648 = vmatprep.subr.bf16.mxu0 0
    %1649 = vmatpush1.bf16.msra.mxu0 %v1630
    %1650 = vmatprep.subr.bf16.mxu0 0
    %1651 = vmatpush1.bf16.msra.mxu0 %v1629
    %1652 = vmatprep.subr.bf16.mxu0 0
    %1653 = vmatpush1.bf16.msra.mxu0 %v1628
    %1654 = vmatprep.subr.bf16.mxu0 0
    %1655 = vmatpush1.bf16.msra.mxu0 %v1627
    %1656 = vmatprep.subr.bf16.mxu0 0
    %1657 = vmatpush1.bf16.msra.mxu0 %v1626
    %1658 = vmatprep.subr.bf16.mxu0 0
    %1659 = vmatpush2.bf16.msra.mxu0 0
    %1660 = vmatprep.subr.bf16.mxu0 0
    %1661 = vmatpush2.bf16.msra.mxu0 0
    %1662 = vmatprep.subr.bf16.mxu0 0
    %1663 = vmatpush2.bf16.msra.mxu0 0
    %1664 = vmatprep.subr.bf16.mxu0 0
    %1665 = vmatpush2.bf16.msra.mxu0 0
    %1666 = vmatprep.subr.bf16.mxu0 0
    %1667 = vmatpush2.bf16.msra.mxu0 0
    %1668 = vmatprep.subr.bf16.mxu0 0
    %1669 = vmatpush2.bf16.msra.mxu0 0
    %1670 = vmatprep.subr.bf16.mxu0 0
    %1671 = vmatpush2.bf16.msra.mxu0 0
    %1672 = vmatprep.subr.bf16.mxu0 0
    %1673 = vmatpush2.bf16.msra.mxu0 0
    %1674 = vmatprep.mubr.bf16.mxu0 0
    %1675 = vmatmul.mubr.bf16.gmra.mxu0 %v357
    %v1676 = vpop.f32.mrf.mxu0
    %v1677 = vadd.f32 %v1588, %v1676
    %v1678 = vpop.f32.mrf.mxu0
    %v1679 = vpop.f32.mrf.mxu0
    %v1680 = vadd.f32 %v1591, %v1679
    %v1681 = vpop.f32.mrf.mxu0
    %1682 = vdwg.mxu0
    %v1683 = vld [vmem:[%s10 + $0x3] sm:$0x1]
    %v1684 = vlaneseq
    %v1685 = vshrl.u32 %v1684, 7
    %v1686 = vsub.s32 0, %v1685
    %v1687 = vrot.slane %v1683, %v1686
    %v1688 = vadd.f32 %v1677, %v1687
    %v1689 = vadd.f32 %v1680, %v1687
    %v1690 = vmax.f32 %v1688, 0.0
    %v1691 = vmax.f32 %v1689, 0.0
    %v1692 = vpack.c.bf16 %v1691, %v1690
    %v1694 = vunpack.c.l.b16 %v1692
    %v1695 = vunpack.c.h.b16 %v1692
    %v1696 = vpack.c.b16 %v1694, %v1694
    %v1697 = vpack.c.b16 %v1695, %v1695
    %1700 = vst [vmem:[#allocation2 + $0x18] sm:$0xf] %v1696
    %1701 = vst [vmem:[#allocation2 + $0x1c] sm:$0xf] %v1697
    %v1702 = vld [vmem:[#allocation2] sm:$0xf]
    %v1703 = vld [vmem:[#allocation2 + $0x4] sm:$0xf]
    %v1704 = vld [vmem:[#allocation2 + $0x8] sm:$0xf]
    %v1705 = vld [vmem:[#allocation2 + $0xc] sm:$0xf]
    %v1706 = vld [vmem:[#allocation2 + $0x10] sm:$0xf]
    %v1707 = vld [vmem:[#allocation2 + $0x14] sm:$0xf]
    %v1708 = vld [vmem:[#allocation2 + $0x18] sm:$0xf]
    %v1709 = vld [vmem:[#allocation2 + $0x1c] sm:$0xf]
    %v1718 = vunpack.c.l.b16 %v1702
    %v1719 = vunpack.c.l.b16 %v1703
    %v1720 = vunpack.c.l.b16 %v1704
    %v1721 = vunpack.c.l.b16 %v1705
    %v1722 = vunpack.c.l.b16 %v1706
    %v1723 = vunpack.c.l.b16 %v1707
    %v1724 = vunpack.c.l.b16 %v1708
    %v1725 = vunpack.c.l.b16 %v1709
    %v1726 = vpack.c.b16 %v1719, %v1718
    %v1727 = vpack.c.b16 %v1721, %v1720
    %v1728 = vpack.c.b16 %v1723, %v1722
    %v1729 = vpack.c.b16 %v1725, %v1724
    %1734 = vmatprep.subr.bf16.mxu0 0
    %1735 = vmatpush1.bf16.msra.mxu0 0
    %1736 = vmatprep.subr.bf16.mxu0 0
    %1737 = vmatpush1.bf16.msra.mxu0 0
    %1738 = vmatprep.subr.bf16.mxu0 0
    %1739 = vmatpush1.bf16.msra.mxu0 0
    %1740 = vmatprep.subr.bf16.mxu0 0
    %1741 = vmatpush1.bf16.msra.mxu0 0
    %1742 = vmatprep.subr.bf16.mxu0 0
    %1743 = vmatpush1.bf16.msra.mxu0 %v1729
    %1744 = vmatprep.subr.bf16.mxu0 0
    %1745 = vmatpush1.bf16.msra.mxu0 %v1728
    %1746 = vmatprep.subr.bf16.mxu0 0
    %1747 = vmatpush1.bf16.msra.mxu0 %v1727
    %1748 = vmatprep.subr.bf16.mxu0 0
    %1749 = vmatpush1.bf16.msra.mxu0 %v1726
    %1750 = vmatprep.subr.bf16.mxu0 0
    %1751 = vmatpush2.bf16.msra.mxu0 0
    %1752 = vmatprep.subr.bf16.mxu0 0
    %1753 = vmatpush2.bf16.msra.mxu0 0
    %1754 = vmatprep.subr.bf16.mxu0 0
    %1755 = vmatpush2.bf16.msra.mxu0 0
    %1756 = vmatprep.subr.bf16.mxu0 0
    %1757 = vmatpush2.bf16.msra.mxu0 0
    %1758 = vmatprep.subr.bf16.mxu0 0
    %1759 = vmatpush2.bf16.msra.mxu0 0
    %1760 = vmatprep.subr.bf16.mxu0 0
    %1761 = vmatpush2.bf16.msra.mxu0 0
    %1762 = vmatprep.subr.bf16.mxu0 0
    %1763 = vmatpush2.bf16.msra.mxu0 0
    %1764 = vmatprep.subr.bf16.mxu0 0
    %1765 = vmatpush2.bf16.msra.mxu0 0
    %1766 = vmatprep.mubr.bf16.mxu0 0
    %1767 = vmatmul.mubr.bf16.gmra.mxu0 %v230
    %v1768 = vpop.f32.mrf.mxu0
    %v1769 = vadd.f32 0.0, %v1768
    %v1770 = vpop.f32.mrf.mxu0
    %v1771 = vpop.f32.mrf.mxu0
    %v1772 = vadd.f32 0.0, %v1771
    %v1773 = vpop.f32.mrf.mxu0
    %1774 = vmatprep.mubr.bf16.mxu0 0
    %1775 = vmatmul.mubr.bf16.gmra.mxu0 %v233
    %v1776 = vpop.f32.mrf.mxu0
    %v1777 = vadd.f32 0.0, %v1776
    %v1778 = vpop.f32.mrf.mxu0
    %v1779 = vpop.f32.mrf.mxu0
    %v1780 = vadd.f32 0.0, %v1779
    %v1781 = vpop.f32.mrf.mxu0
    %1782 = vmatprep.mubr.bf16.mxu0 0
    %1783 = vmatmul.mubr.bf16.gmra.mxu0 %v236
    %v1784 = vpop.f32.mrf.mxu0
    %v1785 = vadd.f32 0.0, %v1784
    %v1786 = vpop.f32.mrf.mxu0
    %v1787 = vpop.f32.mrf.mxu0
    %v1788 = vadd.f32 0.0, %v1787
    %v1789 = vpop.f32.mrf.mxu0
    %1790 = vmatprep.mubr.bf16.mxu0 0
    %1791 = vmatmul.mubr.bf16.gmra.mxu0 %v239
    %v1792 = vpop.f32.mrf.mxu0
    %v1793 = vadd.f32 0.0, %v1792
    %v1794 = vpop.f32.mrf.mxu0
    %v1795 = vpop.f32.mrf.mxu0
    %v1796 = vadd.f32 0.0, %v1795
    %v1797 = vpop.f32.mrf.mxu0
    %1798 = vmatprep.mubr.bf16.mxu0 0
    %1799 = vmatmul.mubr.bf16.gmra.mxu0 %v242
    %v1800 = vpop.f32.mrf.mxu0
    %v1801 = vadd.f32 0.0, %v1800
    %v1802 = vpop.f32.mrf.mxu0
    %v1803 = vpop.f32.mrf.mxu0
    %v1804 = vadd.f32 0.0, %v1803
    %v1805 = vpop.f32.mrf.mxu0
    %1806 = vmatprep.mubr.bf16.mxu0 0
    %1807 = vmatmul.mubr.bf16.gmra.mxu0 %v245
    %v1808 = vpop.f32.mrf.mxu0
    %v1809 = vadd.f32 0.0, %v1808
    %v1810 = vpop.f32.mrf.mxu0
    %v1811 = vpop.f32.mrf.mxu0
    %v1812 = vadd.f32 0.0, %v1811
    %v1813 = vpop.f32.mrf.mxu0
    %1814 = vmatprep.mubr.bf16.mxu0 0
    %1815 = vmatmul.mubr.bf16.gmra.mxu0 %v248
    %v1816 = vpop.f32.mrf.mxu0
    %v1817 = vadd.f32 0.0, %v1816
    %v1818 = vpop.f32.mrf.mxu0
    %v1819 = vpop.f32.mrf.mxu0
    %v1820 = vadd.f32 0.0, %v1819
    %v1821 = vpop.f32.mrf.mxu0
    %1822 = vmatprep.mubr.bf16.mxu0 0
    %1823 = vmatmul.mubr.bf16.gmra.mxu0 %v251
    %v1824 = vpop.f32.mrf.mxu0
    %v1825 = vadd.f32 0.0, %v1824
    %v1826 = vpop.f32.mrf.mxu0
    %v1827 = vpop.f32.mrf.mxu0
    %v1828 = vadd.f32 0.0, %v1827
    %v1829 = vpop.f32.mrf.mxu0
    %1830 = vdwg.mxu0
    %v1831 = vpack.c.bf16 %v1772, %v1769
    %v1832 = vpack.c.bf16 %v1780, %v1777
    %v1833 = vpack.c.bf16 %v1788, %v1785
    %v1834 = vpack.c.bf16 %v1796, %v1793
    %v1835 = vpack.c.bf16 %v1804, %v1801
    %v1836 = vpack.c.bf16 %v1812, %v1809
    %v1837 = vpack.c.bf16 %v1820, %v1817
    %v1838 = vpack.c.bf16 %v1828, %v1825
    %v1839 = vld [vmem:[%s11] sm:$0xf]
    %v1840 = vld [vmem:[%s11 + $0x4] sm:$0xf]
    %v1841 = vld [vmem:[%s11 + $0x8] sm:$0xf]
    %v1842 = vld [vmem:[%s11 + $0xc] sm:$0xf]
    %v1843 = vld [vmem:[%s11 + $0x10] sm:$0xf]
    %v1844 = vld [vmem:[%s11 + $0x14] sm:$0xf]
    %v1845 = vld [vmem:[%s11 + $0x18] sm:$0xf]
    %v1846 = vld [vmem:[%s11 + $0x1c] sm:$0xf]
    %v1847 = vld [vmem:[%s11 + $0x20] sm:$0xf]
    %v1848 = vld [vmem:[%s11 + $0x24] sm:$0xf]
    %v1849 = vld [vmem:[%s11 + $0x28] sm:$0xf]
    %v1850 = vld [vmem:[%s11 + $0x2c] sm:$0xf]
    %v1851 = vld [vmem:[%s11 + $0x30] sm:$0xf]
    %v1852 = vld [vmem:[%s11 + $0x34] sm:$0xf]
    %v1853 = vld [vmem:[%s11 + $0x38] sm:$0xf]
    %v1854 = vld [vmem:[%s11 + $0x3c] sm:$0xf]
    %v1855 = vld [vmem:[%s12] sm:$0x1]
    %v1856 = vld [vmem:[#allocation8] sm:$0xf]
    %v1857 = vld [vmem:[#allocation8 + $0x4] sm:$0xf]
    %v1858 = vld [vmem:[#allocation8 + $0x8] sm:$0xf]
    %v1859 = vld [vmem:[#allocation8 + $0xc] sm:$0xf]
    %v1860 = vld [vmem:[#allocation8 + $0x10] sm:$0xf]
    %v1861 = vld [vmem:[#allocation8 + $0x14] sm:$0xf]
    %v1862 = vld [vmem:[#allocation8 + $0x18] sm:$0xf]
    %v1863 = vld [vmem:[#allocation8 + $0x1c] sm:$0xf]
    %v1864 = vld [vmem:[#allocation8 + $0x20] sm:$0xf]
    %v1865 = vld [vmem:[#allocation8 + $0x24] sm:$0xf]
    %v1866 = vld [vmem:[#allocation8 + $0x28] sm:$0xf]
    %v1867 = vld [vmem:[#allocation8 + $0x2c] sm:$0xf]
    %v1868 = vld [vmem:[#allocation8 + $0x30] sm:$0xf]
    %v1869 = vld [vmem:[#allocation8 + $0x34] sm:$0xf]
    %v1870 = vld [vmem:[#allocation8 + $0x38] sm:$0xf]
    %v1871 = vld [vmem:[#allocation8 + $0x3c] sm:$0xf]
    %v1872 = vld [vmem:[#allocation8 + $0x40] sm:$0xf]
    %v1873 = vld [vmem:[#allocation8 + $0x44] sm:$0xf]
    %v1874 = vld [vmem:[#allocation8 + $0x48] sm:$0xf]
    %v1875 = vld [vmem:[#allocation8 + $0x4c] sm:$0xf]
    %v1876 = vld [vmem:[#allocation8 + $0x50] sm:$0xf]
    %v1877 = vld [vmem:[#allocation8 + $0x54] sm:$0xf]
    %v1878 = vld [vmem:[#allocation8 + $0x58] sm:$0xf]
    %v1879 = vld [vmem:[#allocation8 + $0x5c] sm:$0xf]
    %v1880 = vld [vmem:[#allocation8 + $0x60] sm:$0xf]
    %v1881 = vld [vmem:[#allocation8 + $0x64] sm:$0xf]
    %v1882 = vld [vmem:[#allocation8 + $0x68] sm:$0xf]
    %v1883 = vld [vmem:[#allocation8 + $0x6c] sm:$0xf]
    %v1884 = vld [vmem:[#allocation8 + $0x70] sm:$0xf]
    %v1885 = vld [vmem:[#allocation8 + $0x74] sm:$0xf]
    %v1886 = vld [vmem:[#allocation8 + $0x78] sm:$0xf]
    %v1887 = vld [vmem:[#allocation8 + $0x7c] sm:$0xf]
    %v1904 = vunpack.c.l.b16 %v1872
    %v1905 = vunpack.c.l.b16 %v1873
    %v1906 = vunpack.c.l.b16 %v1874
    %v1907 = vunpack.c.l.b16 %v1875
    %v1908 = vunpack.c.l.b16 %v1876
    %v1909 = vunpack.c.l.b16 %v1877
    %v1910 = vunpack.c.l.b16 %v1878
    %v1911 = vunpack.c.l.b16 %v1879
    %v1912 = vunpack.c.l.b16 %v1880
    %v1913 = vunpack.c.l.b16 %v1881
    %v1914 = vunpack.c.l.b16 %v1882
    %v1915 = vunpack.c.l.b16 %v1883
    %v1916 = vunpack.c.l.b16 %v1884
    %v1917 = vunpack.c.l.b16 %v1885
    %v1918 = vunpack.c.l.b16 %v1886
    %v1919 = vunpack.c.l.b16 %v1887
    %v1920 = vpack.c.b16 %v1905, %v1904
    %v1921 = vpack.c.b16 %v1907, %v1906
    %v1922 = vpack.c.b16 %v1909, %v1908
    %v1923 = vpack.c.b16 %v1911, %v1910
    %v1924 = vpack.c.b16 %v1913, %v1912
    %v1925 = vpack.c.b16 %v1915, %v1914
    %v1926 = vpack.c.b16 %v1917, %v1916
    %v1927 = vpack.c.b16 %v1919, %v1918
    %1936 = vmatprep.subr.bf16.mxu0 0
    %1937 = vmatpush1.bf16.msra.mxu0 %v1927
    %1938 = vmatprep.subr.bf16.mxu0 0
    %1939 = vmatpush1.bf16.msra.mxu0 %v1926
    %1940 = vmatprep.subr.bf16.mxu0 0
    %1941 = vmatpush1.bf16.msra.mxu0 %v1925
    %1942 = vmatprep.subr.bf16.mxu0 0
    %1943 = vmatpush1.bf16.msra.mxu0 %v1924
    %1944 = vmatprep.subr.bf16.mxu0 0
    %1945 = vmatpush1.bf16.msra.mxu0 %v1923
    %1946 = vmatprep.subr.bf16.mxu0 0
    %1947 = vmatpush1.bf16.msra.mxu0 %v1922
    %1948 = vmatprep.subr.bf16.mxu0 0
    %1949 = vmatpush1.bf16.msra.mxu0 %v1921
    %1950 = vmatprep.subr.bf16.mxu0 0
    %1951 = vmatpush1.bf16.msra.mxu0 %v1920
    %1952 = vmatprep.subr.bf16.mxu0 0
    %1953 = vmatpush2.bf16.msra.mxu0 0
    %1954 = vmatprep.subr.bf16.mxu0 0
    %1955 = vmatpush2.bf16.msra.mxu0 0
    %1956 = vmatprep.subr.bf16.mxu0 0
    %1957 = vmatpush2.bf16.msra.mxu0 0
    %1958 = vmatprep.subr.bf16.mxu0 0
    %1959 = vmatpush2.bf16.msra.mxu0 0
    %1960 = vmatprep.subr.bf16.mxu0 0
    %1961 = vmatpush2.bf16.msra.mxu0 0
    %1962 = vmatprep.subr.bf16.mxu0 0
    %1963 = vmatpush2.bf16.msra.mxu0 0
    %1964 = vmatprep.subr.bf16.mxu0 0
    %1965 = vmatpush2.bf16.msra.mxu0 0
    %1966 = vmatprep.subr.bf16.mxu0 0
    %1967 = vmatpush2.bf16.msra.mxu0 0
    %1968 = vmatprep.mubr.bf16.mxu0 0
    %1969 = vmatmul.mubr.bf16.gmra.mxu0 %v1832
    %v1970 = vpop.f32.mrf.mxu0
    %v1971 = vadd.f32 0.0, %v1970
    %v1972 = vpop.f32.mrf.mxu0
    %v1973 = vpop.f32.mrf.mxu0
    %v1974 = vadd.f32 0.0, %v1973
    %v1975 = vpop.f32.mrf.mxu0
    %1976 = vdwg.mxu0
    %v1993 = vunpack.c.l.b16 %v1856
    %v1994 = vunpack.c.l.b16 %v1857
    %v1995 = vunpack.c.l.b16 %v1858
    %v1996 = vunpack.c.l.b16 %v1859
    %v1997 = vunpack.c.l.b16 %v1860
    %v1998 = vunpack.c.l.b16 %v1861
    %v1999 = vunpack.c.l.b16 %v1862
    %v2000 = vunpack.c.l.b16 %v1863
    %v2001 = vunpack.c.l.b16 %v1864
    %v2002 = vunpack.c.l.b16 %v1865
    %v2003 = vunpack.c.l.b16 %v1866
    %v2004 = vunpack.c.l.b16 %v1867
    %v2005 = vunpack.c.l.b16 %v1868
    %v2006 = vunpack.c.l.b16 %v1869
    %v2007 = vunpack.c.l.b16 %v1870
    %v2008 = vunpack.c.l.b16 %v1871
    %v2009 = vpack.c.b16 %v1994, %v1993
    %v2010 = vpack.c.b16 %v1996, %v1995
    %v2011 = vpack.c.b16 %v1998, %v1997
    %v2012 = vpack.c.b16 %v2000, %v1999
    %v2013 = vpack.c.b16 %v2002, %v2001
    %v2014 = vpack.c.b16 %v2004, %v2003
    %v2015 = vpack.c.b16 %v2006, %v2005
    %v2016 = vpack.c.b16 %v2008, %v2007
    %2025 = vmatprep.subr.bf16.mxu0 0
    %2026 = vmatpush1.bf16.msra.mxu0 %v2016
    %2027 = vmatprep.subr.bf16.mxu0 0
    %2028 = vmatpush1.bf16.msra.mxu0 %v2015
    %2029 = vmatprep.subr.bf16.mxu0 0
    %2030 = vmatpush1.bf16.msra.mxu0 %v2014
    %2031 = vmatprep.subr.bf16.mxu0 0
    %2032 = vmatpush1.bf16.msra.mxu0 %v2013
    %2033 = vmatprep.subr.bf16.mxu0 0
    %2034 = vmatpush1.bf16.msra.mxu0 %v2012
    %2035 = vmatprep.subr.bf16.mxu0 0
    %2036 = vmatpush1.bf16.msra.mxu0 %v2011
    %2037 = vmatprep.subr.bf16.mxu0 0
    %2038 = vmatpush1.bf16.msra.mxu0 %v2010
    %2039 = vmatprep.subr.bf16.mxu0 0
    %2040 = vmatpush1.bf16.msra.mxu0 %v2009
    %2041 = vmatprep.subr.bf16.mxu0 0
    %2042 = vmatpush2.bf16.msra.mxu0 0
    %2043 = vmatprep.subr.bf16.mxu0 0
    %2044 = vmatpush2.bf16.msra.mxu0 0
    %2045 = vmatprep.subr.bf16.mxu0 0
    %2046 = vmatpush2.bf16.msra.mxu0 0
    %2047 = vmatprep.subr.bf16.mxu0 0
    %2048 = vmatpush2.bf16.msra.mxu0 0
    %2049 = vmatprep.subr.bf16.mxu0 0
    %2050 = vmatpush2.bf16.msra.mxu0 0
    %2051 = vmatprep.subr.bf16.mxu0 0
    %2052 = vmatpush2.bf16.msra.mxu0 0
    %2053 = vmatprep.subr.bf16.mxu0 0
    %2054 = vmatpush2.bf16.msra.mxu0 0
    %2055 = vmatprep.subr.bf16.mxu0 0
    %2056 = vmatpush2.bf16.msra.mxu0 0
    %2057 = vmatprep.mubr.bf16.mxu0 0
    %2058 = vmatmul.mubr.bf16.gmra.mxu0 %v1831
    %v2059 = vpop.f32.mrf.mxu0
    %v2060 = vadd.f32 %v1971, %v2059
    %v2061 = vpop.f32.mrf.mxu0
    %v2062 = vpop.f32.mrf.mxu0
    %v2063 = vadd.f32 %v1974, %v2062
    %v2064 = vpop.f32.mrf.mxu0
    %2065 = vdwg.mxu0
    %v2066 = vld [vmem:[#allocation8 + $0x80] sm:$0xf]
    %v2067 = vld [vmem:[#allocation8 + $0x84] sm:$0xf]
    %v2068 = vld [vmem:[#allocation8 + $0x88] sm:$0xf]
    %v2069 = vld [vmem:[#allocation8 + $0x8c] sm:$0xf]
    %v2070 = vld [vmem:[#allocation8 + $0x90] sm:$0xf]
    %v2071 = vld [vmem:[#allocation8 + $0x94] sm:$0xf]
    %v2072 = vld [vmem:[#allocation8 + $0x98] sm:$0xf]
    %v2073 = vld [vmem:[#allocation8 + $0x9c] sm:$0xf]
    %v2074 = vld [vmem:[#allocation8 + $0xa0] sm:$0xf]
    %v2075 = vld [vmem:[#allocation8 + $0xa4] sm:$0xf]
    %v2076 = vld [vmem:[#allocation8 + $0xa8] sm:$0xf]
    %v2077 = vld [vmem:[#allocation8 + $0xac] sm:$0xf]
    %v2078 = vld [vmem:[#allocation8 + $0xb0] sm:$0xf]
    %v2079 = vld [vmem:[#allocation8 + $0xb4] sm:$0xf]
    %v2080 = vld [vmem:[#allocation8 + $0xb8] sm:$0xf]
    %v2081 = vld [vmem:[#allocation8 + $0xbc] sm:$0xf]
    %v2098 = vunpack.c.l.b16 %v2066
    %v2099 = vunpack.c.l.b16 %v2067
    %v2100 = vunpack.c.l.b16 %v2068
    %v2101 = vunpack.c.l.b16 %v2069
    %v2102 = vunpack.c.l.b16 %v2070
    %v2103 = vunpack.c.l.b16 %v2071
    %v2104 = vunpack.c.l.b16 %v2072
    %v2105 = vunpack.c.l.b16 %v2073
    %v2106 = vunpack.c.l.b16 %v2074
    %v2107 = vunpack.c.l.b16 %v2075
    %v2108 = vunpack.c.l.b16 %v2076
    %v2109 = vunpack.c.l.b16 %v2077
    %v2110 = vunpack.c.l.b16 %v2078
    %v2111 = vunpack.c.l.b16 %v2079
    %v2112 = vunpack.c.l.b16 %v2080
    %v2113 = vunpack.c.l.b16 %v2081
    %v2114 = vpack.c.b16 %v2099, %v2098
    %v2115 = vpack.c.b16 %v2101, %v2100
    %v2116 = vpack.c.b16 %v2103, %v2102
    %v2117 = vpack.c.b16 %v2105, %v2104
    %v2118 = vpack.c.b16 %v2107, %v2106
    %v2119 = vpack.c.b16 %v2109, %v2108
    %v2120 = vpack.c.b16 %v2111, %v2110
    %v2121 = vpack.c.b16 %v2113, %v2112
    %2130 = vmatprep.subr.bf16.mxu0 0
    %2131 = vmatpush1.bf16.msra.mxu0 %v2121
    %2132 = vmatprep.subr.bf16.mxu0 0
    %2133 = vmatpush1.bf16.msra.mxu0 %v2120
    %2134 = vmatprep.subr.bf16.mxu0 0
    %2135 = vmatpush1.bf16.msra.mxu0 %v2119
    %2136 = vmatprep.subr.bf16.mxu0 0
    %2137 = vmatpush1.bf16.msra.mxu0 %v2118
    %2138 = vmatprep.subr.bf16.mxu0 0
    %2139 = vmatpush1.bf16.msra.mxu0 %v2117
    %2140 = vmatprep.subr.bf16.mxu0 0
    %2141 = vmatpush1.bf16.msra.mxu0 %v2116
    %2142 = vmatprep.subr.bf16.mxu0 0
    %2143 = vmatpush1.bf16.msra.mxu0 %v2115
    %2144 = vmatprep.subr.bf16.mxu0 0
    %2145 = vmatpush1.bf16.msra.mxu0 %v2114
    %2146 = vmatprep.subr.bf16.mxu0 0
    %2147 = vmatpush2.bf16.msra.mxu0 0
    %2148 = vmatprep.subr.bf16.mxu0 0
    %2149 = vmatpush2.bf16.msra.mxu0 0
    %2150 = vmatprep.subr.bf16.mxu0 0
    %2151 = vmatpush2.bf16.msra.mxu0 0
    %2152 = vmatprep.subr.bf16.mxu0 0
    %2153 = vmatpush2.bf16.msra.mxu0 0
    %2154 = vmatprep.subr.bf16.mxu0 0
    %2155 = vmatpush2.bf16.msra.mxu0 0
    %2156 = vmatprep.subr.bf16.mxu0 0
    %2157 = vmatpush2.bf16.msra.mxu0 0
    %2158 = vmatprep.subr.bf16.mxu0 0
    %2159 = vmatpush2.bf16.msra.mxu0 0
    %2160 = vmatprep.subr.bf16.mxu0 0
    %2161 = vmatpush2.bf16.msra.mxu0 0
    %2162 = vmatprep.mubr.bf16.mxu0 0
    %2163 = vmatmul.mubr.bf16.gmra.mxu0 %v1833
    %v2164 = vpop.f32.mrf.mxu0
    %v2165 = vadd.f32 0.0, %v2164
    %v2166 = vpop.f32.mrf.mxu0
    %v2167 = vpop.f32.mrf.mxu0
    %v2168 = vadd.f32 0.0, %v2167
    %v2169 = vpop.f32.mrf.mxu0
    %2170 = vdwg.mxu0
    %v2171 = vadd.f32 %v2060, %v2165
    %v2172 = vadd.f32 %v2063, %v2168
    %v2173 = vld [vmem:[#allocation8 + $0xc0] sm:$0xf]
    %v2174 = vld [vmem:[#allocation8 + $0xc4] sm:$0xf]
    %v2175 = vld [vmem:[#allocation8 + $0xc8] sm:$0xf]
    %v2176 = vld [vmem:[#allocation8 + $0xcc] sm:$0xf]
    %v2177 = vld [vmem:[#allocation8 + $0xd0] sm:$0xf]
    %v2178 = vld [vmem:[#allocation8 + $0xd4] sm:$0xf]
    %v2179 = vld [vmem:[#allocation8 + $0xd8] sm:$0xf]
    %v2180 = vld [vmem:[#allocation8 + $0xdc] sm:$0xf]
    %v2181 = vld [vmem:[#allocation8 + $0xe0] sm:$0xf]
    %v2182 = vld [vmem:[#allocation8 + $0xe4] sm:$0xf]
    %v2183 = vld [vmem:[#allocation8 + $0xe8] sm:$0xf]
    %v2184 = vld [vmem:[#allocation8 + $0xec] sm:$0xf]
    %v2185 = vld [vmem:[#allocation8 + $0xf0] sm:$0xf]
    %v2186 = vld [vmem:[#allocation8 + $0xf4] sm:$0xf]
    %v2187 = vld [vmem:[#allocation8 + $0xf8] sm:$0xf]
    %v2188 = vld [vmem:[#allocation8 + $0xfc] sm:$0xf]
    %v2205 = vunpack.c.l.b16 %v2173
    %v2206 = vunpack.c.l.b16 %v2174
    %v2207 = vunpack.c.l.b16 %v2175
    %v2208 = vunpack.c.l.b16 %v2176
    %v2209 = vunpack.c.l.b16 %v2177
    %v2210 = vunpack.c.l.b16 %v2178
    %v2211 = vunpack.c.l.b16 %v2179
    %v2212 = vunpack.c.l.b16 %v2180
    %v2213 = vunpack.c.l.b16 %v2181
    %v2214 = vunpack.c.l.b16 %v2182
    %v2215 = vunpack.c.l.b16 %v2183
    %v2216 = vunpack.c.l.b16 %v2184
    %v2217 = vunpack.c.l.b16 %v2185
    %v2218 = vunpack.c.l.b16 %v2186
    %v2219 = vunpack.c.l.b16 %v2187
    %v2220 = vunpack.c.l.b16 %v2188
    %v2221 = vpack.c.b16 %v2206, %v2205
    %v2222 = vpack.c.b16 %v2208, %v2207
    %v2223 = vpack.c.b16 %v2210, %v2209
    %v2224 = vpack.c.b16 %v2212, %v2211
    %v2225 = vpack.c.b16 %v2214, %v2213
    %v2226 = vpack.c.b16 %v2216, %v2215
    %v2227 = vpack.c.b16 %v2218, %v2217
    %v2228 = vpack.c.b16 %v2220, %v2219
    %2237 = vmatprep.subr.bf16.mxu0 0
    %2238 = vmatpush1.bf16.msra.mxu0 %v2228
    %2239 = vmatprep.subr.bf16.mxu0 0
    %2240 = vmatpush1.bf16.msra.mxu0 %v2227
    %2241 = vmatprep.subr.bf16.mxu0 0
    %2242 = vmatpush1.bf16.msra.mxu0 %v2226
    %2243 = vmatprep.subr.bf16.mxu0 0
    %2244 = vmatpush1.bf16.msra.mxu0 %v2225
    %2245 = vmatprep.subr.bf16.mxu0 0
    %2246 = vmatpush1.bf16.msra.mxu0 %v2224
    %2247 = vmatprep.subr.bf16.mxu0 0
    %2248 = vmatpush1.bf16.msra.mxu0 %v2223
    %2249 = vmatprep.subr.bf16.mxu0 0
    %2250 = vmatpush1.bf16.msra.mxu0 %v2222
    %2251 = vmatprep.subr.bf16.mxu0 0
    %2252 = vmatpush1.bf16.msra.mxu0 %v2221
    %2253 = vmatprep.subr.bf16.mxu0 0
    %2254 = vmatpush2.bf16.msra.mxu0 0
    %2255 = vmatprep.subr.bf16.mxu0 0
    %2256 = vmatpush2.bf16.msra.mxu0 0
    %2257 = vmatprep.subr.bf16.mxu0 0
    %2258 = vmatpush2.bf16.msra.mxu0 0
    %2259 = vmatprep.subr.bf16.mxu0 0
    %2260 = vmatpush2.bf16.msra.mxu0 0
    %2261 = vmatprep.subr.bf16.mxu0 0
    %2262 = vmatpush2.bf16.msra.mxu0 0
    %2263 = vmatprep.subr.bf16.mxu0 0
    %2264 = vmatpush2.bf16.msra.mxu0 0
    %2265 = vmatprep.subr.bf16.mxu0 0
    %2266 = vmatpush2.bf16.msra.mxu0 0
    %2267 = vmatprep.subr.bf16.mxu0 0
    %2268 = vmatpush2.bf16.msra.mxu0 0
    %2269 = vmatprep.mubr.bf16.mxu0 0
    %2270 = vmatmul.mubr.bf16.gmra.mxu0 %v1834
    %v2271 = vpop.f32.mrf.mxu0
    %v2272 = vadd.f32 0.0, %v2271
    %v2273 = vpop.f32.mrf.mxu0
    %v2274 = vpop.f32.mrf.mxu0
    %v2275 = vadd.f32 0.0, %v2274
    %v2276 = vpop.f32.mrf.mxu0
    %2277 = vdwg.mxu0
    %v2278 = vadd.f32 %v2171, %v2272
    %v2279 = vadd.f32 %v2172, %v2275
    %v2280 = vld [vmem:[#allocation8 + $0x100] sm:$0xf]
    %v2281 = vld [vmem:[#allocation8 + $0x104] sm:$0xf]
    %v2282 = vld [vmem:[#allocation8 + $0x108] sm:$0xf]
    %v2283 = vld [vmem:[#allocation8 + $0x10c] sm:$0xf]
    %v2284 = vld [vmem:[#allocation8 + $0x110] sm:$0xf]
    %v2285 = vld [vmem:[#allocation8 + $0x114] sm:$0xf]
    %v2286 = vld [vmem:[#allocation8 + $0x118] sm:$0xf]
    %v2287 = vld [vmem:[#allocation8 + $0x11c] sm:$0xf]
    %v2288 = vld [vmem:[#allocation8 + $0x120] sm:$0xf]
    %v2289 = vld [vmem:[#allocation8 + $0x124] sm:$0xf]
    %v2290 = vld [vmem:[#allocation8 + $0x128] sm:$0xf]
    %v2291 = vld [vmem:[#allocation8 + $0x12c] sm:$0xf]
    %v2292 = vld [vmem:[#allocation8 + $0x130] sm:$0xf]
    %v2293 = vld [vmem:[#allocation8 + $0x134] sm:$0xf]
    %v2294 = vld [vmem:[#allocation8 + $0x138] sm:$0xf]
    %v2295 = vld [vmem:[#allocation8 + $0x13c] sm:$0xf]
    %v2312 = vunpack.c.l.b16 %v2280
    %v2313 = vunpack.c.l.b16 %v2281
    %v2314 = vunpack.c.l.b16 %v2282
    %v2315 = vunpack.c.l.b16 %v2283
    %v2316 = vunpack.c.l.b16 %v2284
    %v2317 = vunpack.c.l.b16 %v2285
    %v2318 = vunpack.c.l.b16 %v2286
    %v2319 = vunpack.c.l.b16 %v2287
    %v2320 = vunpack.c.l.b16 %v2288
    %v2321 = vunpack.c.l.b16 %v2289
    %v2322 = vunpack.c.l.b16 %v2290
    %v2323 = vunpack.c.l.b16 %v2291
    %v2324 = vunpack.c.l.b16 %v2292
    %v2325 = vunpack.c.l.b16 %v2293
    %v2326 = vunpack.c.l.b16 %v2294
    %v2327 = vunpack.c.l.b16 %v2295
    %v2328 = vpack.c.b16 %v2313, %v2312
    %v2329 = vpack.c.b16 %v2315, %v2314
    %v2330 = vpack.c.b16 %v2317, %v2316
    %v2331 = vpack.c.b16 %v2319, %v2318
    %v2332 = vpack.c.b16 %v2321, %v2320
    %v2333 = vpack.c.b16 %v2323, %v2322
    %v2334 = vpack.c.b16 %v2325, %v2324
    %v2335 = vpack.c.b16 %v2327, %v2326
    %2344 = vmatprep.subr.bf16.mxu0 0
    %2345 = vmatpush1.bf16.msra.mxu0 %v2335
    %2346 = vmatprep.subr.bf16.mxu0 0
    %2347 = vmatpush1.bf16.msra.mxu0 %v2334
    %2348 = vmatprep.subr.bf16.mxu0 0
    %2349 = vmatpush1.bf16.msra.mxu0 %v2333
    %2350 = vmatprep.subr.bf16.mxu0 0
    %2351 = vmatpush1.bf16.msra.mxu0 %v2332
    %2352 = vmatprep.subr.bf16.mxu0 0
    %2353 = vmatpush1.bf16.msra.mxu0 %v2331
    %2354 = vmatprep.subr.bf16.mxu0 0
    %2355 = vmatpush1.bf16.msra.mxu0 %v2330
    %2356 = vmatprep.subr.bf16.mxu0 0
    %2357 = vmatpush1.bf16.msra.mxu0 %v2329
    %2358 = vmatprep.subr.bf16.mxu0 0
    %2359 = vmatpush1.bf16.msra.mxu0 %v2328
    %2360 = vmatprep.subr.bf16.mxu0 0
    %2361 = vmatpush2.bf16.msra.mxu0 0
    %2362 = vmatprep.subr.bf16.mxu0 0
    %2363 = vmatpush2.bf16.msra.mxu0 0
    %2364 = vmatprep.subr.bf16.mxu0 0
    %2365 = vmatpush2.bf16.msra.mxu0 0
    %2366 = vmatprep.subr.bf16.mxu0 0
    %2367 = vmatpush2.bf16.msra.mxu0 0
    %2368 = vmatprep.subr.bf16.mxu0 0
    %2369 = vmatpush2.bf16.msra.mxu0 0
    %2370 = vmatprep.subr.bf16.mxu0 0
    %2371 = vmatpush2.bf16.msra.mxu0 0
    %2372 = vmatprep.subr.bf16.mxu0 0
    %2373 = vmatpush2.bf16.msra.mxu0 0
    %2374 = vmatprep.subr.bf16.mxu0 0
    %2375 = vmatpush2.bf16.msra.mxu0 0
    %2376 = vmatprep.mubr.bf16.mxu0 0
    %2377 = vmatmul.mubr.bf16.gmra.mxu0 %v1835
    %v2378 = vpop.f32.mrf.mxu0
    %v2379 = vadd.f32 0.0, %v2378
    %v2380 = vpop.f32.mrf.mxu0
    %v2381 = vpop.f32.mrf.mxu0
    %v2382 = vadd.f32 0.0, %v2381
    %v2383 = vpop.f32.mrf.mxu0
    %2384 = vdwg.mxu0
    %v2385 = vadd.f32 %v2278, %v2379
    %v2386 = vadd.f32 %v2279, %v2382
    %v2387 = vld [vmem:[#allocation8 + $0x140] sm:$0xf]
    %v2388 = vld [vmem:[#allocation8 + $0x144] sm:$0xf]
    %v2389 = vld [vmem:[#allocation8 + $0x148] sm:$0xf]
    %v2390 = vld [vmem:[#allocation8 + $0x14c] sm:$0xf]
    %v2391 = vld [vmem:[#allocation8 + $0x150] sm:$0xf]
    %v2392 = vld [vmem:[#allocation8 + $0x154] sm:$0xf]
    %v2393 = vld [vmem:[#allocation8 + $0x158] sm:$0xf]
    %v2394 = vld [vmem:[#allocation8 + $0x15c] sm:$0xf]
    %v2395 = vld [vmem:[#allocation8 + $0x160] sm:$0xf]
    %v2396 = vld [vmem:[#allocation8 + $0x164] sm:$0xf]
    %v2397 = vld [vmem:[#allocation8 + $0x168] sm:$0xf]
    %v2398 = vld [vmem:[#allocation8 + $0x16c] sm:$0xf]
    %v2399 = vld [vmem:[#allocation8 + $0x170] sm:$0xf]
    %v2400 = vld [vmem:[#allocation8 + $0x174] sm:$0xf]
    %v2401 = vld [vmem:[#allocation8 + $0x178] sm:$0xf]
    %v2402 = vld [vmem:[#allocation8 + $0x17c] sm:$0xf]
    %v2419 = vunpack.c.l.b16 %v2387
    %v2420 = vunpack.c.l.b16 %v2388
    %v2421 = vunpack.c.l.b16 %v2389
    %v2422 = vunpack.c.l.b16 %v2390
    %v2423 = vunpack.c.l.b16 %v2391
    %v2424 = vunpack.c.l.b16 %v2392
    %v2425 = vunpack.c.l.b16 %v2393
    %v2426 = vunpack.c.l.b16 %v2394
    %v2427 = vunpack.c.l.b16 %v2395
    %v2428 = vunpack.c.l.b16 %v2396
    %v2429 = vunpack.c.l.b16 %v2397
    %v2430 = vunpack.c.l.b16 %v2398
    %v2431 = vunpack.c.l.b16 %v2399
    %v2432 = vunpack.c.l.b16 %v2400
    %v2433 = vunpack.c.l.b16 %v2401
    %v2434 = vunpack.c.l.b16 %v2402
    %v2435 = vpack.c.b16 %v2420, %v2419
    %v2436 = vpack.c.b16 %v2422, %v2421
    %v2437 = vpack.c.b16 %v2424, %v2423
    %v2438 = vpack.c.b16 %v2426, %v2425
    %v2439 = vpack.c.b16 %v2428, %v2427
    %v2440 = vpack.c.b16 %v2430, %v2429
    %v2441 = vpack.c.b16 %v2432, %v2431
    %v2442 = vpack.c.b16 %v2434, %v2433
    %2451 = vmatprep.subr.bf16.mxu0 0
    %2452 = vmatpush1.bf16.msra.mxu0 %v2442
    %2453 = vmatprep.subr.bf16.mxu0 0
    %2454 = vmatpush1.bf16.msra.mxu0 %v2441
    %2455 = vmatprep.subr.bf16.mxu0 0
    %2456 = vmatpush1.bf16.msra.mxu0 %v2440
    %2457 = vmatprep.subr.bf16.mxu0 0
    %2458 = vmatpush1.bf16.msra.mxu0 %v2439
    %2459 = vmatprep.subr.bf16.mxu0 0
    %2460 = vmatpush1.bf16.msra.mxu0 %v2438
    %2461 = vmatprep.subr.bf16.mxu0 0
    %2462 = vmatpush1.bf16.msra.mxu0 %v2437
    %2463 = vmatprep.subr.bf16.mxu0 0
    %2464 = vmatpush1.bf16.msra.mxu0 %v2436
    %2465 = vmatprep.subr.bf16.mxu0 0
    %2466 = vmatpush1.bf16.msra.mxu0 %v2435
    %2467 = vmatprep.subr.bf16.mxu0 0
    %2468 = vmatpush2.bf16.msra.mxu0 0
    %2469 = vmatprep.subr.bf16.mxu0 0
    %2470 = vmatpush2.bf16.msra.mxu0 0
    %2471 = vmatprep.subr.bf16.mxu0 0
    %2472 = vmatpush2.bf16.msra.mxu0 0
    %2473 = vmatprep.subr.bf16.mxu0 0
    %2474 = vmatpush2.bf16.msra.mxu0 0
    %2475 = vmatprep.subr.bf16.mxu0 0
    %2476 = vmatpush2.bf16.msra.mxu0 0
    %2477 = vmatprep.subr.bf16.mxu0 0
    %2478 = vmatpush2.bf16.msra.mxu0 0
    %2479 = vmatprep.subr.bf16.mxu0 0
    %2480 = vmatpush2.bf16.msra.mxu0 0
    %2481 = vmatprep.subr.bf16.mxu0 0
    %2482 = vmatpush2.bf16.msra.mxu0 0
    %2483 = vmatprep.mubr.bf16.mxu0 0
    %2484 = vmatmul.mubr.bf16.gmra.mxu0 %v1726
    %v2485 = vpop.f32.mrf.mxu0
    %v2486 = vadd.f32 0.0, %v2485
    %v2487 = vpop.f32.mrf.mxu0
    %v2488 = vpop.f32.mrf.mxu0
    %v2489 = vadd.f32 0.0, %v2488
    %v2490 = vpop.f32.mrf.mxu0
    %2491 = vdwg.mxu0
    %v2492 = vadd.f32 %v2385, %v2486
    %v2493 = vadd.f32 %v2386, %v2489
    %v2494 = vld [vmem:[%s10 + $0x4] sm:$0x1]
    %v2495 = vlaneseq
    %v2496 = vshrl.u32 %v2495, 7
    %v2497 = vsub.s32 0, %v2496
    %v2498 = vrot.slane %v2494, %v2497
    %v2499 = vadd.f32 %v2492, %v2498
    %v2500 = vadd.f32 %v2493, %v2498
    %v2501 = vmax.f32 %v2499, 0.0
    %v2502 = vmax.f32 %v2500, 0.0
    %v2503 = vpack.c.bf16 %v2502, %v2501
    %v2505 = vlaneseq
    %v2506 = vshrl.u32 %v2505, 7
    %v2507 = vsub.s32 0, %v2506
    %v2508 = vrot.slane %v1855, %v2507
    %v2526 = vunpack.c.l.b16 %v1839
    %v2527 = vunpack.c.l.b16 %v1840
    %v2528 = vunpack.c.l.b16 %v1841
    %v2529 = vunpack.c.l.b16 %v1842
    %v2530 = vunpack.c.l.b16 %v1843
    %v2531 = vunpack.c.l.b16 %v1844
    %v2532 = vunpack.c.l.b16 %v1845
    %v2533 = vunpack.c.l.b16 %v1846
    %v2534 = vunpack.c.l.b16 %v1847
    %v2535 = vunpack.c.l.b16 %v1848
    %v2536 = vunpack.c.l.b16 %v1849
    %v2537 = vunpack.c.l.b16 %v1850
    %v2538 = vunpack.c.l.b16 %v1851
    %v2539 = vunpack.c.l.b16 %v1852
    %v2540 = vunpack.c.l.b16 %v1853
    %v2541 = vunpack.c.l.b16 %v1854
    %v2542 = vpack.c.b16 %v2527, %v2526
    %v2543 = vpack.c.b16 %v2529, %v2528
    %v2544 = vpack.c.b16 %v2531, %v2530
    %v2545 = vpack.c.b16 %v2533, %v2532
    %v2546 = vpack.c.b16 %v2535, %v2534
    %v2547 = vpack.c.b16 %v2537, %v2536
    %v2548 = vpack.c.b16 %v2539, %v2538
    %v2549 = vpack.c.b16 %v2541, %v2540
    %2558 = vmatprep.subr.bf16.mxu0 0
    %2559 = vmatpush1.bf16.msra.mxu0 %v2549
    %2560 = vmatprep.subr.bf16.mxu0 0
    %2561 = vmatpush1.bf16.msra.mxu0 %v2548
    %2562 = vmatprep.subr.bf16.mxu0 0
    %2563 = vmatpush1.bf16.msra.mxu0 %v2547
    %2564 = vmatprep.subr.bf16.mxu0 0
    %2565 = vmatpush1.bf16.msra.mxu0 %v2546
    %2566 = vmatprep.subr.bf16.mxu0 0
    %2567 = vmatpush1.bf16.msra.mxu0 %v2545
    %2568 = vmatprep.subr.bf16.mxu0 0
    %2569 = vmatpush1.bf16.msra.mxu0 %v2544
    %2570 = vmatprep.subr.bf16.mxu0 0
    %2571 = vmatpush1.bf16.msra.mxu0 %v2543
    %2572 = vmatprep.subr.bf16.mxu0 0
    %2573 = vmatpush1.bf16.msra.mxu0 %v2542
    %2574 = vmatprep.subr.bf16.mxu0 0
    %2575 = vmatpush2.bf16.msra.mxu0 0
    %2576 = vmatprep.subr.bf16.mxu0 0
    %2577 = vmatpush2.bf16.msra.mxu0 0
    %2578 = vmatprep.subr.bf16.mxu0 0
    %2579 = vmatpush2.bf16.msra.mxu0 0
    %2580 = vmatprep.subr.bf16.mxu0 0
    %2581 = vmatpush2.bf16.msra.mxu0 0
    %2582 = vmatprep.subr.bf16.mxu0 0
    %2583 = vmatpush2.bf16.msra.mxu0 0
    %2584 = vmatprep.subr.bf16.mxu0 0
    %2585 = vmatpush2.bf16.msra.mxu0 0
    %2586 = vmatprep.subr.bf16.mxu0 0
    %2587 = vmatpush2.bf16.msra.mxu0 0
    %2588 = vmatprep.subr.bf16.mxu0 0
    %2589 = vmatpush2.bf16.msra.mxu0 0
    %2590 = vmatprep.mubr.bf16.mxu0 0
    %2591 = vmatmul.mubr.bf16.gmra.mxu0 %v2503
    %v2592 = vpop.f32.mrf.mxu0
    %v2593 = vadd.f32 %v2508, %v2592
    %v2594 = vpop.f32.mrf.mxu0
    %v2595 = vpop.f32.mrf.mxu0
    %v2596 = vadd.f32 %v2508, %v2595
    %v2597 = vpop.f32.mrf.mxu0
    %2598 = vdwg.mxu0
    %vm2599 = vcmask 64512
    %2600 = vst.msk [vmem:[%s13] sm:$0xff] %vm2599, %v2593
    %2601 = vst.msk [vmem:[%s13 + $0x8] sm:$0xff] %vm2599, %v2596
    %v2602 = vld [vmem:[#allocation10] sm:$0xf]
    %v2603 = vld [vmem:[#allocation10 + $0x4] sm:$0xf]
    %v2604 = vld [vmem:[#allocation10 + $0x8] sm:$0xf]
    %v2605 = vld [vmem:[#allocation10 + $0xc] sm:$0xf]
    %v2606 = vld [vmem:[#allocation10 + $0x10] sm:$0xf]
    %v2607 = vld [vmem:[#allocation10 + $0x14] sm:$0xf]
    %v2608 = vld [vmem:[#allocation10 + $0x18] sm:$0xf]
    %v2609 = vld [vmem:[#allocation10 + $0x1c] sm:$0xf]
    %v2610 = vld [vmem:[#allocation10 + $0x20] sm:$0xf]
    %v2611 = vld [vmem:[#allocation10 + $0x24] sm:$0xf]
    %v2612 = vld [vmem:[#allocation10 + $0x28] sm:$0xf]
    %v2613 = vld [vmem:[#allocation10 + $0x2c] sm:$0xf]
    %v2614 = vld [vmem:[#allocation10 + $0x30] sm:$0xf]
    %v2615 = vld [vmem:[#allocation10 + $0x34] sm:$0xf]
    %v2616 = vld [vmem:[#allocation10 + $0x38] sm:$0xf]
    %v2617 = vld [vmem:[#allocation10 + $0x3c] sm:$0xf]
    %v2618 = vld [vmem:[#allocation10 + $0x40] sm:$0xf]
    %v2619 = vld [vmem:[#allocation10 + $0x44] sm:$0xf]
    %v2620 = vld [vmem:[#allocation10 + $0x48] sm:$0xf]
    %v2621 = vld [vmem:[#allocation10 + $0x4c] sm:$0xf]
    %v2622 = vld [vmem:[#allocation10 + $0x50] sm:$0xf]
    %v2623 = vld [vmem:[#allocation10 + $0x54] sm:$0xf]
    %v2624 = vld [vmem:[#allocation10 + $0x58] sm:$0xf]
    %v2625 = vld [vmem:[#allocation10 + $0x5c] sm:$0xf]
    %v2626 = vld [vmem:[#allocation10 + $0x60] sm:$0xf]
    %v2627 = vld [vmem:[#allocation10 + $0x64] sm:$0xf]
    %v2628 = vld [vmem:[#allocation10 + $0x68] sm:$0xf]
    %v2629 = vld [vmem:[#allocation10 + $0x6c] sm:$0xf]
    %v2630 = vld [vmem:[#allocation10 + $0x70] sm:$0xf]
    %v2631 = vld [vmem:[#allocation10 + $0x74] sm:$0xf]
    %v2632 = vld [vmem:[#allocation10 + $0x78] sm:$0xf]
    %v2633 = vld [vmem:[#allocation10 + $0x7c] sm:$0xf]
    %v2650 = vunpack.c.l.b16 %v2618
    %v2651 = vunpack.c.l.b16 %v2619
    %v2652 = vunpack.c.l.b16 %v2620
    %v2653 = vunpack.c.l.b16 %v2621
    %v2654 = vunpack.c.l.b16 %v2622
    %v2655 = vunpack.c.l.b16 %v2623
    %v2656 = vunpack.c.l.b16 %v2624
    %v2657 = vunpack.c.l.b16 %v2625
    %v2658 = vunpack.c.l.b16 %v2626
    %v2659 = vunpack.c.l.b16 %v2627
    %v2660 = vunpack.c.l.b16 %v2628
    %v2661 = vunpack.c.l.b16 %v2629
    %v2662 = vunpack.c.l.b16 %v2630
    %v2663 = vunpack.c.l.b16 %v2631
    %v2664 = vunpack.c.l.b16 %v2632
    %v2665 = vunpack.c.l.b16 %v2633
    %v2666 = vpack.c.b16 %v2651, %v2650
    %v2667 = vpack.c.b16 %v2653, %v2652
    %v2668 = vpack.c.b16 %v2655, %v2654
    %v2669 = vpack.c.b16 %v2657, %v2656
    %v2670 = vpack.c.b16 %v2659, %v2658
    %v2671 = vpack.c.b16 %v2661, %v2660
    %v2672 = vpack.c.b16 %v2663, %v2662
    %v2673 = vpack.c.b16 %v2665, %v2664
    %2682 = vmatprep.subr.bf16.mxu0 0
    %2683 = vmatpush1.bf16.msra.mxu0 %v2673
    %2684 = vmatprep.subr.bf16.mxu0 0
    %2685 = vmatpush1.bf16.msra.mxu0 %v2672
    %2686 = vmatprep.subr.bf16.mxu0 0
    %2687 = vmatpush1.bf16.msra.mxu0 %v2671
    %2688 = vmatprep.subr.bf16.mxu0 0
    %2689 = vmatpush1.bf16.msra.mxu0 %v2670
    %2690 = vmatprep.subr.bf16.mxu0 0
    %2691 = vmatpush1.bf16.msra.mxu0 %v2669
    %2692 = vmatprep.subr.bf16.mxu0 0
    %2693 = vmatpush1.bf16.msra.mxu0 %v2668
    %2694 = vmatprep.subr.bf16.mxu0 0
    %2695 = vmatpush1.bf16.msra.mxu0 %v2667
    %2696 = vmatprep.subr.bf16.mxu0 0
    %2697 = vmatpush1.bf16.msra.mxu0 %v2666
    %2698 = vmatprep.subr.bf16.mxu0 0
    %2699 = vmatpush2.bf16.msra.mxu0 0
    %2700 = vmatprep.subr.bf16.mxu0 0
    %2701 = vmatpush2.bf16.msra.mxu0 0
    %2702 = vmatprep.subr.bf16.mxu0 0
    %2703 = vmatpush2.bf16.msra.mxu0 0
    %2704 = vmatprep.subr.bf16.mxu0 0
    %2705 = vmatpush2.bf16.msra.mxu0 0
    %2706 = vmatprep.subr.bf16.mxu0 0
    %2707 = vmatpush2.bf16.msra.mxu0 0
    %2708 = vmatprep.subr.bf16.mxu0 0
    %2709 = vmatpush2.bf16.msra.mxu0 0
    %2710 = vmatprep.subr.bf16.mxu0 0
    %2711 = vmatpush2.bf16.msra.mxu0 0
    %2712 = vmatprep.subr.bf16.mxu0 0
    %2713 = vmatpush2.bf16.msra.mxu0 0
    %2714 = vmatprep.mubr.bf16.mxu0 0
    %2715 = vmatmul.mubr.bf16.gmra.mxu0 %v1727
    %v2716 = vpop.f32.mrf.mxu0
    %v2717 = vadd.f32 0.0, %v2716
    %v2718 = vpop.f32.mrf.mxu0
    %v2719 = vpop.f32.mrf.mxu0
    %v2720 = vadd.f32 0.0, %v2719
    %v2721 = vpop.f32.mrf.mxu0
    %2722 = vdwg.mxu0
    %v2739 = vunpack.c.l.b16 %v2602
    %v2740 = vunpack.c.l.b16 %v2603
    %v2741 = vunpack.c.l.b16 %v2604
    %v2742 = vunpack.c.l.b16 %v2605
    %v2743 = vunpack.c.l.b16 %v2606
    %v2744 = vunpack.c.l.b16 %v2607
    %v2745 = vunpack.c.l.b16 %v2608
    %v2746 = vunpack.c.l.b16 %v2609
    %v2747 = vunpack.c.l.b16 %v2610
    %v2748 = vunpack.c.l.b16 %v2611
    %v2749 = vunpack.c.l.b16 %v2612
    %v2750 = vunpack.c.l.b16 %v2613
    %v2751 = vunpack.c.l.b16 %v2614
    %v2752 = vunpack.c.l.b16 %v2615
    %v2753 = vunpack.c.l.b16 %v2616
    %v2754 = vunpack.c.l.b16 %v2617
    %v2755 = vpack.c.b16 %v2740, %v2739
    %v2756 = vpack.c.b16 %v2742, %v2741
    %v2757 = vpack.c.b16 %v2744, %v2743
    %v2758 = vpack.c.b16 %v2746, %v2745
    %v2759 = vpack.c.b16 %v2748, %v2747
    %v2760 = vpack.c.b16 %v2750, %v2749
    %v2761 = vpack.c.b16 %v2752, %v2751
    %v2762 = vpack.c.b16 %v2754, %v2753
    %2771 = vmatprep.subr.bf16.mxu0 0
    %2772 = vmatpush1.bf16.msra.mxu0 %v2762
    %2773 = vmatprep.subr.bf16.mxu0 0
    %2774 = vmatpush1.bf16.msra.mxu0 %v2761
    %2775 = vmatprep.subr.bf16.mxu0 0
    %2776 = vmatpush1.bf16.msra.mxu0 %v2760
    %2777 = vmatprep.subr.bf16.mxu0 0
    %2778 = vmatpush1.bf16.msra.mxu0 %v2759
    %2779 = vmatprep.subr.bf16.mxu0 0
    %2780 = vmatpush1.bf16.msra.mxu0 %v2758
    %2781 = vmatprep.subr.bf16.mxu0 0
    %2782 = vmatpush1.bf16.msra.mxu0 %v2757
    %2783 = vmatprep.subr.bf16.mxu0 0
    %2784 = vmatpush1.bf16.msra.mxu0 %v2756
    %2785 = vmatprep.subr.bf16.mxu0 0
    %2786 = vmatpush1.bf16.msra.mxu0 %v2755
    %2787 = vmatprep.subr.bf16.mxu0 0
    %2788 = vmatpush2.bf16.msra.mxu0 0
    %2789 = vmatprep.subr.bf16.mxu0 0
    %2790 = vmatpush2.bf16.msra.mxu0 0
    %2791 = vmatprep.subr.bf16.mxu0 0
    %2792 = vmatpush2.bf16.msra.mxu0 0
    %2793 = vmatprep.subr.bf16.mxu0 0
    %2794 = vmatpush2.bf16.msra.mxu0 0
    %2795 = vmatprep.subr.bf16.mxu0 0
    %2796 = vmatpush2.bf16.msra.mxu0 0
    %2797 = vmatprep.subr.bf16.mxu0 0
    %2798 = vmatpush2.bf16.msra.mxu0 0
    %2799 = vmatprep.subr.bf16.mxu0 0
    %2800 = vmatpush2.bf16.msra.mxu0 0
    %2801 = vmatprep.subr.bf16.mxu0 0
    %2802 = vmatpush2.bf16.msra.mxu0 0
    %2803 = vmatprep.mubr.bf16.mxu0 0
    %2804 = vmatmul.mubr.bf16.gmra.mxu0 %v1836
    %v2805 = vpop.f32.mrf.mxu0
    %v2806 = vadd.f32 %v2717, %v2805
    %v2807 = vpop.f32.mrf.mxu0
    %v2808 = vpop.f32.mrf.mxu0
    %v2809 = vadd.f32 %v2720, %v2808
    %v2810 = vpop.f32.mrf.mxu0
    %2811 = vdwg.mxu0
    %v2812 = vld [vmem:[%s10 + $0x5] sm:$0x1]
    %v2813 = vlaneseq
    %v2814 = vshrl.u32 %v2813, 7
    %v2815 = vsub.s32 0, %v2814
    %v2816 = vrot.slane %v2812, %v2815
    %v2817 = vadd.f32 %v2806, %v2816
    %v2818 = vadd.f32 %v2809, %v2816
    %v2819 = vmax.f32 %v2817, 0.0
    %v2820 = vmax.f32 %v2818, 0.0
    %v2821 = vpack.c.bf16 %v2820, %v2819
    %2822 = vmatprep.subr.bf16.mxu0 0
    %2823 = vmatpush1.bf16.msra.mxu0 %v2549
    %2824 = vmatprep.subr.bf16.mxu0 0
    %2825 = vmatpush1.bf16.msra.mxu0 %v2548
    %2826 = vmatprep.subr.bf16.mxu0 0
    %2827 = vmatpush1.bf16.msra.mxu0 %v2547
    %2828 = vmatprep.subr.bf16.mxu0 0
    %2829 = vmatpush1.bf16.msra.mxu0 %v2546
    %2830 = vmatprep.subr.bf16.mxu0 0
    %2831 = vmatpush1.bf16.msra.mxu0 %v2545
    %2832 = vmatprep.subr.bf16.mxu0 0
    %2833 = vmatpush1.bf16.msra.mxu0 %v2544
    %2834 = vmatprep.subr.bf16.mxu0 0
    %2835 = vmatpush1.bf16.msra.mxu0 %v2543
    %2836 = vmatprep.subr.bf16.mxu0 0
    %2837 = vmatpush1.bf16.msra.mxu0 %v2542
    %2838 = vmatprep.subr.bf16.mxu0 0
    %2839 = vmatpush2.bf16.msra.mxu0 0
    %2840 = vmatprep.subr.bf16.mxu0 0
    %2841 = vmatpush2.bf16.msra.mxu0 0
    %2842 = vmatprep.subr.bf16.mxu0 0
    %2843 = vmatpush2.bf16.msra.mxu0 0
    %2844 = vmatprep.subr.bf16.mxu0 0
    %2845 = vmatpush2.bf16.msra.mxu0 0
    %2846 = vmatprep.subr.bf16.mxu0 0
    %2847 = vmatpush2.bf16.msra.mxu0 0
    %2848 = vmatprep.subr.bf16.mxu0 0
    %2849 = vmatpush2.bf16.msra.mxu0 0
    %2850 = vmatprep.subr.bf16.mxu0 0
    %2851 = vmatpush2.bf16.msra.mxu0 0
    %2852 = vmatprep.subr.bf16.mxu0 0
    %2853 = vmatpush2.bf16.msra.mxu0 0
    %2854 = vmatprep.mubr.bf16.mxu0 0
    %2855 = vmatmul.mubr.bf16.gmra.mxu0 %v2821
    %v2856 = vpop.f32.mrf.mxu0
    %v2857 = vadd.f32 %v2508, %v2856
    %v2858 = vpop.f32.mrf.mxu0
    %v2859 = vpop.f32.mrf.mxu0
    %v2860 = vadd.f32 %v2508, %v2859
    %v2861 = vpop.f32.mrf.mxu0
    %2862 = vdwg.mxu0
    %2863 = vst.msk [vmem:[%s13 + $0x10] sm:$0xff] %vm2599, %v2857
    %2864 = vst.msk [vmem:[%s13 + $0x18] sm:$0xff] %vm2599, %v2860
    %v2865 = vld [vmem:[#allocation11] sm:$0xf]
    %v2866 = vld [vmem:[#allocation11 + $0x4] sm:$0xf]
    %v2867 = vld [vmem:[#allocation11 + $0x8] sm:$0xf]
    %v2868 = vld [vmem:[#allocation11 + $0xc] sm:$0xf]
    %v2869 = vld [vmem:[#allocation11 + $0x10] sm:$0xf]
    %v2870 = vld [vmem:[#allocation11 + $0x14] sm:$0xf]
    %v2871 = vld [vmem:[#allocation11 + $0x18] sm:$0xf]
    %v2872 = vld [vmem:[#allocation11 + $0x1c] sm:$0xf]
    %v2873 = vld [vmem:[#allocation11 + $0x20] sm:$0xf]
    %v2874 = vld [vmem:[#allocation11 + $0x24] sm:$0xf]
    %v2875 = vld [vmem:[#allocation11 + $0x28] sm:$0xf]
    %v2876 = vld [vmem:[#allocation11 + $0x2c] sm:$0xf]
    %v2877 = vld [vmem:[#allocation11 + $0x30] sm:$0xf]
    %v2878 = vld [vmem:[#allocation11 + $0x34] sm:$0xf]
    %v2879 = vld [vmem:[#allocation11 + $0x38] sm:$0xf]
    %v2880 = vld [vmem:[#allocation11 + $0x3c] sm:$0xf]
    %v2881 = vld [vmem:[#allocation11 + $0x40] sm:$0xf]
    %v2882 = vld [vmem:[#allocation11 + $0x44] sm:$0xf]
    %v2883 = vld [vmem:[#allocation11 + $0x48] sm:$0xf]
    %v2884 = vld [vmem:[#allocation11 + $0x4c] sm:$0xf]
    %v2885 = vld [vmem:[#allocation11 + $0x50] sm:$0xf]
    %v2886 = vld [vmem:[#allocation11 + $0x54] sm:$0xf]
    %v2887 = vld [vmem:[#allocation11 + $0x58] sm:$0xf]
    %v2888 = vld [vmem:[#allocation11 + $0x5c] sm:$0xf]
    %v2889 = vld [vmem:[#allocation11 + $0x60] sm:$0xf]
    %v2890 = vld [vmem:[#allocation11 + $0x64] sm:$0xf]
    %v2891 = vld [vmem:[#allocation11 + $0x68] sm:$0xf]
    %v2892 = vld [vmem:[#allocation11 + $0x6c] sm:$0xf]
    %v2893 = vld [vmem:[#allocation11 + $0x70] sm:$0xf]
    %v2894 = vld [vmem:[#allocation11 + $0x74] sm:$0xf]
    %v2895 = vld [vmem:[#allocation11 + $0x78] sm:$0xf]
    %v2896 = vld [vmem:[#allocation11 + $0x7c] sm:$0xf]
    %v2913 = vunpack.c.l.b16 %v2881
    %v2914 = vunpack.c.l.b16 %v2882
    %v2915 = vunpack.c.l.b16 %v2883
    %v2916 = vunpack.c.l.b16 %v2884
    %v2917 = vunpack.c.l.b16 %v2885
    %v2918 = vunpack.c.l.b16 %v2886
    %v2919 = vunpack.c.l.b16 %v2887
    %v2920 = vunpack.c.l.b16 %v2888
    %v2921 = vunpack.c.l.b16 %v2889
    %v2922 = vunpack.c.l.b16 %v2890
    %v2923 = vunpack.c.l.b16 %v2891
    %v2924 = vunpack.c.l.b16 %v2892
    %v2925 = vunpack.c.l.b16 %v2893
    %v2926 = vunpack.c.l.b16 %v2894
    %v2927 = vunpack.c.l.b16 %v2895
    %v2928 = vunpack.c.l.b16 %v2896
    %v2929 = vpack.c.b16 %v2914, %v2913
    %v2930 = vpack.c.b16 %v2916, %v2915
    %v2931 = vpack.c.b16 %v2918, %v2917
    %v2932 = vpack.c.b16 %v2920, %v2919
    %v2933 = vpack.c.b16 %v2922, %v2921
    %v2934 = vpack.c.b16 %v2924, %v2923
    %v2935 = vpack.c.b16 %v2926, %v2925
    %v2936 = vpack.c.b16 %v2928, %v2927
    %2945 = vmatprep.subr.bf16.mxu0 0
    %2946 = vmatpush1.bf16.msra.mxu0 %v2936
    %2947 = vmatprep.subr.bf16.mxu0 0
    %2948 = vmatpush1.bf16.msra.mxu0 %v2935
    %2949 = vmatprep.subr.bf16.mxu0 0
    %2950 = vmatpush1.bf16.msra.mxu0 %v2934
    %2951 = vmatprep.subr.bf16.mxu0 0
    %2952 = vmatpush1.bf16.msra.mxu0 %v2933
    %2953 = vmatprep.subr.bf16.mxu0 0
    %2954 = vmatpush1.bf16.msra.mxu0 %v2932
    %2955 = vmatprep.subr.bf16.mxu0 0
    %2956 = vmatpush1.bf16.msra.mxu0 %v2931
    %2957 = vmatprep.subr.bf16.mxu0 0
    %2958 = vmatpush1.bf16.msra.mxu0 %v2930
    %2959 = vmatprep.subr.bf16.mxu0 0
    %2960 = vmatpush1.bf16.msra.mxu0 %v2929
    %2961 = vmatprep.subr.bf16.mxu0 0
    %2962 = vmatpush2.bf16.msra.mxu0 0
    %2963 = vmatprep.subr.bf16.mxu0 0
    %2964 = vmatpush2.bf16.msra.mxu0 0
    %2965 = vmatprep.subr.bf16.mxu0 0
    %2966 = vmatpush2.bf16.msra.mxu0 0
    %2967 = vmatprep.subr.bf16.mxu0 0
    %2968 = vmatpush2.bf16.msra.mxu0 0
    %2969 = vmatprep.subr.bf16.mxu0 0
    %2970 = vmatpush2.bf16.msra.mxu0 0
    %2971 = vmatprep.subr.bf16.mxu0 0
    %2972 = vmatpush2.bf16.msra.mxu0 0
    %2973 = vmatprep.subr.bf16.mxu0 0
    %2974 = vmatpush2.bf16.msra.mxu0 0
    %2975 = vmatprep.subr.bf16.mxu0 0
    %2976 = vmatpush2.bf16.msra.mxu0 0
    %2977 = vmatprep.mubr.bf16.mxu0 0
    %2978 = vmatmul.mubr.bf16.gmra.mxu0 %v1728
    %v2979 = vpop.f32.mrf.mxu0
    %v2980 = vadd.f32 0.0, %v2979
    %v2981 = vpop.f32.mrf.mxu0
    %v2982 = vpop.f32.mrf.mxu0
    %v2983 = vadd.f32 0.0, %v2982
    %v2984 = vpop.f32.mrf.mxu0
    %2985 = vdwg.mxu0
    %v3002 = vunpack.c.l.b16 %v2865
    %v3003 = vunpack.c.l.b16 %v2866
    %v3004 = vunpack.c.l.b16 %v2867
    %v3005 = vunpack.c.l.b16 %v2868
    %v3006 = vunpack.c.l.b16 %v2869
    %v3007 = vunpack.c.l.b16 %v2870
    %v3008 = vunpack.c.l.b16 %v2871
    %v3009 = vunpack.c.l.b16 %v2872
    %v3010 = vunpack.c.l.b16 %v2873
    %v3011 = vunpack.c.l.b16 %v2874
    %v3012 = vunpack.c.l.b16 %v2875
    %v3013 = vunpack.c.l.b16 %v2876
    %v3014 = vunpack.c.l.b16 %v2877
    %v3015 = vunpack.c.l.b16 %v2878
    %v3016 = vunpack.c.l.b16 %v2879
    %v3017 = vunpack.c.l.b16 %v2880
    %v3018 = vpack.c.b16 %v3003, %v3002
    %v3019 = vpack.c.b16 %v3005, %v3004
    %v3020 = vpack.c.b16 %v3007, %v3006
    %v3021 = vpack.c.b16 %v3009, %v3008
    %v3022 = vpack.c.b16 %v3011, %v3010
    %v3023 = vpack.c.b16 %v3013, %v3012
    %v3024 = vpack.c.b16 %v3015, %v3014
    %v3025 = vpack.c.b16 %v3017, %v3016
    %3034 = vmatprep.subr.bf16.mxu0 0
    %3035 = vmatpush1.bf16.msra.mxu0 %v3025
    %3036 = vmatprep.subr.bf16.mxu0 0
    %3037 = vmatpush1.bf16.msra.mxu0 %v3024
    %3038 = vmatprep.subr.bf16.mxu0 0
    %3039 = vmatpush1.bf16.msra.mxu0 %v3023
    %3040 = vmatprep.subr.bf16.mxu0 0
    %3041 = vmatpush1.bf16.msra.mxu0 %v3022
    %3042 = vmatprep.subr.bf16.mxu0 0
    %3043 = vmatpush1.bf16.msra.mxu0 %v3021
    %3044 = vmatprep.subr.bf16.mxu0 0
    %3045 = vmatpush1.bf16.msra.mxu0 %v3020
    %3046 = vmatprep.subr.bf16.mxu0 0
    %3047 = vmatpush1.bf16.msra.mxu0 %v3019
    %3048 = vmatprep.subr.bf16.mxu0 0
    %3049 = vmatpush1.bf16.msra.mxu0 %v3018
    %3050 = vmatprep.subr.bf16.mxu0 0
    %3051 = vmatpush2.bf16.msra.mxu0 0
    %3052 = vmatprep.subr.bf16.mxu0 0
    %3053 = vmatpush2.bf16.msra.mxu0 0
    %3054 = vmatprep.subr.bf16.mxu0 0
    %3055 = vmatpush2.bf16.msra.mxu0 0
    %3056 = vmatprep.subr.bf16.mxu0 0
    %3057 = vmatpush2.bf16.msra.mxu0 0
    %3058 = vmatprep.subr.bf16.mxu0 0
    %3059 = vmatpush2.bf16.msra.mxu0 0
    %3060 = vmatprep.subr.bf16.mxu0 0
    %3061 = vmatpush2.bf16.msra.mxu0 0
    %3062 = vmatprep.subr.bf16.mxu0 0
    %3063 = vmatpush2.bf16.msra.mxu0 0
    %3064 = vmatprep.subr.bf16.mxu0 0
    %3065 = vmatpush2.bf16.msra.mxu0 0
    %3066 = vmatprep.mubr.bf16.mxu0 0
    %3067 = vmatmul.mubr.bf16.gmra.mxu0 %v1837
    %v3068 = vpop.f32.mrf.mxu0
    %v3069 = vadd.f32 %v2980, %v3068
    %v3070 = vpop.f32.mrf.mxu0
    %v3071 = vpop.f32.mrf.mxu0
    %v3072 = vadd.f32 %v2983, %v3071
    %v3073 = vpop.f32.mrf.mxu0
    %3074 = vdwg.mxu0
    %v3075 = vld [vmem:[%s10 + $0x6] sm:$0x1]
    %v3076 = vlaneseq
    %v3077 = vshrl.u32 %v3076, 7
    %v3078 = vsub.s32 0, %v3077
    %v3079 = vrot.slane %v3075, %v3078
    %v3080 = vadd.f32 %v3069, %v3079
    %v3081 = vadd.f32 %v3072, %v3079
    %v3082 = vmax.f32 %v3080, 0.0
    %v3083 = vmax.f32 %v3081, 0.0
    %v3084 = vpack.c.bf16 %v3083, %v3082
    %3085 = vmatprep.subr.bf16.mxu0 0
    %3086 = vmatpush1.bf16.msra.mxu0 %v2549
    %3087 = vmatprep.subr.bf16.mxu0 0
    %3088 = vmatpush1.bf16.msra.mxu0 %v2548
    %3089 = vmatprep.subr.bf16.mxu0 0
    %3090 = vmatpush1.bf16.msra.mxu0 %v2547
    %3091 = vmatprep.subr.bf16.mxu0 0
    %3092 = vmatpush1.bf16.msra.mxu0 %v2546
    %3093 = vmatprep.subr.bf16.mxu0 0
    %3094 = vmatpush1.bf16.msra.mxu0 %v2545
    %3095 = vmatprep.subr.bf16.mxu0 0
    %3096 = vmatpush1.bf16.msra.mxu0 %v2544
    %3097 = vmatprep.subr.bf16.mxu0 0
    %3098 = vmatpush1.bf16.msra.mxu0 %v2543
    %3099 = vmatprep.subr.bf16.mxu0 0
    %3100 = vmatpush1.bf16.msra.mxu0 %v2542
    %3101 = vmatprep.subr.bf16.mxu0 0
    %3102 = vmatpush2.bf16.msra.mxu0 0
    %3103 = vmatprep.subr.bf16.mxu0 0
    %3104 = vmatpush2.bf16.msra.mxu0 0
    %3105 = vmatprep.subr.bf16.mxu0 0
    %3106 = vmatpush2.bf16.msra.mxu0 0
    %3107 = vmatprep.subr.bf16.mxu0 0
    %3108 = vmatpush2.bf16.msra.mxu0 0
    %3109 = vmatprep.subr.bf16.mxu0 0
    %3110 = vmatpush2.bf16.msra.mxu0 0
    %3111 = vmatprep.subr.bf16.mxu0 0
    %3112 = vmatpush2.bf16.msra.mxu0 0
    %3113 = vmatprep.subr.bf16.mxu0 0
    %3114 = vmatpush2.bf16.msra.mxu0 0
    %3115 = vmatprep.subr.bf16.mxu0 0
    %3116 = vmatpush2.bf16.msra.mxu0 0
    %3117 = vmatprep.mubr.bf16.mxu0 0
    %3118 = vmatmul.mubr.bf16.gmra.mxu0 %v3084
    %v3119 = vpop.f32.mrf.mxu0
    %v3120 = vadd.f32 %v2508, %v3119
    %v3121 = vpop.f32.mrf.mxu0
    %v3122 = vpop.f32.mrf.mxu0
    %v3123 = vadd.f32 %v2508, %v3122
    %v3124 = vpop.f32.mrf.mxu0
    %3125 = vdwg.mxu0
    %3126 = vst.msk [vmem:[%s13 + $0x20] sm:$0xff] %vm2599, %v3120
    %3127 = vst.msk [vmem:[%s13 + $0x28] sm:$0xff] %vm2599, %v3123
    %v3128 = vld [vmem:[#allocation13] sm:$0xf]
    %v3129 = vld [vmem:[#allocation13 + $0x4] sm:$0xf]
    %v3130 = vld [vmem:[#allocation13 + $0x8] sm:$0xf]
    %v3131 = vld [vmem:[#allocation13 + $0xc] sm:$0xf]
    %v3132 = vld [vmem:[#allocation13 + $0x10] sm:$0xf]
    %v3133 = vld [vmem:[#allocation13 + $0x14] sm:$0xf]
    %v3134 = vld [vmem:[#allocation13 + $0x18] sm:$0xf]
    %v3135 = vld [vmem:[#allocation13 + $0x1c] sm:$0xf]
    %v3136 = vld [vmem:[#allocation13 + $0x20] sm:$0xf]
    %v3137 = vld [vmem:[#allocation13 + $0x24] sm:$0xf]
    %v3138 = vld [vmem:[#allocation13 + $0x28] sm:$0xf]
    %v3139 = vld [vmem:[#allocation13 + $0x2c] sm:$0xf]
    %v3140 = vld [vmem:[#allocation13 + $0x30] sm:$0xf]
    %v3141 = vld [vmem:[#allocation13 + $0x34] sm:$0xf]
    %v3142 = vld [vmem:[#allocation13 + $0x38] sm:$0xf]
    %v3143 = vld [vmem:[#allocation13 + $0x3c] sm:$0xf]
    %v3144 = vld [vmem:[#allocation13 + $0x40] sm:$0xf]
    %v3145 = vld [vmem:[#allocation13 + $0x44] sm:$0xf]
    %v3146 = vld [vmem:[#allocation13 + $0x48] sm:$0xf]
    %v3147 = vld [vmem:[#allocation13 + $0x4c] sm:$0xf]
    %v3148 = vld [vmem:[#allocation13 + $0x50] sm:$0xf]
    %v3149 = vld [vmem:[#allocation13 + $0x54] sm:$0xf]
    %v3150 = vld [vmem:[#allocation13 + $0x58] sm:$0xf]
    %v3151 = vld [vmem:[#allocation13 + $0x5c] sm:$0xf]
    %v3152 = vld [vmem:[#allocation13 + $0x60] sm:$0xf]
    %v3153 = vld [vmem:[#allocation13 + $0x64] sm:$0xf]
    %v3154 = vld [vmem:[#allocation13 + $0x68] sm:$0xf]
    %v3155 = vld [vmem:[#allocation13 + $0x6c] sm:$0xf]
    %v3156 = vld [vmem:[#allocation13 + $0x70] sm:$0xf]
    %v3157 = vld [vmem:[#allocation13 + $0x74] sm:$0xf]
    %v3158 = vld [vmem:[#allocation13 + $0x78] sm:$0xf]
    %v3159 = vld [vmem:[#allocation13 + $0x7c] sm:$0xf]
    %v3176 = vunpack.c.l.b16 %v3144
    %v3177 = vunpack.c.l.b16 %v3145
    %v3178 = vunpack.c.l.b16 %v3146
    %v3179 = vunpack.c.l.b16 %v3147
    %v3180 = vunpack.c.l.b16 %v3148
    %v3181 = vunpack.c.l.b16 %v3149
    %v3182 = vunpack.c.l.b16 %v3150
    %v3183 = vunpack.c.l.b16 %v3151
    %v3184 = vunpack.c.l.b16 %v3152
    %v3185 = vunpack.c.l.b16 %v3153
    %v3186 = vunpack.c.l.b16 %v3154
    %v3187 = vunpack.c.l.b16 %v3155
    %v3188 = vunpack.c.l.b16 %v3156
    %v3189 = vunpack.c.l.b16 %v3157
    %v3190 = vunpack.c.l.b16 %v3158
    %v3191 = vunpack.c.l.b16 %v3159
    %v3192 = vpack.c.b16 %v3177, %v3176
    %v3193 = vpack.c.b16 %v3179, %v3178
    %v3194 = vpack.c.b16 %v3181, %v3180
    %v3195 = vpack.c.b16 %v3183, %v3182
    %v3196 = vpack.c.b16 %v3185, %v3184
    %v3197 = vpack.c.b16 %v3187, %v3186
    %v3198 = vpack.c.b16 %v3189, %v3188
    %v3199 = vpack.c.b16 %v3191, %v3190
    %3208 = vmatprep.subr.bf16.mxu0 0
    %3209 = vmatpush1.bf16.msra.mxu0 %v3199
    %3210 = vmatprep.subr.bf16.mxu0 0
    %3211 = vmatpush1.bf16.msra.mxu0 %v3198
    %3212 = vmatprep.subr.bf16.mxu0 0
    %3213 = vmatpush1.bf16.msra.mxu0 %v3197
    %3214 = vmatprep.subr.bf16.mxu0 0
    %3215 = vmatpush1.bf16.msra.mxu0 %v3196
    %3216 = vmatprep.subr.bf16.mxu0 0
    %3217 = vmatpush1.bf16.msra.mxu0 %v3195
    %3218 = vmatprep.subr.bf16.mxu0 0
    %3219 = vmatpush1.bf16.msra.mxu0 %v3194
    %3220 = vmatprep.subr.bf16.mxu0 0
    %3221 = vmatpush1.bf16.msra.mxu0 %v3193
    %3222 = vmatprep.subr.bf16.mxu0 0
    %3223 = vmatpush1.bf16.msra.mxu0 %v3192
    %3224 = vmatprep.subr.bf16.mxu0 0
    %3225 = vmatpush2.bf16.msra.mxu0 0
    %3226 = vmatprep.subr.bf16.mxu0 0
    %3227 = vmatpush2.bf16.msra.mxu0 0
    %3228 = vmatprep.subr.bf16.mxu0 0
    %3229 = vmatpush2.bf16.msra.mxu0 0
    %3230 = vmatprep.subr.bf16.mxu0 0
    %3231 = vmatpush2.bf16.msra.mxu0 0
    %3232 = vmatprep.subr.bf16.mxu0 0
    %3233 = vmatpush2.bf16.msra.mxu0 0
    %3234 = vmatprep.subr.bf16.mxu0 0
    %3235 = vmatpush2.bf16.msra.mxu0 0
    %3236 = vmatprep.subr.bf16.mxu0 0
    %3237 = vmatpush2.bf16.msra.mxu0 0
    %3238 = vmatprep.subr.bf16.mxu0 0
    %3239 = vmatpush2.bf16.msra.mxu0 0
    %3240 = vmatprep.mubr.bf16.mxu0 0
    %3241 = vmatmul.mubr.bf16.gmra.mxu0 %v1729
    %v3242 = vpop.f32.mrf.mxu0
    %v3243 = vadd.f32 0.0, %v3242
    %v3244 = vpop.f32.mrf.mxu0
    %v3245 = vpop.f32.mrf.mxu0
    %v3246 = vadd.f32 0.0, %v3245
    %v3247 = vpop.f32.mrf.mxu0
    %3248 = vdwg.mxu0
    %v3265 = vunpack.c.l.b16 %v3128
    %v3266 = vunpack.c.l.b16 %v3129
    %v3267 = vunpack.c.l.b16 %v3130
    %v3268 = vunpack.c.l.b16 %v3131
    %v3269 = vunpack.c.l.b16 %v3132
    %v3270 = vunpack.c.l.b16 %v3133
    %v3271 = vunpack.c.l.b16 %v3134
    %v3272 = vunpack.c.l.b16 %v3135
    %v3273 = vunpack.c.l.b16 %v3136
    %v3274 = vunpack.c.l.b16 %v3137
    %v3275 = vunpack.c.l.b16 %v3138
    %v3276 = vunpack.c.l.b16 %v3139
    %v3277 = vunpack.c.l.b16 %v3140
    %v3278 = vunpack.c.l.b16 %v3141
    %v3279 = vunpack.c.l.b16 %v3142
    %v3280 = vunpack.c.l.b16 %v3143
    %v3281 = vpack.c.b16 %v3266, %v3265
    %v3282 = vpack.c.b16 %v3268, %v3267
    %v3283 = vpack.c.b16 %v3270, %v3269
    %v3284 = vpack.c.b16 %v3272, %v3271
    %v3285 = vpack.c.b16 %v3274, %v3273
    %v3286 = vpack.c.b16 %v3276, %v3275
    %v3287 = vpack.c.b16 %v3278, %v3277
    %v3288 = vpack.c.b16 %v3280, %v3279
    %3297 = vmatprep.subr.bf16.mxu0 0
    %3298 = vmatpush1.bf16.msra.mxu0 %v3288
    %3299 = vmatprep.subr.bf16.mxu0 0
    %3300 = vmatpush1.bf16.msra.mxu0 %v3287
    %3301 = vmatprep.subr.bf16.mxu0 0
    %3302 = vmatpush1.bf16.msra.mxu0 %v3286
    %3303 = vmatprep.subr.bf16.mxu0 0
    %3304 = vmatpush1.bf16.msra.mxu0 %v3285
    %3305 = vmatprep.subr.bf16.mxu0 0
    %3306 = vmatpush1.bf16.msra.mxu0 %v3284
    %3307 = vmatprep.subr.bf16.mxu0 0
    %3308 = vmatpush1.bf16.msra.mxu0 %v3283
    %3309 = vmatprep.subr.bf16.mxu0 0
    %3310 = vmatpush1.bf16.msra.mxu0 %v3282
    %3311 = vmatprep.subr.bf16.mxu0 0
    %3312 = vmatpush1.bf16.msra.mxu0 %v3281
    %3313 = vmatprep.subr.bf16.mxu0 0
    %3314 = vmatpush2.bf16.msra.mxu0 0
    %3315 = vmatprep.subr.bf16.mxu0 0
    %3316 = vmatpush2.bf16.msra.mxu0 0
    %3317 = vmatprep.subr.bf16.mxu0 0
    %3318 = vmatpush2.bf16.msra.mxu0 0
    %3319 = vmatprep.subr.bf16.mxu0 0
    %3320 = vmatpush2.bf16.msra.mxu0 0
    %3321 = vmatprep.subr.bf16.mxu0 0
    %3322 = vmatpush2.bf16.msra.mxu0 0
    %3323 = vmatprep.subr.bf16.mxu0 0
    %3324 = vmatpush2.bf16.msra.mxu0 0
    %3325 = vmatprep.subr.bf16.mxu0 0
    %3326 = vmatpush2.bf16.msra.mxu0 0
    %3327 = vmatprep.subr.bf16.mxu0 0
    %3328 = vmatpush2.bf16.msra.mxu0 0
    %3329 = vmatprep.mubr.bf16.mxu0 0
    %3330 = vmatmul.mubr.bf16.gmra.mxu0 %v1838
    %v3331 = vpop.f32.mrf.mxu0
    %v3332 = vadd.f32 %v3243, %v3331
    %v3333 = vpop.f32.mrf.mxu0
    %v3334 = vpop.f32.mrf.mxu0
    %v3335 = vadd.f32 %v3246, %v3334
    %v3336 = vpop.f32.mrf.mxu0
    %3337 = vdwg.mxu0
    %v3338 = vld [vmem:[%s10 + $0x7] sm:$0x1]
    %v3339 = vlaneseq
    %v3340 = vshrl.u32 %v3339, 7
    %v3341 = vsub.s32 0, %v3340
    %v3342 = vrot.slane %v3338, %v3341
    %v3343 = vadd.f32 %v3332, %v3342
    %v3344 = vadd.f32 %v3335, %v3342
    %v3345 = vmax.f32 %v3343, 0.0
    %v3346 = vmax.f32 %v3344, 0.0
    %v3347 = vpack.c.bf16 %v3346, %v3345
    %3348 = vmatprep.subr.bf16.mxu0 0
    %3349 = vmatpush1.bf16.msra.mxu0 %v2549
    %3350 = vmatprep.subr.bf16.mxu0 0
    %3351 = vmatpush1.bf16.msra.mxu0 %v2548
    %3352 = vmatprep.subr.bf16.mxu0 0
    %3353 = vmatpush1.bf16.msra.mxu0 %v2547
    %3354 = vmatprep.subr.bf16.mxu0 0
    %3355 = vmatpush1.bf16.msra.mxu0 %v2546
    %3356 = vmatprep.subr.bf16.mxu0 0
    %3357 = vmatpush1.bf16.msra.mxu0 %v2545
    %3358 = vmatprep.subr.bf16.mxu0 0
    %3359 = vmatpush1.bf16.msra.mxu0 %v2544
    %3360 = vmatprep.subr.bf16.mxu0 0
    %3361 = vmatpush1.bf16.msra.mxu0 %v2543
    %3362 = vmatprep.subr.bf16.mxu0 0
    %3363 = vmatpush1.bf16.msra.mxu0 %v2542
    %3364 = vmatprep.subr.bf16.mxu0 0
    %3365 = vmatpush2.bf16.msra.mxu0 0
    %3366 = vmatprep.subr.bf16.mxu0 0
    %3367 = vmatpush2.bf16.msra.mxu0 0
    %3368 = vmatprep.subr.bf16.mxu0 0
    %3369 = vmatpush2.bf16.msra.mxu0 0
    %3370 = vmatprep.subr.bf16.mxu0 0
    %3371 = vmatpush2.bf16.msra.mxu0 0
    %3372 = vmatprep.subr.bf16.mxu0 0
    %3373 = vmatpush2.bf16.msra.mxu0 0
    %3374 = vmatprep.subr.bf16.mxu0 0
    %3375 = vmatpush2.bf16.msra.mxu0 0
    %3376 = vmatprep.subr.bf16.mxu0 0
    %3377 = vmatpush2.bf16.msra.mxu0 0
    %3378 = vmatprep.subr.bf16.mxu0 0
    %3379 = vmatpush2.bf16.msra.mxu0 0
    %3380 = vmatprep.mubr.bf16.mxu0 0
    %3381 = vmatmul.mubr.bf16.gmra.mxu0 %v3347
    %v3382 = vpop.f32.mrf.mxu0
    %v3383 = vadd.f32 %v2508, %v3382
    %v3384 = vpop.f32.mrf.mxu0
    %v3385 = vpop.f32.mrf.mxu0
    %v3386 = vadd.f32 %v2508, %v3385
    %v3387 = vpop.f32.mrf.mxu0
    %3388 = vdwg.mxu0
    %3389 = vst.msk [vmem:[%s13 + $0x30] sm:$0xff] %vm2599, %v3383
    %3390 = vst.msk [vmem:[%s13 + $0x38] sm:$0xff] %vm2599, %v3386
    // Predicated region
    $region82: #{forward.1} parent=1 // pred_check
      _
    $region83: #{forward.1} parent=1 // pred_check_branch
      %3392 = sbr.rel (0) target = $region85
    $region84: #{forward.1} parent=1 // pred_region
      _
    $region85: #{forward.1} parent=1 // pred_fallthru
      _
    // Predicated region
    $region86: #{forward.1} parent=1 // pred_check
      _
    $region87: #{forward.1} parent=1 // pred_check_branch
      %3394 = sbr.rel (0) target = $region89
    $region88: #{forward.1} parent=1 // pred_region
      _
    $region89: #{forward.1} parent=1 // pred_fallthru
      _
    %3395 = vsyncpa [#allocation4], 1
    %3396 = vsyncpa [#allocation6], 1
    %3397 = vsyncpa [#allocation9], 1
    %3398 = vsyncpa [#allocation12], 1

</llo_original>
